<compile_context>
chip_gen: v6e
topology: v6e:2x2x1
jax: 0.10.0
libtpu: 0.0.40
codegen_flags: <defaults>
</compile_context>

<pallas_src>
import jax
import jax.numpy as jnp
from jax.experimental import pallas as pl
from jax.experimental.pallas import tpu as pltpu

ENET_OUT_SIZE = 1280
NUM_CLASSES = 6
C_IN = 320          # channels entering efficientnet_b0's conv_head
H = W = 7           # final spatial resolution of efficientnet_b0 features
BATCH = 2


def _head_kernel(x_ref, w1_ref, bias_ref, w2_ref, b2_ref, out_ref):
    # x_ref:    (B, C_IN, HW)         f32   native NCHW feature map (HW collapsed)
    # w1_ref:   (C_IN, 1280)          bf16  conv_head 1x1 conv, BN scale folded in
    # bias_ref: (1, 1280)             f32   folded BN bias
    # w2_ref:   (1280, NUM_CLASSES)   bf16  classifier weight (torch layout^T)
    # b2_ref:   (1, NUM_CLASSES)      f32   classifier bias
    # out_ref:  (B, NUM_CLASSES)      f32   logits
    batch = x_ref.shape[0]
    w1 = w1_ref[...]
    bias = bias_ref[...]

    feats = []
    for b in range(batch):                       # static unroll, B is tiny
        xb = x_ref[b].astype(jnp.bfloat16)       # (C_IN, HW) bf16 cast on VPU
        # conv_head 1x1 conv over NCHW == contract over C: transposed-LHS MXU matmul.
        hb = jax.lax.dot_general(
            xb, w1,
            dimension_numbers=(((0,), (0,)), ((), ())),
            preferred_element_type=jnp.float32)  # (HW, 1280) f32
        # folded BN bias + SiLU activation (VPU + EUP).
        hb = hb + bias
        hb = hb * jax.nn.sigmoid(hb)
        # Global average pool over the spatial (sublane) axis: XLU reduce.
        feats.append(jnp.mean(hb, axis=0, keepdims=True))   # (1, 1280) f32

    f = jnp.concatenate(feats, axis=0)                       # (B, 1280) f32

    # Flatten (no-op) + Linear(1280, NUM_CLASSES), bf16 MXU pass, f32 accumulate.
    logits = jnp.dot(f.astype(jnp.bfloat16), w2_ref[...],
                     preferred_element_type=jnp.float32) + b2_ref[...]
    out_ref[...] = logits.astype(out_ref.dtype)


@jax.jit
def image_classifier_head(x_nchw, w1_folded_bf16, bn_bias, w2_bf16, b2):
    """x_nchw: (B, C_IN, H, W) float32  ->  logits (B, NUM_CLASSES) float32.

    w1_folded_bf16: (C_IN, 1280) bf16, conv_head weight with BN scale folded
    in at weight-load time.  w2_bf16: (1280, NUM_CLASSES) bf16 classifier weight.
    """
    B, C, Hh, Ww = x_nchw.shape
    hw = Hh * Ww

    # Contiguous collapse of the spatial dims: bitcast, no data movement, no
    # transpose / convert HLO launched outside the kernel.
    x3 = x_nchw.reshape(B, C, hw)
    bias = bn_bias.reshape(1, ENET_OUT_SIZE).astype(jnp.float32)
    b2r = b2.reshape(1, NUM_CLASSES).astype(jnp.float32)

    flops = (2 * B * hw * C * ENET_OUT_SIZE          # conv_head matmul
             + 2 * B * ENET_OUT_SIZE * NUM_CLASSES)  # classifier matmul
    bytes_accessed = (x3.size * 4 + w1_folded_bf16.size * 2
                      + bias.size * 4 + w2_bf16.size * 2
                      + b2r.size * 4 + B * NUM_CLASSES * 4)

    vmem_spec = pl.BlockSpec(memory_space=pltpu.MemorySpace.VMEM)
    out = pl.pallas_call(
        _head_kernel,
        out_shape=jax.ShapeDtypeStruct((B, NUM_CLASSES), jnp.float32),
        in_specs=[vmem_spec] * 5,
        out_specs=vmem_spec,
        cost_estimate=pl.CostEstimate(
            flops=flops,
            transcendentals=B * hw * ENET_OUT_SIZE,   # sigmoid per element
            bytes_accessed=bytes_accessed),
    )(x3, w1_folded_bf16, bias, w2_bf16, b2r)
    return out


def _reference(x_nchw, w1_folded_bf16, bn_bias, w2_bf16, b2):
    """Pure-JAX reference of the same forward (same bf16-stored weights)."""
    B, C, Hh, Ww = x_nchw.shape
    x = jnp.transpose(x_nchw, (0, 2, 3, 1)).reshape(B, Hh * Ww, C)
    x = x.astype(jnp.bfloat16).astype(jnp.float32)          # match kernel input cast
    w1f = w1_folded_bf16.astype(jnp.float32)
    h = jnp.einsum("bpc,cd->bpd", x, w1f)
    h = h + bn_bias[None, None, :]
    h = h * jax.nn.sigmoid(h)
    f = jnp.mean(h, axis=1)                                  # (B, 1280) global avg pool
    return f @ w2_bf16.astype(jnp.float32) + b2[None, :]     # (B, 6)


if __name__ == "__main__":
    key = jax.random.PRNGKey(0)
    k_x, k_w1, k_w2, k_b2 = jax.random.split(key, 4)

    # Deterministic synthetic parameters (shapes from efficientnet_b0 head):
    #   conv_head weight torch shape (1280, 320, 1, 1) -> kernel layout (320, 1280)
    w1 = jax.random.normal(k_w1, (C_IN, ENET_OUT_SIZE), dtype=jnp.float32) * 0.02
    #   bn2: fresh-init inference stats (gamma=1, beta=0, mean=0, var=1) folded
    eps = 1e-5
    gamma = jnp.ones((ENET_OUT_SIZE,), jnp.float32)
    beta = jnp.zeros((ENET_OUT_SIZE,), jnp.float32)
    run_mean = jnp.zeros((ENET_OUT_SIZE,), jnp.float32)
    run_var = jnp.ones((ENET_OUT_SIZE,), jnp.float32)
    bn_scale = gamma / jnp.sqrt(run_var + eps)
    bn_bias = beta - run_mean * bn_scale
    # Fold BN scale into the conv weight ONCE at weight-load time, cast to bf16 once.
    w1_folded = (w1 * bn_scale[None, :]).astype(jnp.bfloat16)
    #   classifier Linear(1280, 6): torch weight (6, 1280) -> kernel layout (1280, 6),
    #   stored bf16 at weight-load time.
    w2 = jax.random.normal(k_w2, (ENET_OUT_SIZE, NUM_CLASSES), dtype=jnp.float32) * 0.02
    w2_bf16 = w2.astype(jnp.bfloat16)
    b2 = jax.random.normal(k_b2, (NUM_CLASSES,), dtype=jnp.float32) * 0.01

    # Example input: feature map entering conv_head, PyTorch NCHW.
    x = jax.random.normal(k_x, (BATCH, C_IN, H, W), dtype=jnp.float32)

    logits = image_classifier_head(x, w1_folded, bn_bias, w2_bf16, b2)
    logits = jax.block_until_ready(logits)

    ref = _reference(x, w1_folded, bn_bias, w2_bf16, b2)
    assert logits.shape == (BATCH, NUM_CLASSES)
    assert jnp.allclose(logits, ref, atol=2e-3, rtol=2e-3)

    print("KERNEL_OK")
</pallas_src>

<mosaic_0001>
module attributes {stable_mosaic.version = 11 : i64} {
  func.func @_head_kernel(%arg0: memref<2x320x49xf32, #tpu.memory_space<vmem>>, %arg1: memref<320x1280xbf16, #tpu.memory_space<vmem>>, %arg2: memref<1x1280xf32, #tpu.memory_space<vmem>>, %arg3: memref<1280x6xbf16, #tpu.memory_space<vmem>>, %arg4: memref<1x6xf32, #tpu.memory_space<vmem>>, %arg5: memref<2x6xf32, #tpu.memory_space<vmem>>) attributes {dimension_semantics = [], scalar_prefetch = 0 : i64, scratch_operands = 0 : i64, tpu.core_type = #tpu.core_type<tc>} {
    %c0 = arith.constant 0 : index
    %c0_0 = arith.constant 0 : index
    %0 = vector.load %arg1[%c0, %c0_0] : memref<320x1280xbf16, #tpu.memory_space<vmem>>, vector<320x1280xbf16>
    %c0_1 = arith.constant 0 : index
    %c0_2 = arith.constant 0 : index
    %1 = vector.load %arg2[%c0_1, %c0_2] : memref<1x1280xf32, #tpu.memory_space<vmem>>, vector<1x1280xf32>
    %c0_3 = arith.constant 0 : index
    %c0_4 = arith.constant 0 : index
    %c0_5 = arith.constant 0 : index
    %2 = vector.load %arg0[%c0_3, %c0_4, %c0_5] : memref<2x320x49xf32, #tpu.memory_space<vmem>>, vector<1x320x49xf32>
    %3 = vector.shape_cast %2 : vector<1x320x49xf32> to vector<320x49xf32>
    %4 = arith.truncf %3 : vector<320x49xf32> to vector<320x49xbf16>
    %cst = arith.constant dense<0.000000e+00> : vector<49x1280xf32>
    %5 = tpu.matmul %4, %0, %cst {dimension_numbers = #tpu.dot_dimension_numbers<[0], [0], [1], [1], [0, 1, 1, 1], [], []>} : vector<320x49xbf16>, vector<320x1280xbf16>, vector<49x1280xf32> -> vector<49x1280xf32>
    %6 = vector.broadcast %1 : vector<1x1280xf32> to vector<49x1280xf32>
    %7 = arith.addf %5, %6 : vector<49x1280xf32>
    %8 = arith.negf %7 : vector<49x1280xf32>
    %9 = math.exp %8 : vector<49x1280xf32>
    %cst_6 = arith.constant 1.000000e+00 : f32
    %10 = vector.broadcast %cst_6 : f32 to vector<49x1280xf32>
    %11 = arith.addf %10, %9 : vector<49x1280xf32>
    %12 = arith.divf %10, %11 : vector<49x1280xf32>
    %13 = arith.mulf %7, %12 : vector<49x1280xf32>
    %cst_7 = arith.constant dense<0.000000e+00> : vector<1280xf32>
    %14 = vector.multi_reduction <add>, %13, %cst_7 [0] : vector<49x1280xf32> to vector<1280xf32>
    %15 = vector.shape_cast %14 : vector<1280xf32> to vector<1x1280xf32>
    %cst_8 = arith.constant 4.900000e+01 : f32
    %16 = vector.broadcast %cst_8 : f32 to vector<1x1280xf32>
    %17 = arith.divf %15, %16 : vector<1x1280xf32>
    %c1 = arith.constant 1 : index
    %c0_9 = arith.constant 0 : index
    %c0_10 = arith.constant 0 : index
    %18 = vector.load %arg0[%c1, %c0_9, %c0_10] : memref<2x320x49xf32, #tpu.memory_space<vmem>>, vector<1x320x49xf32>
    %19 = vector.shape_cast %18 : vector<1x320x49xf32> to vector<320x49xf32>
    %20 = arith.truncf %19 : vector<320x49xf32> to vector<320x49xbf16>
    %cst_11 = arith.constant dense<0.000000e+00> : vector<49x1280xf32>
    %21 = tpu.matmul %20, %0, %cst_11 {dimension_numbers = #tpu.dot_dimension_numbers<[0], [0], [1], [1], [0, 1, 1, 1], [], []>} : vector<320x49xbf16>, vector<320x1280xbf16>, vector<49x1280xf32> -> vector<49x1280xf32>
    %22 = vector.broadcast %1 : vector<1x1280xf32> to vector<49x1280xf32>
    %23 = arith.addf %21, %22 : vector<49x1280xf32>
    %24 = arith.negf %23 : vector<49x1280xf32>
    %25 = math.exp %24 : vector<49x1280xf32>
    %cst_12 = arith.constant 1.000000e+00 : f32
    %26 = vector.broadcast %cst_12 : f32 to vector<49x1280xf32>
    %27 = arith.addf %26, %25 : vector<49x1280xf32>
    %28 = arith.divf %26, %27 : vector<49x1280xf32>
    %29 = arith.mulf %23, %28 : vector<49x1280xf32>
    %cst_13 = arith.constant dense<0.000000e+00> : vector<1280xf32>
    %30 = vector.multi_reduction <add>, %29, %cst_13 [0] : vector<49x1280xf32> to vector<1280xf32>
    %31 = vector.shape_cast %30 : vector<1280xf32> to vector<1x1280xf32>
    %cst_14 = arith.constant 4.900000e+01 : f32
    %32 = vector.broadcast %cst_14 : f32 to vector<1x1280xf32>
    %33 = arith.divf %31, %32 : vector<1x1280xf32>
    %34 = tpu.concatenate %17, %33 in 0 : vector<1x1280xf32>, vector<1x1280xf32> -> vector<2x1280xf32>
    %35 = arith.truncf %34 : vector<2x1280xf32> to vector<2x1280xbf16>
    %c0_15 = arith.constant 0 : index
    %c0_16 = arith.constant 0 : index
    %36 = vector.load %arg3[%c0_15, %c0_16] : memref<1280x6xbf16, #tpu.memory_space<vmem>>, vector<1280x6xbf16>
    %cst_17 = arith.constant dense<0.000000e+00> : vector<2x6xf32>
    %37 = tpu.matmul %35, %36, %cst_17 {dimension_numbers = #tpu.dot_dimension_numbers<[1], [0], [0], [1], [0, 0, 1, 1], [], []>} : vector<2x1280xbf16>, vector<1280x6xbf16>, vector<2x6xf32> -> vector<2x6xf32>
    %c0_18 = arith.constant 0 : index
    %c0_19 = arith.constant 0 : index
    %38 = vector.load %arg4[%c0_18, %c0_19] : memref<1x6xf32, #tpu.memory_space<vmem>>, vector<1x6xf32>
    %39 = vector.broadcast %38 : vector<1x6xf32> to vector<2x6xf32>
    %40 = arith.addf %37, %39 : vector<2x6xf32>
    %c0_20 = arith.constant 0 : index
    %c0_21 = arith.constant 0 : index
    %41 = vector.load %arg5[%c0_20, %c0_21] : memref<2x6xf32, #tpu.memory_space<vmem>>, vector<2x6xf32>
    tpu.vector_store %arg5[%c0_20, %c0_21], %40 {strides = array<i32>} : memref<2x6xf32, #tpu.memory_space<vmem>>, vector<2x6xf32>,
    return
  }
}

</mosaic_0001>

<llo_original>
// kernel: image_classifier_head.1
$region0: #{image_classifier_head.1}
  #allocation0 [shape = 'u32[]', space=smem, size = 0x4, offset = 0x4, fixed_abs, tag = 'smem constant byte address 0x4 - core index']
  #allocation1 [shape = 'u32[144,128]{1,0:T(1,128)}', space=vmem, size = 0x12000, scoped, tag = 'internal scratch']
  %s0 = inlined_call_operand.vmem [shape: f32[2,320,49], index: 0, kind: input, shape index: {}]
  %s1 = inlined_call_operand.vmem [shape: bf16[320,1280], index: 1, kind: input, shape index: {}]
  %s2 = inlined_call_operand.vmem [shape: f32[1,1280], index: 2, kind: input, shape index: {}]
  %s3 = inlined_call_operand.vmem [shape: bf16[1280,6], index: 3, kind: input, shape index: {}]
  %s4 = inlined_call_operand.vmem [shape: f32[1,6], index: 4, kind: input, shape index: {}]
  %s5 = inlined_call_operand.hbm [shape: f32[2,6], index: 5, kind: output, shape index: {}]
  %s6 = sld [smem:[#allocation0]]
  $region30: #{image_classifier_head.1} parent=0
    _
  %s8 = ssub.s32 1, %s6
  %s9 = scalar_select 0, %s8, %s6
  $region1: #{image_classifier_head.1} parent=0
    #allocation2 [shape = 'u8[1024]{0}', space=vmem, size = 0x400, scoped, tag = 'output window, operand 0, single buffered']
    #allocation3 [shape = 's32[1]{0}', space=sflag, size = 0x4, scoped, tag = 'scoped memory for image_classifier_head.1']
    %10 = vsyncpa [#allocation3], 0
    // Predicated region
    $region2: #{image_classifier_head.1} parent=1 // pred_check
      _
    $region3: #{image_classifier_head.1} parent=1 // pred_check_branch
      %12 = sbr.rel (0) target = $region5
    $region4: #{image_classifier_head.1} parent=1 // pred_region
      _
    $region5: #{image_classifier_head.1} parent=1 // pred_fallthru
      _
    // Predicated region
    $region6: #{image_classifier_head.1} parent=1 // pred_check
      _
    $region7: #{image_classifier_head.1} parent=1 // pred_check_branch
      %14 = sbr.rel (0) target = $region9
    $region8: #{image_classifier_head.1} parent=1 // pred_region
      _
    $region9: #{image_classifier_head.1} parent=1 // pred_fallthru
      _
    // Predicated region
    $region10: #{image_classifier_head.1} parent=1 // pred_check
      _
    $region11: #{image_classifier_head.1} parent=1 // pred_check_branch
      %16 = sbr.rel (0) target = $region13
    $region12: #{image_classifier_head.1} parent=1 // pred_region
      _
    $region13: #{image_classifier_head.1} parent=1 // pred_fallthru
      _
    // Predicated region
    $region14: #{image_classifier_head.1} parent=1 // pred_check
      _
    $region15: #{image_classifier_head.1} parent=1 // pred_check_branch
      %18 = sbr.rel (0) target = $region17
    $region16: #{image_classifier_head.1} parent=1 // pred_region
      _
    $region17: #{image_classifier_head.1} parent=1 // pred_fallthru
      _
    // Predicated region
    $region18: #{image_classifier_head.1} parent=1 // pred_check
      _
    $region19: #{image_classifier_head.1} parent=1 // pred_check_branch
      %20 = sbr.rel (0) target = $region21
    $region20: #{image_classifier_head.1} parent=1 // pred_region
      _
    $region21: #{image_classifier_head.1} parent=1 // pred_fallthru
      _
    %v22 = vld [vmem:[%s1] sm:$0xff]
    %v23 = vld [vmem:[%s1 + $0x8] sm:$0xff]
    %v24 = vld [vmem:[%s1 + $0x10] sm:$0xff]
    %v25 = vld [vmem:[%s1 + $0x18] sm:$0xff]
    %v26 = vld [vmem:[%s1 + $0x20] sm:$0xff]
    %v27 = vld [vmem:[%s1 + $0x28] sm:$0xff]
    %v28 = vld [vmem:[%s1 + $0x30] sm:$0xff]
    %v29 = vld [vmem:[%s1 + $0x38] sm:$0xff]
    %v30 = vld [vmem:[%s1 + $0x40] sm:$0xff]
    %v31 = vld [vmem:[%s1 + $0x48] sm:$0xff]
    %v32 = vld [vmem:[%s1 + $0x50] sm:$0xff]
    %v33 = vld [vmem:[%s1 + $0x58] sm:$0xff]
    %v34 = vld [vmem:[%s1 + $0x60] sm:$0xff]
    %v35 = vld [vmem:[%s1 + $0x68] sm:$0xff]
    %v36 = vld [vmem:[%s1 + $0x70] sm:$0xff]
    %v37 = vld [vmem:[%s1 + $0x78] sm:$0xff]
    %v38 = vld [vmem:[%s1 + $0x80] sm:$0xff]
    %v39 = vld [vmem:[%s1 + $0x88] sm:$0xff]
    %v40 = vld [vmem:[%s1 + $0x90] sm:$0xff]
    %v41 = vld [vmem:[%s1 + $0x98] sm:$0xff]
    %v42 = vld [vmem:[%s1 + $0xa0] sm:$0xff]
    %v43 = vld [vmem:[%s1 + $0xa8] sm:$0xff]
    %v44 = vld [vmem:[%s1 + $0xb0] sm:$0xff]
    %v45 = vld [vmem:[%s1 + $0xb8] sm:$0xff]
    %v46 = vld [vmem:[%s1 + $0xc0] sm:$0xff]
    %v47 = vld [vmem:[%s1 + $0xc8] sm:$0xff]
    %v48 = vld [vmem:[%s1 + $0xd0] sm:$0xff]
    %v49 = vld [vmem:[%s1 + $0xd8] sm:$0xff]
    %v50 = vld [vmem:[%s1 + $0xe0] sm:$0xff]
    %v51 = vld [vmem:[%s1 + $0xe8] sm:$0xff]
    %v52 = vld [vmem:[%s1 + $0xf0] sm:$0xff]
    %v53 = vld [vmem:[%s1 + $0xf8] sm:$0xff]
    %v54 = vld [vmem:[%s1 + $0x100] sm:$0xff]
    %v55 = vld [vmem:[%s1 + $0x108] sm:$0xff]
    %v56 = vld [vmem:[%s1 + $0x110] sm:$0xff]
    %v57 = vld [vmem:[%s1 + $0x118] sm:$0xff]
    %v58 = vld [vmem:[%s1 + $0x120] sm:$0xff]
    %v59 = vld [vmem:[%s1 + $0x128] sm:$0xff]
    %v60 = vld [vmem:[%s1 + $0x130] sm:$0xff]
    %v61 = vld [vmem:[%s1 + $0x138] sm:$0xff]
    %v62 = vld [vmem:[%s1 + $0x140] sm:$0xff]
    %v63 = vld [vmem:[%s1 + $0x148] sm:$0xff]
    %v64 = vld [vmem:[%s1 + $0x150] sm:$0xff]
    %v65 = vld [vmem:[%s1 + $0x158] sm:$0xff]
    %v66 = vld [vmem:[%s1 + $0x160] sm:$0xff]
    %v67 = vld [vmem:[%s1 + $0x168] sm:$0xff]
    %v68 = vld [vmem:[%s1 + $0x170] sm:$0xff]
    %v69 = vld [vmem:[%s1 + $0x178] sm:$0xff]
    %v70 = vld [vmem:[%s1 + $0x180] sm:$0xff]
    %v71 = vld [vmem:[%s1 + $0x188] sm:$0xff]
    %v72 = vld [vmem:[%s1 + $0x190] sm:$0xff]
    %v73 = vld [vmem:[%s1 + $0x198] sm:$0xff]
    %v74 = vld [vmem:[%s1 + $0x1a0] sm:$0xff]
    %v75 = vld [vmem:[%s1 + $0x1a8] sm:$0xff]
    %v76 = vld [vmem:[%s1 + $0x1b0] sm:$0xff]
    %v77 = vld [vmem:[%s1 + $0x1b8] sm:$0xff]
    %v78 = vld [vmem:[%s1 + $0x1c0] sm:$0xff]
    %v79 = vld [vmem:[%s1 + $0x1c8] sm:$0xff]
    %v80 = vld [vmem:[%s1 + $0x1d0] sm:$0xff]
    %v81 = vld [vmem:[%s1 + $0x1d8] sm:$0xff]
    %v82 = vld [vmem:[%s1 + $0x1e0] sm:$0xff]
    %v83 = vld [vmem:[%s1 + $0x1e8] sm:$0xff]
    %v84 = vld [vmem:[%s1 + $0x1f0] sm:$0xff]
    %v85 = vld [vmem:[%s1 + $0x1f8] sm:$0xff]
    %v86 = vld [vmem:[%s1 + $0x200] sm:$0xff]
    %v87 = vld [vmem:[%s1 + $0x208] sm:$0xff]
    %v88 = vld [vmem:[%s1 + $0x210] sm:$0xff]
    %v89 = vld [vmem:[%s1 + $0x218] sm:$0xff]
    %v90 = vld [vmem:[%s1 + $0x220] sm:$0xff]
    %v91 = vld [vmem:[%s1 + $0x228] sm:$0xff]
    %v92 = vld [vmem:[%s1 + $0x230] sm:$0xff]
    %v93 = vld [vmem:[%s1 + $0x238] sm:$0xff]
    %v94 = vld [vmem:[%s1 + $0x240] sm:$0xff]
    %v95 = vld [vmem:[%s1 + $0x248] sm:$0xff]
    %v96 = vld [vmem:[%s1 + $0x250] sm:$0xff]
    %v97 = vld [vmem:[%s1 + $0x258] sm:$0xff]
    %v98 = vld [vmem:[%s1 + $0x260] sm:$0xff]
    %v99 = vld [vmem:[%s1 + $0x268] sm:$0xff]
    %v100 = vld [vmem:[%s1 + $0x270] sm:$0xff]
    %v101 = vld [vmem:[%s1 + $0x278] sm:$0xff]
    %v102 = vld [vmem:[%s1 + $0x280] sm:$0xff]
    %v103 = vld [vmem:[%s1 + $0x288] sm:$0xff]
    %v104 = vld [vmem:[%s1 + $0x290] sm:$0xff]
    %v105 = vld [vmem:[%s1 + $0x298] sm:$0xff]
    %v106 = vld [vmem:[%s1 + $0x2a0] sm:$0xff]
    %v107 = vld [vmem:[%s1 + $0x2a8] sm:$0xff]
    %v108 = vld [vmem:[%s1 + $0x2b0] sm:$0xff]
    %v109 = vld [vmem:[%s1 + $0x2b8] sm:$0xff]
    %v110 = vld [vmem:[%s1 + $0x2c0] sm:$0xff]
    %v111 = vld [vmem:[%s1 + $0x2c8] sm:$0xff]
    %v112 = vld [vmem:[%s1 + $0x2d0] sm:$0xff]
    %v113 = vld [vmem:[%s1 + $0x2d8] sm:$0xff]
    %v114 = vld [vmem:[%s1 + $0x2e0] sm:$0xff]
    %v115 = vld [vmem:[%s1 + $0x2e8] sm:$0xff]
    %v116 = vld [vmem:[%s1 + $0x2f0] sm:$0xff]
    %v117 = vld [vmem:[%s1 + $0x2f8] sm:$0xff]
    %v118 = vld [vmem:[%s1 + $0x300] sm:$0xff]
    %v119 = vld [vmem:[%s1 + $0x308] sm:$0xff]
    %v120 = vld [vmem:[%s1 + $0x310] sm:$0xff]
    %v121 = vld [vmem:[%s1 + $0x318] sm:$0xff]
    %v122 = vld [vmem:[%s1 + $0x320] sm:$0xff]
    %v123 = vld [vmem:[%s1 + $0x328] sm:$0xff]
    %v124 = vld [vmem:[%s1 + $0x330] sm:$0xff]
    %v125 = vld [vmem:[%s1 + $0x338] sm:$0xff]
    %v126 = vld [vmem:[%s1 + $0x340] sm:$0xff]
    %v127 = vld [vmem:[%s1 + $0x348] sm:$0xff]
    %v128 = vld [vmem:[%s1 + $0x350] sm:$0xff]
    %v129 = vld [vmem:[%s1 + $0x358] sm:$0xff]
    %v130 = vld [vmem:[%s1 + $0x360] sm:$0xff]
    %v131 = vld [vmem:[%s1 + $0x368] sm:$0xff]
    %v132 = vld [vmem:[%s1 + $0x370] sm:$0xff]
    %v133 = vld [vmem:[%s1 + $0x378] sm:$0xff]
    %v134 = vld [vmem:[%s1 + $0x380] sm:$0xff]
    %v135 = vld [vmem:[%s1 + $0x388] sm:$0xff]
    %v136 = vld [vmem:[%s1 + $0x390] sm:$0xff]
    %v137 = vld [vmem:[%s1 + $0x398] sm:$0xff]
    %v138 = vld [vmem:[%s1 + $0x3a0] sm:$0xff]
    %v139 = vld [vmem:[%s1 + $0x3a8] sm:$0xff]
    %v140 = vld [vmem:[%s1 + $0x3b0] sm:$0xff]
    %v141 = vld [vmem:[%s1 + $0x3b8] sm:$0xff]
    %v142 = vld [vmem:[%s1 + $0x3c0] sm:$0xff]
    %v143 = vld [vmem:[%s1 + $0x3c8] sm:$0xff]
    %v144 = vld [vmem:[%s1 + $0x3d0] sm:$0xff]
    %v145 = vld [vmem:[%s1 + $0x3d8] sm:$0xff]
    %v146 = vld [vmem:[%s1 + $0x3e0] sm:$0xff]
    %v147 = vld [vmem:[%s1 + $0x3e8] sm:$0xff]
    %v148 = vld [vmem:[%s1 + $0x3f0] sm:$0xff]
    %v149 = vld [vmem:[%s1 + $0x3f8] sm:$0xff]
    %v150 = vld [vmem:[%s1 + $0x400] sm:$0xff]
    %v151 = vld [vmem:[%s1 + $0x408] sm:$0xff]
    %v152 = vld [vmem:[%s1 + $0x410] sm:$0xff]
    %v153 = vld [vmem:[%s1 + $0x418] sm:$0xff]
    %v154 = vld [vmem:[%s1 + $0x420] sm:$0xff]
    %v155 = vld [vmem:[%s1 + $0x428] sm:$0xff]
    %v156 = vld [vmem:[%s1 + $0x430] sm:$0xff]
    %v157 = vld [vmem:[%s1 + $0x438] sm:$0xff]
    %v158 = vld [vmem:[%s1 + $0x440] sm:$0xff]
    %v159 = vld [vmem:[%s1 + $0x448] sm:$0xff]
    %v160 = vld [vmem:[%s1 + $0x450] sm:$0xff]
    %v161 = vld [vmem:[%s1 + $0x458] sm:$0xff]
    %v162 = vld [vmem:[%s1 + $0x460] sm:$0xff]
    %v163 = vld [vmem:[%s1 + $0x468] sm:$0xff]
    %v164 = vld [vmem:[%s1 + $0x470] sm:$0xff]
    %v165 = vld [vmem:[%s1 + $0x478] sm:$0xff]
    %v166 = vld [vmem:[%s1 + $0x480] sm:$0xff]
    %v167 = vld [vmem:[%s1 + $0x488] sm:$0xff]
    %v168 = vld [vmem:[%s1 + $0x490] sm:$0xff]
    %v169 = vld [vmem:[%s1 + $0x498] sm:$0xff]
    %v170 = vld [vmem:[%s1 + $0x4a0] sm:$0xff]
    %v171 = vld [vmem:[%s1 + $0x4a8] sm:$0xff]
    %v172 = vld [vmem:[%s1 + $0x4b0] sm:$0xff]
    %v173 = vld [vmem:[%s1 + $0x4b8] sm:$0xff]
    %v174 = vld [vmem:[%s1 + $0x4c0] sm:$0xff]
    %v175 = vld [vmem:[%s1 + $0x4c8] sm:$0xff]
    %v176 = vld [vmem:[%s1 + $0x4d0] sm:$0xff]
    %v177 = vld [vmem:[%s1 + $0x4d8] sm:$0xff]
    %v178 = vld [vmem:[%s1 + $0x4e0] sm:$0xff]
    %v179 = vld [vmem:[%s1 + $0x4e8] sm:$0xff]
    %v180 = vld [vmem:[%s1 + $0x4f0] sm:$0xff]
    %v181 = vld [vmem:[%s1 + $0x4f8] sm:$0xff]
    %v182 = vld [vmem:[%s1 + $0x500] sm:$0xff]
    %v183 = vld [vmem:[%s1 + $0x508] sm:$0xff]
    %v184 = vld [vmem:[%s1 + $0x510] sm:$0xff]
    %v185 = vld [vmem:[%s1 + $0x518] sm:$0xff]
    %v186 = vld [vmem:[%s1 + $0x520] sm:$0xff]
    %v187 = vld [vmem:[%s1 + $0x528] sm:$0xff]
    %v188 = vld [vmem:[%s1 + $0x530] sm:$0xff]
    %v189 = vld [vmem:[%s1 + $0x538] sm:$0xff]
    %v190 = vld [vmem:[%s1 + $0x540] sm:$0xff]
    %v191 = vld [vmem:[%s1 + $0x548] sm:$0xff]
    %v192 = vld [vmem:[%s1 + $0x550] sm:$0xff]
    %v193 = vld [vmem:[%s1 + $0x558] sm:$0xff]
    %v194 = vld [vmem:[%s1 + $0x560] sm:$0xff]
    %v195 = vld [vmem:[%s1 + $0x568] sm:$0xff]
    %v196 = vld [vmem:[%s1 + $0x570] sm:$0xff]
    %v197 = vld [vmem:[%s1 + $0x578] sm:$0xff]
    %v198 = vld [vmem:[%s1 + $0x580] sm:$0xff]
    %v199 = vld [vmem:[%s1 + $0x588] sm:$0xff]
    %v200 = vld [vmem:[%s1 + $0x590] sm:$0xff]
    %v201 = vld [vmem:[%s1 + $0x598] sm:$0xff]
    %v202 = vld [vmem:[%s1 + $0x5a0] sm:$0xff]
    %v203 = vld [vmem:[%s1 + $0x5a8] sm:$0xff]
    %v204 = vld [vmem:[%s1 + $0x5b0] sm:$0xff]
    %v205 = vld [vmem:[%s1 + $0x5b8] sm:$0xff]
    %v206 = vld [vmem:[%s1 + $0x5c0] sm:$0xff]
    %v207 = vld [vmem:[%s1 + $0x5c8] sm:$0xff]
    %v208 = vld [vmem:[%s1 + $0x5d0] sm:$0xff]
    %v209 = vld [vmem:[%s1 + $0x5d8] sm:$0xff]
    %v210 = vld [vmem:[%s1 + $0x5e0] sm:$0xff]
    %v211 = vld [vmem:[%s1 + $0x5e8] sm:$0xff]
    %v212 = vld [vmem:[%s1 + $0x5f0] sm:$0xff]
    %v213 = vld [vmem:[%s1 + $0x5f8] sm:$0xff]
    %v214 = vld [vmem:[%s1 + $0x600] sm:$0xff]
    %v215 = vld [vmem:[%s1 + $0x608] sm:$0xff]
    %v216 = vld [vmem:[%s1 + $0x610] sm:$0xff]
    %v217 = vld [vmem:[%s1 + $0x618] sm:$0xff]
    %v218 = vld [vmem:[%s1 + $0x620] sm:$0xff]
    %v219 = vld [vmem:[%s1 + $0x628] sm:$0xff]
    %v220 = vld [vmem:[%s1 + $0x630] sm:$0xff]
    %v221 = vld [vmem:[%s1 + $0x638] sm:$0xff]
    %v222 = vld [vmem:[%s2] sm:$0xff]
    %v223 = vld [vmem:[%s2 + $0x8] sm:$0x3]
    %v224 = vld [vmem:[%s0] sm:$0xff]
    %v225 = vld [vmem:[%s0 + $0x8] sm:$0xff]
    %v226 = vld [vmem:[%s0 + $0x10] sm:$0xff]
    %v227 = vld [vmem:[%s0 + $0x18] sm:$0xff]
    %v228 = vld [vmem:[%s0 + $0x20] sm:$0xff]
    %v229 = vld [vmem:[%s0 + $0x28] sm:$0xff]
    %v230 = vld [vmem:[%s0 + $0x30] sm:$0xff]
    %v231 = vld [vmem:[%s0 + $0x38] sm:$0xff]
    %v232 = vld [vmem:[%s0 + $0x40] sm:$0xff]
    %v233 = vld [vmem:[%s0 + $0x48] sm:$0xff]
    %v234 = vld [vmem:[%s0 + $0x50] sm:$0xff]
    %v235 = vld [vmem:[%s0 + $0x58] sm:$0xff]
    %v236 = vld [vmem:[%s0 + $0x60] sm:$0xff]
    %v237 = vld [vmem:[%s0 + $0x68] sm:$0xff]
    %v238 = vld [vmem:[%s0 + $0x70] sm:$0xff]
    %v239 = vld [vmem:[%s0 + $0x78] sm:$0xff]
    %v240 = vld [vmem:[%s0 + $0x80] sm:$0xff]
    %v241 = vld [vmem:[%s0 + $0x88] sm:$0xff]
    %v242 = vld [vmem:[%s0 + $0x90] sm:$0xff]
    %v243 = vld [vmem:[%s0 + $0x98] sm:$0xff]
    %v244 = vld [vmem:[%s0 + $0xa0] sm:$0xff]
    %v245 = vld [vmem:[%s0 + $0xa8] sm:$0xff]
    %v246 = vld [vmem:[%s0 + $0xb0] sm:$0xff]
    %v247 = vld [vmem:[%s0 + $0xb8] sm:$0xff]
    %v248 = vld [vmem:[%s0 + $0xc0] sm:$0xff]
    %v249 = vld [vmem:[%s0 + $0xc8] sm:$0xff]
    %v250 = vld [vmem:[%s0 + $0xd0] sm:$0xff]
    %v251 = vld [vmem:[%s0 + $0xd8] sm:$0xff]
    %v252 = vld [vmem:[%s0 + $0xe0] sm:$0xff]
    %v253 = vld [vmem:[%s0 + $0xe8] sm:$0xff]
    %v254 = vld [vmem:[%s0 + $0xf0] sm:$0xff]
    %v255 = vld [vmem:[%s0 + $0xf8] sm:$0xff]
    %v256 = vld [vmem:[%s0 + $0x100] sm:$0xff]
    %v257 = vld [vmem:[%s0 + $0x108] sm:$0xff]
    %v258 = vld [vmem:[%s0 + $0x110] sm:$0xff]
    %v259 = vld [vmem:[%s0 + $0x118] sm:$0xff]
    %v260 = vld [vmem:[%s0 + $0x120] sm:$0xff]
    %v261 = vld [vmem:[%s0 + $0x128] sm:$0xff]
    %v262 = vld [vmem:[%s0 + $0x130] sm:$0xff]
    %v263 = vld [vmem:[%s0 + $0x138] sm:$0xff]
    %v264 = vpack.c.bf16 %v225, %v224
    %v265 = vpack.c.bf16 %v227, %v226
    %v266 = vpack.c.bf16 %v229, %v228
    %v267 = vpack.c.bf16 %v231, %v230
    %v268 = vpack.c.bf16 %v233, %v232
    %v269 = vpack.c.bf16 %v235, %v234
    %v270 = vpack.c.bf16 %v237, %v236
    %v271 = vpack.c.bf16 %v239, %v238
    %v272 = vpack.c.bf16 %v241, %v240
    %v273 = vpack.c.bf16 %v243, %v242
    %v274 = vpack.c.bf16 %v245, %v244
    %v275 = vpack.c.bf16 %v247, %v246
    %v276 = vpack.c.bf16 %v249, %v248
    %v277 = vpack.c.bf16 %v251, %v250
    %v278 = vpack.c.bf16 %v253, %v252
    %v279 = vpack.c.bf16 %v255, %v254
    %v280 = vpack.c.bf16 %v257, %v256
    %v281 = vpack.c.bf16 %v259, %v258
    %v282 = vpack.c.bf16 %v261, %v260
    %v283 = vpack.c.bf16 %v263, %v262
    %v286 = vlaneseq
    %v287 = vshrl.u32 %v286, 7
    %v288 = vsub.s32 0, %v287
    %v289 = vrot.slane %v222, %v288
    %v290 = vlaneseq
    %v291 = vshrl.u32 %v290, 7
    %v292 = vsub.s32 1, %v291
    %v293 = vrot.slane %v222, %v292
    %v294 = vlaneseq
    %v295 = vshrl.u32 %v294, 7
    %v296 = vsub.s32 2, %v295
    %v297 = vrot.slane %v222, %v296
    %v298 = vlaneseq
    %v299 = vshrl.u32 %v298, 7
    %v300 = vsub.s32 3, %v299
    %v301 = vrot.slane %v222, %v300
    %v302 = vlaneseq
    %v303 = vshrl.u32 %v302, 7
    %v304 = vsub.s32 4, %v303
    %v305 = vrot.slane %v222, %v304
    %v306 = vlaneseq
    %v307 = vshrl.u32 %v306, 7
    %v308 = vsub.s32 5, %v307
    %v309 = vrot.slane %v222, %v308
    %v310 = vlaneseq
    %v311 = vshrl.u32 %v310, 7
    %v312 = vsub.s32 6, %v311
    %v313 = vrot.slane %v222, %v312
    %v314 = vlaneseq
    %v315 = vshrl.u32 %v314, 7
    %v316 = vsub.s32 7, %v315
    %v317 = vrot.slane %v222, %v316
    %v318 = vlaneseq
    %v319 = vshrl.u32 %v318, 7
    %v320 = vsub.s32 0, %v319
    %v321 = vrot.slane %v223, %v320
    %v322 = vlaneseq
    %v323 = vshrl.u32 %v322, 7
    %v324 = vsub.s32 1, %v323
    %v325 = vrot.slane %v223, %v324
    %336 = vxpose.xlu0.c.b16.start [1/8] %v264, 128
    %337 = vxpose.xlu0.c.b16.cont [2/8] %v265, 128
    %338 = vxpose.xlu0.c.b16.cont [3/8] %v266, 128
    %339 = vxpose.xlu0.c.b16.cont [4/8] %v267, 128
    %340 = vxpose.xlu0.c.b16.cont [5/8] %v268, 128
    %341 = vxpose.xlu0.c.b16.cont [6/8] %v269, 128
    %342 = vxpose.xlu0.c.b16.cont [7/8] %v270, 128
    %343 = vxpose.xlu0.c.b16.end [8/8] %v271, 128
    %v344 = vpop.trf.xlu0
    %v345 = vpop.trf.xlu0
    %v346 = vpop.trf.xlu0
    %v347 = vpop.trf.xlu0
    %v348 = vpop.trf.xlu0
    %v349 = vpop.trf.xlu0
    %v350 = vpop.trf.xlu0
    %v351 = vpop.trf.xlu0
    %352 = vxpose.xlu0.c.b16.start [1/8] %v272, 128
    %353 = vxpose.xlu0.c.b16.cont [2/8] %v273, 128
    %354 = vxpose.xlu0.c.b16.cont [3/8] %v274, 128
    %355 = vxpose.xlu0.c.b16.cont [4/8] %v275, 128
    %356 = vxpose.xlu0.c.b16.cont [5/8] %v276, 128
    %357 = vxpose.xlu0.c.b16.cont [6/8] %v277, 128
    %358 = vxpose.xlu0.c.b16.cont [7/8] %v278, 128
    %359 = vxpose.xlu0.c.b16.end [8/8] %v279, 128
    %v360 = vpop.trf.xlu0
    %v361 = vpop.trf.xlu0
    %v362 = vpop.trf.xlu0
    %v363 = vpop.trf.xlu0
    %v364 = vpop.trf.xlu0
    %v365 = vpop.trf.xlu0
    %v366 = vpop.trf.xlu0
    %v367 = vpop.trf.xlu0
    %368 = vxpose.xlu0.c.b16.start [1/8] %v280, 128
    %369 = vxpose.xlu0.c.b16.cont [2/8] %v281, 128
    %370 = vxpose.xlu0.c.b16.cont [3/8] %v282, 128
    %371 = vxpose.xlu0.c.b16.cont [4/8] %v283, 128
    %372 = vxpose.xlu0.c.b16.cont [5/8] 0, 128
    %373 = vxpose.xlu0.c.b16.cont [6/8] 0, 128
    %374 = vxpose.xlu0.c.b16.cont [7/8] 0, 128
    %375 = vxpose.xlu0.c.b16.end [8/8] 0, 128
    %v376 = vpop.trf.xlu0
    %v377 = vpop.trf.xlu0
    %v378 = vpop.trf.xlu0
    %v379 = vpop.trf.xlu0
    %v380 = vpop.trf.xlu0
    %v381 = vpop.trf.xlu0
    %v382 = vpop.trf.xlu0
    %v383 = vpop.trf.xlu0
    %v584 = vunpack.c.l.b16 %v22
    %v585 = vunpack.c.h.b16 %v22
    %v586 = vunpack.c.l.b16 %v23
    %v587 = vunpack.c.h.b16 %v23
    %v588 = vunpack.c.l.b16 %v24
    %v589 = vunpack.c.h.b16 %v24
    %v590 = vunpack.c.l.b16 %v25
    %v591 = vunpack.c.h.b16 %v25
    %v592 = vunpack.c.l.b16 %v26
    %v593 = vunpack.c.h.b16 %v26
    %v594 = vunpack.c.l.b16 %v27
    %v595 = vunpack.c.h.b16 %v27
    %v596 = vunpack.c.l.b16 %v28
    %v597 = vunpack.c.h.b16 %v28
    %v598 = vunpack.c.l.b16 %v29
    %v599 = vunpack.c.h.b16 %v29
    %v600 = vunpack.c.l.b16 %v30
    %v601 = vunpack.c.h.b16 %v30
    %v602 = vunpack.c.l.b16 %v31
    %v603 = vunpack.c.h.b16 %v31
    %v604 = vunpack.c.l.b16 %v32
    %v605 = vunpack.c.h.b16 %v32
    %v606 = vunpack.c.l.b16 %v33
    %v607 = vunpack.c.h.b16 %v33
    %v608 = vunpack.c.l.b16 %v34
    %v609 = vunpack.c.h.b16 %v34
    %v610 = vunpack.c.l.b16 %v35
    %v611 = vunpack.c.h.b16 %v35
    %v612 = vunpack.c.l.b16 %v36
    %v613 = vunpack.c.h.b16 %v36
    %v614 = vunpack.c.l.b16 %v37
    %v615 = vunpack.c.h.b16 %v37
    %v616 = vunpack.c.l.b16 %v38
    %v617 = vunpack.c.h.b16 %v38
    %v618 = vunpack.c.l.b16 %v39
    %v619 = vunpack.c.h.b16 %v39
    %v620 = vunpack.c.l.b16 %v40
    %v621 = vunpack.c.h.b16 %v40
    %v622 = vunpack.c.l.b16 %v41
    %v623 = vunpack.c.h.b16 %v41
    %v624 = vunpack.c.l.b16 %v42
    %v625 = vunpack.c.h.b16 %v42
    %v626 = vunpack.c.l.b16 %v43
    %v627 = vunpack.c.h.b16 %v43
    %v628 = vunpack.c.l.b16 %v44
    %v629 = vunpack.c.h.b16 %v44
    %v630 = vunpack.c.l.b16 %v45
    %v631 = vunpack.c.h.b16 %v45
    %v632 = vunpack.c.l.b16 %v46
    %v633 = vunpack.c.h.b16 %v46
    %v634 = vunpack.c.l.b16 %v47
    %v635 = vunpack.c.h.b16 %v47
    %v636 = vunpack.c.l.b16 %v48
    %v637 = vunpack.c.h.b16 %v48
    %v638 = vunpack.c.l.b16 %v49
    %v639 = vunpack.c.h.b16 %v49
    %v640 = vunpack.c.l.b16 %v50
    %v641 = vunpack.c.h.b16 %v50
    %v642 = vunpack.c.l.b16 %v51
    %v643 = vunpack.c.h.b16 %v51
    %v644 = vunpack.c.l.b16 %v52
    %v645 = vunpack.c.h.b16 %v52
    %v646 = vunpack.c.l.b16 %v53
    %v647 = vunpack.c.h.b16 %v53
    %v648 = vunpack.c.l.b16 %v54
    %v649 = vunpack.c.h.b16 %v54
    %v650 = vunpack.c.l.b16 %v55
    %v651 = vunpack.c.h.b16 %v55
    %v652 = vunpack.c.l.b16 %v56
    %v653 = vunpack.c.h.b16 %v56
    %v654 = vunpack.c.l.b16 %v57
    %v655 = vunpack.c.h.b16 %v57
    %v656 = vunpack.c.l.b16 %v58
    %v657 = vunpack.c.h.b16 %v58
    %v658 = vunpack.c.l.b16 %v59
    %v659 = vunpack.c.h.b16 %v59
    %v660 = vunpack.c.l.b16 %v60
    %v661 = vunpack.c.h.b16 %v60
    %v662 = vunpack.c.l.b16 %v61
    %v663 = vunpack.c.h.b16 %v61
    %v664 = vunpack.c.l.b16 %v62
    %v665 = vunpack.c.h.b16 %v62
    %v666 = vunpack.c.l.b16 %v63
    %v667 = vunpack.c.h.b16 %v63
    %v668 = vunpack.c.l.b16 %v64
    %v669 = vunpack.c.h.b16 %v64
    %v670 = vunpack.c.l.b16 %v65
    %v671 = vunpack.c.h.b16 %v65
    %v672 = vunpack.c.l.b16 %v66
    %v673 = vunpack.c.h.b16 %v66
    %v674 = vunpack.c.l.b16 %v67
    %v675 = vunpack.c.h.b16 %v67
    %v676 = vunpack.c.l.b16 %v68
    %v677 = vunpack.c.h.b16 %v68
    %v678 = vunpack.c.l.b16 %v69
    %v679 = vunpack.c.h.b16 %v69
    %v680 = vunpack.c.l.b16 %v70
    %v681 = vunpack.c.h.b16 %v70
    %v682 = vunpack.c.l.b16 %v71
    %v683 = vunpack.c.h.b16 %v71
    %v684 = vunpack.c.l.b16 %v72
    %v685 = vunpack.c.h.b16 %v72
    %v686 = vunpack.c.l.b16 %v73
    %v687 = vunpack.c.h.b16 %v73
    %v688 = vunpack.c.l.b16 %v74
    %v689 = vunpack.c.h.b16 %v74
    %v690 = vunpack.c.l.b16 %v75
    %v691 = vunpack.c.h.b16 %v75
    %v692 = vunpack.c.l.b16 %v76
    %v693 = vunpack.c.h.b16 %v76
    %v694 = vunpack.c.l.b16 %v77
    %v695 = vunpack.c.h.b16 %v77
    %v696 = vunpack.c.l.b16 %v78
    %v697 = vunpack.c.h.b16 %v78
    %v698 = vunpack.c.l.b16 %v79
    %v699 = vunpack.c.h.b16 %v79
    %v700 = vunpack.c.l.b16 %v80
    %v701 = vunpack.c.h.b16 %v80
    %v702 = vunpack.c.l.b16 %v81
    %v703 = vunpack.c.h.b16 %v81
    %v704 = vunpack.c.l.b16 %v82
    %v705 = vunpack.c.h.b16 %v82
    %v706 = vunpack.c.l.b16 %v83
    %v707 = vunpack.c.h.b16 %v83
    %v708 = vunpack.c.l.b16 %v84
    %v709 = vunpack.c.h.b16 %v84
    %v710 = vunpack.c.l.b16 %v85
    %v711 = vunpack.c.h.b16 %v85
    %v712 = vunpack.c.l.b16 %v86
    %v713 = vunpack.c.h.b16 %v86
    %v714 = vunpack.c.l.b16 %v87
    %v715 = vunpack.c.h.b16 %v87
    %v716 = vunpack.c.l.b16 %v88
    %v717 = vunpack.c.h.b16 %v88
    %v718 = vunpack.c.l.b16 %v89
    %v719 = vunpack.c.h.b16 %v89
    %v720 = vunpack.c.l.b16 %v90
    %v721 = vunpack.c.h.b16 %v90
    %v722 = vunpack.c.l.b16 %v91
    %v723 = vunpack.c.h.b16 %v91
    %v724 = vunpack.c.l.b16 %v92
    %v725 = vunpack.c.h.b16 %v92
    %v726 = vunpack.c.l.b16 %v93
    %v727 = vunpack.c.h.b16 %v93
    %v728 = vunpack.c.l.b16 %v94
    %v729 = vunpack.c.h.b16 %v94
    %v730 = vunpack.c.l.b16 %v95
    %v731 = vunpack.c.h.b16 %v95
    %v732 = vunpack.c.l.b16 %v96
    %v733 = vunpack.c.h.b16 %v96
    %v734 = vunpack.c.l.b16 %v97
    %v735 = vunpack.c.h.b16 %v97
    %v736 = vunpack.c.l.b16 %v98
    %v737 = vunpack.c.h.b16 %v98
    %v738 = vunpack.c.l.b16 %v99
    %v739 = vunpack.c.h.b16 %v99
    %v740 = vunpack.c.l.b16 %v100
    %v741 = vunpack.c.h.b16 %v100
    %v742 = vunpack.c.l.b16 %v101
    %v743 = vunpack.c.h.b16 %v101
    %v744 = vunpack.c.l.b16 %v102
    %v745 = vunpack.c.h.b16 %v102
    %v746 = vunpack.c.l.b16 %v103
    %v747 = vunpack.c.h.b16 %v103
    %v748 = vunpack.c.l.b16 %v104
    %v749 = vunpack.c.h.b16 %v104
    %v750 = vunpack.c.l.b16 %v105
    %v751 = vunpack.c.h.b16 %v105
    %v752 = vunpack.c.l.b16 %v106
    %v753 = vunpack.c.h.b16 %v106
    %v754 = vunpack.c.l.b16 %v107
    %v755 = vunpack.c.h.b16 %v107
    %v756 = vunpack.c.l.b16 %v108
    %v757 = vunpack.c.h.b16 %v108
    %v758 = vunpack.c.l.b16 %v109
    %v759 = vunpack.c.h.b16 %v109
    %v760 = vunpack.c.l.b16 %v110
    %v761 = vunpack.c.h.b16 %v110
    %v762 = vunpack.c.l.b16 %v111
    %v763 = vunpack.c.h.b16 %v111
    %v764 = vunpack.c.l.b16 %v112
    %v765 = vunpack.c.h.b16 %v112
    %v766 = vunpack.c.l.b16 %v113
    %v767 = vunpack.c.h.b16 %v113
    %v768 = vunpack.c.l.b16 %v114
    %v769 = vunpack.c.h.b16 %v114
    %v770 = vunpack.c.l.b16 %v115
    %v771 = vunpack.c.h.b16 %v115
    %v772 = vunpack.c.l.b16 %v116
    %v773 = vunpack.c.h.b16 %v116
    %v774 = vunpack.c.l.b16 %v117
    %v775 = vunpack.c.h.b16 %v117
    %v776 = vunpack.c.l.b16 %v118
    %v777 = vunpack.c.h.b16 %v118
    %v778 = vunpack.c.l.b16 %v119
    %v779 = vunpack.c.h.b16 %v119
    %v780 = vunpack.c.l.b16 %v120
    %v781 = vunpack.c.h.b16 %v120
    %v782 = vunpack.c.l.b16 %v121
    %v783 = vunpack.c.h.b16 %v121
    %v784 = vunpack.c.l.b16 %v122
    %v785 = vunpack.c.h.b16 %v122
    %v786 = vunpack.c.l.b16 %v123
    %v787 = vunpack.c.h.b16 %v123
    %v788 = vunpack.c.l.b16 %v124
    %v789 = vunpack.c.h.b16 %v124
    %v790 = vunpack.c.l.b16 %v125
    %v791 = vunpack.c.h.b16 %v125
    %v792 = vunpack.c.l.b16 %v126
    %v793 = vunpack.c.h.b16 %v126
    %v794 = vunpack.c.l.b16 %v127
    %v795 = vunpack.c.h.b16 %v127
    %v796 = vunpack.c.l.b16 %v128
    %v797 = vunpack.c.h.b16 %v128
    %v798 = vunpack.c.l.b16 %v129
    %v799 = vunpack.c.h.b16 %v129
    %v800 = vunpack.c.l.b16 %v130
    %v801 = vunpack.c.h.b16 %v130
    %v802 = vunpack.c.l.b16 %v131
    %v803 = vunpack.c.h.b16 %v131
    %v804 = vunpack.c.l.b16 %v132
    %v805 = vunpack.c.h.b16 %v132
    %v806 = vunpack.c.l.b16 %v133
    %v807 = vunpack.c.h.b16 %v133
    %v808 = vunpack.c.l.b16 %v134
    %v809 = vunpack.c.h.b16 %v134
    %v810 = vunpack.c.l.b16 %v135
    %v811 = vunpack.c.h.b16 %v135
    %v812 = vunpack.c.l.b16 %v136
    %v813 = vunpack.c.h.b16 %v136
    %v814 = vunpack.c.l.b16 %v137
    %v815 = vunpack.c.h.b16 %v137
    %v816 = vunpack.c.l.b16 %v138
    %v817 = vunpack.c.h.b16 %v138
    %v818 = vunpack.c.l.b16 %v139
    %v819 = vunpack.c.h.b16 %v139
    %v820 = vunpack.c.l.b16 %v140
    %v821 = vunpack.c.h.b16 %v140
    %v822 = vunpack.c.l.b16 %v141
    %v823 = vunpack.c.h.b16 %v141
    %v824 = vunpack.c.l.b16 %v142
    %v825 = vunpack.c.h.b16 %v142
    %v826 = vunpack.c.l.b16 %v143
    %v827 = vunpack.c.h.b16 %v143
    %v828 = vunpack.c.l.b16 %v144
    %v829 = vunpack.c.h.b16 %v144
    %v830 = vunpack.c.l.b16 %v145
    %v831 = vunpack.c.h.b16 %v145
    %v832 = vunpack.c.l.b16 %v146
    %v833 = vunpack.c.h.b16 %v146
    %v834 = vunpack.c.l.b16 %v147
    %v835 = vunpack.c.h.b16 %v147
    %v836 = vunpack.c.l.b16 %v148
    %v837 = vunpack.c.h.b16 %v148
    %v838 = vunpack.c.l.b16 %v149
    %v839 = vunpack.c.h.b16 %v149
    %v840 = vunpack.c.l.b16 %v150
    %v841 = vunpack.c.h.b16 %v150
    %v842 = vunpack.c.l.b16 %v151
    %v843 = vunpack.c.h.b16 %v151
    %v844 = vunpack.c.l.b16 %v152
    %v845 = vunpack.c.h.b16 %v152
    %v846 = vunpack.c.l.b16 %v153
    %v847 = vunpack.c.h.b16 %v153
    %v848 = vunpack.c.l.b16 %v154
    %v849 = vunpack.c.h.b16 %v154
    %v850 = vunpack.c.l.b16 %v155
    %v851 = vunpack.c.h.b16 %v155
    %v852 = vunpack.c.l.b16 %v156
    %v853 = vunpack.c.h.b16 %v156
    %v854 = vunpack.c.l.b16 %v157
    %v855 = vunpack.c.h.b16 %v157
    %v856 = vunpack.c.l.b16 %v158
    %v857 = vunpack.c.h.b16 %v158
    %v858 = vunpack.c.l.b16 %v159
    %v859 = vunpack.c.h.b16 %v159
    %v860 = vunpack.c.l.b16 %v160
    %v861 = vunpack.c.h.b16 %v160
    %v862 = vunpack.c.l.b16 %v161
    %v863 = vunpack.c.h.b16 %v161
    %v864 = vunpack.c.l.b16 %v162
    %v865 = vunpack.c.h.b16 %v162
    %v866 = vunpack.c.l.b16 %v163
    %v867 = vunpack.c.h.b16 %v163
    %v868 = vunpack.c.l.b16 %v164
    %v869 = vunpack.c.h.b16 %v164
    %v870 = vunpack.c.l.b16 %v165
    %v871 = vunpack.c.h.b16 %v165
    %v872 = vunpack.c.l.b16 %v166
    %v873 = vunpack.c.h.b16 %v166
    %v874 = vunpack.c.l.b16 %v167
    %v875 = vunpack.c.h.b16 %v167
    %v876 = vunpack.c.l.b16 %v168
    %v877 = vunpack.c.h.b16 %v168
    %v878 = vunpack.c.l.b16 %v169
    %v879 = vunpack.c.h.b16 %v169
    %v880 = vunpack.c.l.b16 %v170
    %v881 = vunpack.c.h.b16 %v170
    %v882 = vunpack.c.l.b16 %v171
    %v883 = vunpack.c.h.b16 %v171
    %v884 = vunpack.c.l.b16 %v172
    %v885 = vunpack.c.h.b16 %v172
    %v886 = vunpack.c.l.b16 %v173
    %v887 = vunpack.c.h.b16 %v173
    %v888 = vunpack.c.l.b16 %v174
    %v889 = vunpack.c.h.b16 %v174
    %v890 = vunpack.c.l.b16 %v175
    %v891 = vunpack.c.h.b16 %v175
    %v892 = vunpack.c.l.b16 %v176
    %v893 = vunpack.c.h.b16 %v176
    %v894 = vunpack.c.l.b16 %v177
    %v895 = vunpack.c.h.b16 %v177
    %v896 = vunpack.c.l.b16 %v178
    %v897 = vunpack.c.h.b16 %v178
    %v898 = vunpack.c.l.b16 %v179
    %v899 = vunpack.c.h.b16 %v179
    %v900 = vunpack.c.l.b16 %v180
    %v901 = vunpack.c.h.b16 %v180
    %v902 = vunpack.c.l.b16 %v181
    %v903 = vunpack.c.h.b16 %v181
    %v904 = vunpack.c.l.b16 %v182
    %v905 = vunpack.c.h.b16 %v182
    %v906 = vunpack.c.l.b16 %v183
    %v907 = vunpack.c.h.b16 %v183
    %v908 = vunpack.c.l.b16 %v184
    %v909 = vunpack.c.h.b16 %v184
    %v910 = vunpack.c.l.b16 %v185
    %v911 = vunpack.c.h.b16 %v185
    %v912 = vunpack.c.l.b16 %v186
    %v913 = vunpack.c.h.b16 %v186
    %v914 = vunpack.c.l.b16 %v187
    %v915 = vunpack.c.h.b16 %v187
    %v916 = vunpack.c.l.b16 %v188
    %v917 = vunpack.c.h.b16 %v188
    %v918 = vunpack.c.l.b16 %v189
    %v919 = vunpack.c.h.b16 %v189
    %v920 = vunpack.c.l.b16 %v190
    %v921 = vunpack.c.h.b16 %v190
    %v922 = vunpack.c.l.b16 %v191
    %v923 = vunpack.c.h.b16 %v191
    %v924 = vunpack.c.l.b16 %v192
    %v925 = vunpack.c.h.b16 %v192
    %v926 = vunpack.c.l.b16 %v193
    %v927 = vunpack.c.h.b16 %v193
    %v928 = vunpack.c.l.b16 %v194
    %v929 = vunpack.c.h.b16 %v194
    %v930 = vunpack.c.l.b16 %v195
    %v931 = vunpack.c.h.b16 %v195
    %v932 = vunpack.c.l.b16 %v196
    %v933 = vunpack.c.h.b16 %v196
    %v934 = vunpack.c.l.b16 %v197
    %v935 = vunpack.c.h.b16 %v197
    %v936 = vunpack.c.l.b16 %v198
    %v937 = vunpack.c.h.b16 %v198
    %v938 = vunpack.c.l.b16 %v199
    %v939 = vunpack.c.h.b16 %v199
    %v940 = vunpack.c.l.b16 %v200
    %v941 = vunpack.c.h.b16 %v200
    %v942 = vunpack.c.l.b16 %v201
    %v943 = vunpack.c.h.b16 %v201
    %v944 = vunpack.c.l.b16 %v202
    %v945 = vunpack.c.h.b16 %v202
    %v946 = vunpack.c.l.b16 %v203
    %v947 = vunpack.c.h.b16 %v203
    %v948 = vunpack.c.l.b16 %v204
    %v949 = vunpack.c.h.b16 %v204
    %v950 = vunpack.c.l.b16 %v205
    %v951 = vunpack.c.h.b16 %v205
    %v952 = vunpack.c.l.b16 %v206
    %v953 = vunpack.c.h.b16 %v206
    %v954 = vunpack.c.l.b16 %v207
    %v955 = vunpack.c.h.b16 %v207
    %v956 = vunpack.c.l.b16 %v208
    %v957 = vunpack.c.h.b16 %v208
    %v958 = vunpack.c.l.b16 %v209
    %v959 = vunpack.c.h.b16 %v209
    %v960 = vunpack.c.l.b16 %v210
    %v961 = vunpack.c.h.b16 %v210
    %v962 = vunpack.c.l.b16 %v211
    %v963 = vunpack.c.h.b16 %v211
    %v964 = vunpack.c.l.b16 %v212
    %v965 = vunpack.c.h.b16 %v212
    %v966 = vunpack.c.l.b16 %v213
    %v967 = vunpack.c.h.b16 %v213
    %v968 = vunpack.c.l.b16 %v214
    %v969 = vunpack.c.h.b16 %v214
    %v970 = vunpack.c.l.b16 %v215
    %v971 = vunpack.c.h.b16 %v215
    %v972 = vunpack.c.l.b16 %v216
    %v973 = vunpack.c.h.b16 %v216
    %v974 = vunpack.c.l.b16 %v217
    %v975 = vunpack.c.h.b16 %v217
    %v976 = vunpack.c.l.b16 %v218
    %v977 = vunpack.c.h.b16 %v218
    %v978 = vunpack.c.l.b16 %v219
    %v979 = vunpack.c.h.b16 %v219
    %v980 = vunpack.c.l.b16 %v220
    %v981 = vunpack.c.h.b16 %v220
    %v982 = vunpack.c.l.b16 %v221
    %v983 = vunpack.c.h.b16 %v221
    %v984 = vpack.c.b16 %v594, %v584
    %v985 = vpack.c.b16 %v595, %v585
    %v986 = vpack.c.b16 %v596, %v586
    %v987 = vpack.c.b16 %v597, %v587
    %v988 = vpack.c.b16 %v598, %v588
    %v989 = vpack.c.b16 %v599, %v589
    %v990 = vpack.c.b16 %v600, %v590
    %v991 = vpack.c.b16 %v601, %v591
    %v992 = vpack.c.b16 %v602, %v592
    %v993 = vpack.c.b16 %v603, %v593
    %v994 = vpack.c.b16 %v614, %v604
    %v995 = vpack.c.b16 %v615, %v605
    %v996 = vpack.c.b16 %v616, %v606
    %v997 = vpack.c.b16 %v617, %v607
    %v998 = vpack.c.b16 %v618, %v608
    %v999 = vpack.c.b16 %v619, %v609
    %v1000 = vpack.c.b16 %v620, %v610
    %v1001 = vpack.c.b16 %v621, %v611
    %v1002 = vpack.c.b16 %v622, %v612
    %v1003 = vpack.c.b16 %v623, %v613
    %v1004 = vpack.c.b16 %v634, %v624
    %v1005 = vpack.c.b16 %v635, %v625
    %v1006 = vpack.c.b16 %v636, %v626
    %v1007 = vpack.c.b16 %v637, %v627
    %v1008 = vpack.c.b16 %v638, %v628
    %v1009 = vpack.c.b16 %v639, %v629
    %v1010 = vpack.c.b16 %v640, %v630
    %v1011 = vpack.c.b16 %v641, %v631
    %v1012 = vpack.c.b16 %v642, %v632
    %v1013 = vpack.c.b16 %v643, %v633
    %v1014 = vpack.c.b16 %v654, %v644
    %v1015 = vpack.c.b16 %v655, %v645
    %v1016 = vpack.c.b16 %v656, %v646
    %v1017 = vpack.c.b16 %v657, %v647
    %v1018 = vpack.c.b16 %v658, %v648
    %v1019 = vpack.c.b16 %v659, %v649
    %v1020 = vpack.c.b16 %v660, %v650
    %v1021 = vpack.c.b16 %v661, %v651
    %v1022 = vpack.c.b16 %v662, %v652
    %v1023 = vpack.c.b16 %v663, %v653
    %v1024 = vpack.c.b16 %v674, %v664
    %v1025 = vpack.c.b16 %v675, %v665
    %v1026 = vpack.c.b16 %v676, %v666
    %v1027 = vpack.c.b16 %v677, %v667
    %v1028 = vpack.c.b16 %v678, %v668
    %v1029 = vpack.c.b16 %v679, %v669
    %v1030 = vpack.c.b16 %v680, %v670
    %v1031 = vpack.c.b16 %v681, %v671
    %v1032 = vpack.c.b16 %v682, %v672
    %v1033 = vpack.c.b16 %v683, %v673
    %v1034 = vpack.c.b16 %v694, %v684
    %v1035 = vpack.c.b16 %v695, %v685
    %v1036 = vpack.c.b16 %v696, %v686
    %v1037 = vpack.c.b16 %v697, %v687
    %v1038 = vpack.c.b16 %v698, %v688
    %v1039 = vpack.c.b16 %v699, %v689
    %v1040 = vpack.c.b16 %v700, %v690
    %v1041 = vpack.c.b16 %v701, %v691
    %v1042 = vpack.c.b16 %v702, %v692
    %v1043 = vpack.c.b16 %v703, %v693
    %v1044 = vpack.c.b16 %v714, %v704
    %v1045 = vpack.c.b16 %v715, %v705
    %v1046 = vpack.c.b16 %v716, %v706
    %v1047 = vpack.c.b16 %v717, %v707
    %v1048 = vpack.c.b16 %v718, %v708
    %v1049 = vpack.c.b16 %v719, %v709
    %v1050 = vpack.c.b16 %v720, %v710
    %v1051 = vpack.c.b16 %v721, %v711
    %v1052 = vpack.c.b16 %v722, %v712
    %v1053 = vpack.c.b16 %v723, %v713
    %v1054 = vpack.c.b16 %v734, %v724
    %v1055 = vpack.c.b16 %v735, %v725
    %v1056 = vpack.c.b16 %v736, %v726
    %v1057 = vpack.c.b16 %v737, %v727
    %v1058 = vpack.c.b16 %v738, %v728
    %v1059 = vpack.c.b16 %v739, %v729
    %v1060 = vpack.c.b16 %v740, %v730
    %v1061 = vpack.c.b16 %v741, %v731
    %v1062 = vpack.c.b16 %v742, %v732
    %v1063 = vpack.c.b16 %v743, %v733
    %v1064 = vpack.c.b16 %v754, %v744
    %v1065 = vpack.c.b16 %v755, %v745
    %v1066 = vpack.c.b16 %v756, %v746
    %v1067 = vpack.c.b16 %v757, %v747
    %v1068 = vpack.c.b16 %v758, %v748
    %v1069 = vpack.c.b16 %v759, %v749
    %v1070 = vpack.c.b16 %v760, %v750
    %v1071 = vpack.c.b16 %v761, %v751
    %v1072 = vpack.c.b16 %v762, %v752
    %v1073 = vpack.c.b16 %v763, %v753
    %v1074 = vpack.c.b16 %v774, %v764
    %v1075 = vpack.c.b16 %v775, %v765
    %v1076 = vpack.c.b16 %v776, %v766
    %v1077 = vpack.c.b16 %v777, %v767
    %v1078 = vpack.c.b16 %v778, %v768
    %v1079 = vpack.c.b16 %v779, %v769
    %v1080 = vpack.c.b16 %v780, %v770
    %v1081 = vpack.c.b16 %v781, %v771
    %v1082 = vpack.c.b16 %v782, %v772
    %v1083 = vpack.c.b16 %v783, %v773
    %v1084 = vpack.c.b16 %v794, %v784
    %v1085 = vpack.c.b16 %v795, %v785
    %v1086 = vpack.c.b16 %v796, %v786
    %v1087 = vpack.c.b16 %v797, %v787
    %v1088 = vpack.c.b16 %v798, %v788
    %v1089 = vpack.c.b16 %v799, %v789
    %v1090 = vpack.c.b16 %v800, %v790
    %v1091 = vpack.c.b16 %v801, %v791
    %v1092 = vpack.c.b16 %v802, %v792
    %v1093 = vpack.c.b16 %v803, %v793
    %v1094 = vpack.c.b16 %v814, %v804
    %v1095 = vpack.c.b16 %v815, %v805
    %v1096 = vpack.c.b16 %v816, %v806
    %v1097 = vpack.c.b16 %v817, %v807
    %v1098 = vpack.c.b16 %v818, %v808
    %v1099 = vpack.c.b16 %v819, %v809
    %v1100 = vpack.c.b16 %v820, %v810
    %v1101 = vpack.c.b16 %v821, %v811
    %v1102 = vpack.c.b16 %v822, %v812
    %v1103 = vpack.c.b16 %v823, %v813
    %v1104 = vpack.c.b16 %v834, %v824
    %v1105 = vpack.c.b16 %v835, %v825
    %v1106 = vpack.c.b16 %v836, %v826
    %v1107 = vpack.c.b16 %v837, %v827
    %v1108 = vpack.c.b16 %v838, %v828
    %v1109 = vpack.c.b16 %v839, %v829
    %v1110 = vpack.c.b16 %v840, %v830
    %v1111 = vpack.c.b16 %v841, %v831
    %v1112 = vpack.c.b16 %v842, %v832
    %v1113 = vpack.c.b16 %v843, %v833
    %v1114 = vpack.c.b16 %v854, %v844
    %v1115 = vpack.c.b16 %v855, %v845
    %v1116 = vpack.c.b16 %v856, %v846
    %v1117 = vpack.c.b16 %v857, %v847
    %v1118 = vpack.c.b16 %v858, %v848
    %v1119 = vpack.c.b16 %v859, %v849
    %v1120 = vpack.c.b16 %v860, %v850
    %v1121 = vpack.c.b16 %v861, %v851
    %v1122 = vpack.c.b16 %v862, %v852
    %v1123 = vpack.c.b16 %v863, %v853
    %v1124 = vpack.c.b16 %v874, %v864
    %v1125 = vpack.c.b16 %v875, %v865
    %v1126 = vpack.c.b16 %v876, %v866
    %v1127 = vpack.c.b16 %v877, %v867
    %v1128 = vpack.c.b16 %v878, %v868
    %v1129 = vpack.c.b16 %v879, %v869
    %v1130 = vpack.c.b16 %v880, %v870
    %v1131 = vpack.c.b16 %v881, %v871
    %v1132 = vpack.c.b16 %v882, %v872
    %v1133 = vpack.c.b16 %v883, %v873
    %v1134 = vpack.c.b16 %v894, %v884
    %v1135 = vpack.c.b16 %v895, %v885
    %v1136 = vpack.c.b16 %v896, %v886
    %v1137 = vpack.c.b16 %v897, %v887
    %v1138 = vpack.c.b16 %v898, %v888
    %v1139 = vpack.c.b16 %v899, %v889
    %v1140 = vpack.c.b16 %v900, %v890
    %v1141 = vpack.c.b16 %v901, %v891
    %v1142 = vpack.c.b16 %v902, %v892
    %v1143 = vpack.c.b16 %v903, %v893
    %v1144 = vpack.c.b16 %v914, %v904
    %v1145 = vpack.c.b16 %v915, %v905
    %v1146 = vpack.c.b16 %v916, %v906
    %v1147 = vpack.c.b16 %v917, %v907
    %v1148 = vpack.c.b16 %v918, %v908
    %v1149 = vpack.c.b16 %v919, %v909
    %v1150 = vpack.c.b16 %v920, %v910
    %v1151 = vpack.c.b16 %v921, %v911
    %v1152 = vpack.c.b16 %v922, %v912
    %v1153 = vpack.c.b16 %v923, %v913
    %v1154 = vpack.c.b16 %v934, %v924
    %v1155 = vpack.c.b16 %v935, %v925
    %v1156 = vpack.c.b16 %v936, %v926
    %v1157 = vpack.c.b16 %v937, %v927
    %v1158 = vpack.c.b16 %v938, %v928
    %v1159 = vpack.c.b16 %v939, %v929
    %v1160 = vpack.c.b16 %v940, %v930
    %v1161 = vpack.c.b16 %v941, %v931
    %v1162 = vpack.c.b16 %v942, %v932
    %v1163 = vpack.c.b16 %v943, %v933
    %v1164 = vpack.c.b16 %v954, %v944
    %v1165 = vpack.c.b16 %v955, %v945
    %v1166 = vpack.c.b16 %v956, %v946
    %v1167 = vpack.c.b16 %v957, %v947
    %v1168 = vpack.c.b16 %v958, %v948
    %v1169 = vpack.c.b16 %v959, %v949
    %v1170 = vpack.c.b16 %v960, %v950
    %v1171 = vpack.c.b16 %v961, %v951
    %v1172 = vpack.c.b16 %v962, %v952
    %v1173 = vpack.c.b16 %v963, %v953
    %v1174 = vpack.c.b16 %v974, %v964
    %v1175 = vpack.c.b16 %v975, %v965
    %v1176 = vpack.c.b16 %v976, %v966
    %v1177 = vpack.c.b16 %v977, %v967
    %v1178 = vpack.c.b16 %v978, %v968
    %v1179 = vpack.c.b16 %v979, %v969
    %v1180 = vpack.c.b16 %v980, %v970
    %v1181 = vpack.c.b16 %v981, %v971
    %v1182 = vpack.c.b16 %v982, %v972
    %v1183 = vpack.c.b16 %v983, %v973
    %vm1384 = vcmask 523264
    %v1386 = vsel %vm1384, %v376, 0
    %v1389 = vsel %vm1384, %v377, 0
    %v1392 = vsel %vm1384, %v378, 0
    %v1395 = vsel %vm1384, %v379, 0
    %1397 = vmatprep.subr.bf16.mxu0 %v1055
    %1398 = vmatpush1.bf16.msra.mxu0 %v1054
    %1399 = vmatprep.subr.bf16.mxu0 %v1045
    %1400 = vmatpush1.bf16.msra.mxu0 %v1044
    %1401 = vmatprep.subr.bf16.mxu0 %v1035
    %1402 = vmatpush1.bf16.msra.mxu0 %v1034
    %1403 = vmatprep.subr.bf16.mxu0 %v1025
    %1404 = vmatpush1.bf16.msra.mxu0 %v1024
    %1405 = vmatprep.subr.bf16.mxu0 %v1015
    %1406 = vmatpush1.bf16.msra.mxu0 %v1014
    %1407 = vmatprep.subr.bf16.mxu0 %v1005
    %1408 = vmatpush1.bf16.msra.mxu0 %v1004
    %1409 = vmatprep.subr.bf16.mxu0 %v995
    %1410 = vmatpush1.bf16.msra.mxu0 %v994
    %1411 = vmatprep.subr.bf16.mxu0 %v985
    %1412 = vmatpush1.bf16.msra.mxu0 %v984
    %1413 = vmatprep.subr.bf16.mxu0 %v1135
    %1414 = vmatpush2.bf16.msra.mxu0 %v1134
    %1415 = vmatprep.subr.bf16.mxu0 %v1125
    %1416 = vmatpush2.bf16.msra.mxu0 %v1124
    %1417 = vmatprep.subr.bf16.mxu0 %v1115
    %1418 = vmatpush2.bf16.msra.mxu0 %v1114
    %1419 = vmatprep.subr.bf16.mxu0 %v1105
    %1420 = vmatpush2.bf16.msra.mxu0 %v1104
    %1421 = vmatprep.subr.bf16.mxu0 %v1095
    %1422 = vmatpush2.bf16.msra.mxu0 %v1094
    %1423 = vmatprep.subr.bf16.mxu0 %v1085
    %1424 = vmatpush2.bf16.msra.mxu0 %v1084
    %1425 = vmatprep.subr.bf16.mxu0 %v1075
    %1426 = vmatpush2.bf16.msra.mxu0 %v1074
    %1427 = vmatprep.subr.bf16.mxu0 %v1065
    %1428 = vmatpush2.bf16.msra.mxu0 %v1064
    %1429 = vmatprep.mubr.bf16.mxu0 %v360
    %1430 = vmatmul.mubr.bf16.gmra.mxu0 %v344
    %v1431 = vpop.f32.mrf.mxu0
    %v1432 = vadd.f32 %v289, %v1431
    %v1433 = vpop.f32.mrf.mxu0
    %v1434 = vadd.f32 %v293, %v1433
    %v1435 = vpop.f32.mrf.mxu0
    %v1436 = vadd.f32 %v289, %v1435
    %v1437 = vpop.f32.mrf.mxu0
    %v1438 = vadd.f32 %v293, %v1437
    %1439 = vmatprep.mubr.bf16.mxu0 %v361
    %1440 = vmatmul.mubr.bf16.gmra.mxu0 %v345
    %v1441 = vpop.f32.mrf.mxu0
    %v1442 = vadd.f32 %v289, %v1441
    %v1443 = vpop.f32.mrf.mxu0
    %v1444 = vadd.f32 %v293, %v1443
    %v1445 = vpop.f32.mrf.mxu0
    %v1446 = vadd.f32 %v289, %v1445
    %v1447 = vpop.f32.mrf.mxu0
    %v1448 = vadd.f32 %v293, %v1447
    %1449 = vmatprep.mubr.bf16.mxu0 %v362
    %1450 = vmatmul.mubr.bf16.gmra.mxu0 %v346
    %v1451 = vpop.f32.mrf.mxu0
    %v1452 = vadd.f32 %v289, %v1451
    %v1453 = vpop.f32.mrf.mxu0
    %v1454 = vadd.f32 %v293, %v1453
    %v1455 = vpop.f32.mrf.mxu0
    %v1456 = vadd.f32 %v289, %v1455
    %v1457 = vpop.f32.mrf.mxu0
    %v1458 = vadd.f32 %v293, %v1457
    %1459 = vmatprep.mubr.bf16.mxu0 %v363
    %1460 = vmatmul.mubr.bf16.gmra.mxu0 %v347
    %v1461 = vpop.f32.mrf.mxu0
    %v1462 = vadd.f32 %v289, %v1461
    %v1463 = vpop.f32.mrf.mxu0
    %v1464 = vadd.f32 %v293, %v1463
    %v1465 = vpop.f32.mrf.mxu0
    %v1466 = vpop.f32.mrf.mxu0
    %1467 = vdwg.mxu0
    %1468 = vmatprep.subr.bf16.mxu0 0
    %1469 = vmatpush1.bf16.msra.mxu0 0
    %1470 = vmatprep.subr.bf16.mxu0 0
    %1471 = vmatpush1.bf16.msra.mxu0 0
    %1472 = vmatprep.subr.bf16.mxu0 0
    %1473 = vmatpush1.bf16.msra.mxu0 0
    %1474 = vmatprep.subr.bf16.mxu0 0
    %1475 = vmatpush1.bf16.msra.mxu0 0
    %1476 = vmatprep.subr.bf16.mxu0 %v1175
    %1477 = vmatpush1.bf16.msra.mxu0 %v1174
    %1478 = vmatprep.subr.bf16.mxu0 %v1165
    %1479 = vmatpush1.bf16.msra.mxu0 %v1164
    %1480 = vmatprep.subr.bf16.mxu0 %v1155
    %1481 = vmatpush1.bf16.msra.mxu0 %v1154
    %1482 = vmatprep.subr.bf16.mxu0 %v1145
    %1483 = vmatpush1.bf16.msra.mxu0 %v1144
    %1484 = vmatprep.subr.bf16.mxu0 0
    %1485 = vmatpush2.bf16.msra.mxu0 0
    %1486 = vmatprep.subr.bf16.mxu0 0
    %1487 = vmatpush2.bf16.msra.mxu0 0
    %1488 = vmatprep.subr.bf16.mxu0 0
    %1489 = vmatpush2.bf16.msra.mxu0 0
    %1490 = vmatprep.subr.bf16.mxu0 0
    %1491 = vmatpush2.bf16.msra.mxu0 0
    %1492 = vmatprep.subr.bf16.mxu0 0
    %1493 = vmatpush2.bf16.msra.mxu0 0
    %1494 = vmatprep.subr.bf16.mxu0 0
    %1495 = vmatpush2.bf16.msra.mxu0 0
    %1496 = vmatprep.subr.bf16.mxu0 0
    %1497 = vmatpush2.bf16.msra.mxu0 0
    %1498 = vmatprep.subr.bf16.mxu0 0
    %1499 = vmatpush2.bf16.msra.mxu0 0
    %1500 = vmatprep.mubr.bf16.mxu0 0
    %1501 = vmatmul.mubr.bf16.gmra.mxu0 %v1386
    %v1502 = vpop.f32.mrf.mxu0
    %v1503 = vadd.f32 %v1432, %v1502
    %v1504 = vpop.f32.mrf.mxu0
    %v1505 = vadd.f32 %v1434, %v1504
    %v1506 = vpop.f32.mrf.mxu0
    %v1507 = vadd.f32 %v1436, %v1506
    %v1508 = vpop.f32.mrf.mxu0
    %v1509 = vadd.f32 %v1438, %v1508
    %1510 = vmatprep.mubr.bf16.mxu0 0
    %1511 = vmatmul.mubr.bf16.gmra.mxu0 %v1389
    %v1512 = vpop.f32.mrf.mxu0
    %v1513 = vadd.f32 %v1442, %v1512
    %v1514 = vpop.f32.mrf.mxu0
    %v1515 = vadd.f32 %v1444, %v1514
    %v1516 = vpop.f32.mrf.mxu0
    %v1517 = vadd.f32 %v1446, %v1516
    %v1518 = vpop.f32.mrf.mxu0
    %v1519 = vadd.f32 %v1448, %v1518
    %1520 = vmatprep.mubr.bf16.mxu0 0
    %1521 = vmatmul.mubr.bf16.gmra.mxu0 %v1392
    %v1522 = vpop.f32.mrf.mxu0
    %v1523 = vadd.f32 %v1452, %v1522
    %v1524 = vpop.f32.mrf.mxu0
    %v1525 = vadd.f32 %v1454, %v1524
    %v1526 = vpop.f32.mrf.mxu0
    %v1527 = vadd.f32 %v1456, %v1526
    %v1528 = vpop.f32.mrf.mxu0
    %v1529 = vadd.f32 %v1458, %v1528
    %1530 = vmatprep.mubr.bf16.mxu0 0
    %1531 = vmatmul.mubr.bf16.gmra.mxu0 %v1395
    %v1532 = vpop.f32.mrf.mxu0
    %v1533 = vadd.f32 %v1462, %v1532
    %v1534 = vpop.f32.mrf.mxu0
    %v1535 = vadd.f32 %v1464, %v1534
    %v1536 = vpop.f32.mrf.mxu0
    %v1537 = vpop.f32.mrf.mxu0
    %1538 = vdwg.mxu0
    %1539 = vmatprep.subr.bf16.mxu0 %v1057
    %1540 = vmatpush1.bf16.msra.mxu0 %v1056
    %1541 = vmatprep.subr.bf16.mxu0 %v1047
    %1542 = vmatpush1.bf16.msra.mxu0 %v1046
    %1543 = vmatprep.subr.bf16.mxu0 %v1037
    %1544 = vmatpush1.bf16.msra.mxu0 %v1036
    %1545 = vmatprep.subr.bf16.mxu0 %v1027
    %1546 = vmatpush1.bf16.msra.mxu0 %v1026
    %1547 = vmatprep.subr.bf16.mxu0 %v1017
    %1548 = vmatpush1.bf16.msra.mxu0 %v1016
    %1549 = vmatprep.subr.bf16.mxu0 %v1007
    %1550 = vmatpush1.bf16.msra.mxu0 %v1006
    %1551 = vmatprep.subr.bf16.mxu0 %v997
    %1552 = vmatpush1.bf16.msra.mxu0 %v996
    %1553 = vmatprep.subr.bf16.mxu0 %v987
    %1554 = vmatpush1.bf16.msra.mxu0 %v986
    %1555 = vmatprep.subr.bf16.mxu0 %v1137
    %1556 = vmatpush2.bf16.msra.mxu0 %v1136
    %1557 = vmatprep.subr.bf16.mxu0 %v1127
    %1558 = vmatpush2.bf16.msra.mxu0 %v1126
    %1559 = vmatprep.subr.bf16.mxu0 %v1117
    %1560 = vmatpush2.bf16.msra.mxu0 %v1116
    %1561 = vmatprep.subr.bf16.mxu0 %v1107
    %1562 = vmatpush2.bf16.msra.mxu0 %v1106
    %1563 = vmatprep.subr.bf16.mxu0 %v1097
    %1564 = vmatpush2.bf16.msra.mxu0 %v1096
    %1565 = vmatprep.subr.bf16.mxu0 %v1087
    %1566 = vmatpush2.bf16.msra.mxu0 %v1086
    %1567 = vmatprep.subr.bf16.mxu0 %v1077
    %1568 = vmatpush2.bf16.msra.mxu0 %v1076
    %1569 = vmatprep.subr.bf16.mxu0 %v1067
    %1570 = vmatpush2.bf16.msra.mxu0 %v1066
    %1571 = vmatprep.mubr.bf16.mxu0 %v360
    %1572 = vmatmul.mubr.bf16.gmra.mxu0 %v344
    %v1573 = vpop.f32.mrf.mxu0
    %v1574 = vadd.f32 %v297, %v1573
    %v1575 = vpop.f32.mrf.mxu0
    %v1576 = vadd.f32 %v301, %v1575
    %v1577 = vpop.f32.mrf.mxu0
    %v1578 = vadd.f32 %v297, %v1577
    %v1579 = vpop.f32.mrf.mxu0
    %v1580 = vadd.f32 %v301, %v1579
    %1581 = vmatprep.mubr.bf16.mxu0 %v361
    %1582 = vmatmul.mubr.bf16.gmra.mxu0 %v345
    %v1583 = vpop.f32.mrf.mxu0
    %v1584 = vadd.f32 %v297, %v1583
    %v1585 = vpop.f32.mrf.mxu0
    %v1586 = vadd.f32 %v301, %v1585
    %v1587 = vpop.f32.mrf.mxu0
    %v1588 = vadd.f32 %v297, %v1587
    %v1589 = vpop.f32.mrf.mxu0
    %v1590 = vadd.f32 %v301, %v1589
    %1591 = vmatprep.mubr.bf16.mxu0 %v362
    %1592 = vmatmul.mubr.bf16.gmra.mxu0 %v346
    %v1593 = vpop.f32.mrf.mxu0
    %v1594 = vadd.f32 %v297, %v1593
    %v1595 = vpop.f32.mrf.mxu0
    %v1596 = vadd.f32 %v301, %v1595
    %v1597 = vpop.f32.mrf.mxu0
    %v1598 = vadd.f32 %v297, %v1597
    %v1599 = vpop.f32.mrf.mxu0
    %v1600 = vadd.f32 %v301, %v1599
    %1601 = vmatprep.mubr.bf16.mxu0 %v363
    %1602 = vmatmul.mubr.bf16.gmra.mxu0 %v347
    %v1603 = vpop.f32.mrf.mxu0
    %v1604 = vadd.f32 %v297, %v1603
    %v1605 = vpop.f32.mrf.mxu0
    %v1606 = vadd.f32 %v301, %v1605
    %v1607 = vpop.f32.mrf.mxu0
    %v1608 = vpop.f32.mrf.mxu0
    %1609 = vdwg.mxu0
    %1610 = vmatprep.subr.bf16.mxu0 0
    %1611 = vmatpush1.bf16.msra.mxu0 0
    %1612 = vmatprep.subr.bf16.mxu0 0
    %1613 = vmatpush1.bf16.msra.mxu0 0
    %1614 = vmatprep.subr.bf16.mxu0 0
    %1615 = vmatpush1.bf16.msra.mxu0 0
    %1616 = vmatprep.subr.bf16.mxu0 0
    %1617 = vmatpush1.bf16.msra.mxu0 0
    %1618 = vmatprep.subr.bf16.mxu0 %v1177
    %1619 = vmatpush1.bf16.msra.mxu0 %v1176
    %1620 = vmatprep.subr.bf16.mxu0 %v1167
    %1621 = vmatpush1.bf16.msra.mxu0 %v1166
    %1622 = vmatprep.subr.bf16.mxu0 %v1157
    %1623 = vmatpush1.bf16.msra.mxu0 %v1156
    %1624 = vmatprep.subr.bf16.mxu0 %v1147
    %1625 = vmatpush1.bf16.msra.mxu0 %v1146
    %1626 = vmatprep.subr.bf16.mxu0 0
    %1627 = vmatpush2.bf16.msra.mxu0 0
    %1628 = vmatprep.subr.bf16.mxu0 0
    %1629 = vmatpush2.bf16.msra.mxu0 0
    %1630 = vmatprep.subr.bf16.mxu0 0
    %1631 = vmatpush2.bf16.msra.mxu0 0
    %1632 = vmatprep.subr.bf16.mxu0 0
    %1633 = vmatpush2.bf16.msra.mxu0 0
    %1634 = vmatprep.subr.bf16.mxu0 0
    %1635 = vmatpush2.bf16.msra.mxu0 0
    %1636 = vmatprep.subr.bf16.mxu0 0
    %1637 = vmatpush2.bf16.msra.mxu0 0
    %1638 = vmatprep.subr.bf16.mxu0 0
    %1639 = vmatpush2.bf16.msra.mxu0 0
    %1640 = vmatprep.subr.bf16.mxu0 0
    %1641 = vmatpush2.bf16.msra.mxu0 0
    %1642 = vmatprep.mubr.bf16.mxu0 0
    %1643 = vmatmul.mubr.bf16.gmra.mxu0 %v1386
    %v1644 = vpop.f32.mrf.mxu0
    %v1645 = vadd.f32 %v1574, %v1644
    %v1646 = vpop.f32.mrf.mxu0
    %v1647 = vadd.f32 %v1576, %v1646
    %v1648 = vpop.f32.mrf.mxu0
    %v1649 = vadd.f32 %v1578, %v1648
    %v1650 = vpop.f32.mrf.mxu0
    %v1651 = vadd.f32 %v1580, %v1650
    %1652 = vmatprep.mubr.bf16.mxu0 0
    %1653 = vmatmul.mubr.bf16.gmra.mxu0 %v1389
    %v1654 = vpop.f32.mrf.mxu0
    %v1655 = vadd.f32 %v1584, %v1654
    %v1656 = vpop.f32.mrf.mxu0
    %v1657 = vadd.f32 %v1586, %v1656
    %v1658 = vpop.f32.mrf.mxu0
    %v1659 = vadd.f32 %v1588, %v1658
    %v1660 = vpop.f32.mrf.mxu0
    %v1661 = vadd.f32 %v1590, %v1660
    %1662 = vmatprep.mubr.bf16.mxu0 0
    %1663 = vmatmul.mubr.bf16.gmra.mxu0 %v1392
    %v1664 = vpop.f32.mrf.mxu0
    %v1665 = vadd.f32 %v1594, %v1664
    %v1666 = vpop.f32.mrf.mxu0
    %v1667 = vadd.f32 %v1596, %v1666
    %v1668 = vpop.f32.mrf.mxu0
    %v1669 = vadd.f32 %v1598, %v1668
    %v1670 = vpop.f32.mrf.mxu0
    %v1671 = vadd.f32 %v1600, %v1670
    %1672 = vmatprep.mubr.bf16.mxu0 0
    %1673 = vmatmul.mubr.bf16.gmra.mxu0 %v1395
    %v1674 = vpop.f32.mrf.mxu0
    %v1675 = vadd.f32 %v1604, %v1674
    %v1676 = vpop.f32.mrf.mxu0
    %v1677 = vadd.f32 %v1606, %v1676
    %v1678 = vpop.f32.mrf.mxu0
    %v1679 = vpop.f32.mrf.mxu0
    %1680 = vdwg.mxu0
    %1681 = vmatprep.subr.bf16.mxu0 %v1059
    %1682 = vmatpush1.bf16.msra.mxu0 %v1058
    %1683 = vmatprep.subr.bf16.mxu0 %v1049
    %1684 = vmatpush1.bf16.msra.mxu0 %v1048
    %1685 = vmatprep.subr.bf16.mxu0 %v1039
    %1686 = vmatpush1.bf16.msra.mxu0 %v1038
    %1687 = vmatprep.subr.bf16.mxu0 %v1029
    %1688 = vmatpush1.bf16.msra.mxu0 %v1028
    %1689 = vmatprep.subr.bf16.mxu0 %v1019
    %1690 = vmatpush1.bf16.msra.mxu0 %v1018
    %1691 = vmatprep.subr.bf16.mxu0 %v1009
    %1692 = vmatpush1.bf16.msra.mxu0 %v1008
    %1693 = vmatprep.subr.bf16.mxu0 %v999
    %1694 = vmatpush1.bf16.msra.mxu0 %v998
    %1695 = vmatprep.subr.bf16.mxu0 %v989
    %1696 = vmatpush1.bf16.msra.mxu0 %v988
    %1697 = vmatprep.subr.bf16.mxu0 %v1139
    %1698 = vmatpush2.bf16.msra.mxu0 %v1138
    %1699 = vmatprep.subr.bf16.mxu0 %v1129
    %1700 = vmatpush2.bf16.msra.mxu0 %v1128
    %1701 = vmatprep.subr.bf16.mxu0 %v1119
    %1702 = vmatpush2.bf16.msra.mxu0 %v1118
    %1703 = vmatprep.subr.bf16.mxu0 %v1109
    %1704 = vmatpush2.bf16.msra.mxu0 %v1108
    %1705 = vmatprep.subr.bf16.mxu0 %v1099
    %1706 = vmatpush2.bf16.msra.mxu0 %v1098
    %1707 = vmatprep.subr.bf16.mxu0 %v1089
    %1708 = vmatpush2.bf16.msra.mxu0 %v1088
    %1709 = vmatprep.subr.bf16.mxu0 %v1079
    %1710 = vmatpush2.bf16.msra.mxu0 %v1078
    %1711 = vmatprep.subr.bf16.mxu0 %v1069
    %1712 = vmatpush2.bf16.msra.mxu0 %v1068
    %1713 = vmatprep.mubr.bf16.mxu0 %v360
    %1714 = vmatmul.mubr.bf16.gmra.mxu0 %v344
    %v1715 = vpop.f32.mrf.mxu0
    %v1716 = vadd.f32 %v305, %v1715
    %v1717 = vpop.f32.mrf.mxu0
    %v1718 = vadd.f32 %v309, %v1717
    %v1719 = vpop.f32.mrf.mxu0
    %v1720 = vadd.f32 %v305, %v1719
    %v1721 = vpop.f32.mrf.mxu0
    %v1722 = vadd.f32 %v309, %v1721
    %1723 = vmatprep.mubr.bf16.mxu0 %v361
    %1724 = vmatmul.mubr.bf16.gmra.mxu0 %v345
    %v1725 = vpop.f32.mrf.mxu0
    %v1726 = vadd.f32 %v305, %v1725
    %v1727 = vpop.f32.mrf.mxu0
    %v1728 = vadd.f32 %v309, %v1727
    %v1729 = vpop.f32.mrf.mxu0
    %v1730 = vadd.f32 %v305, %v1729
    %v1731 = vpop.f32.mrf.mxu0
    %v1732 = vadd.f32 %v309, %v1731
    %1733 = vmatprep.mubr.bf16.mxu0 %v362
    %1734 = vmatmul.mubr.bf16.gmra.mxu0 %v346
    %v1735 = vpop.f32.mrf.mxu0
    %v1736 = vadd.f32 %v305, %v1735
    %v1737 = vpop.f32.mrf.mxu0
    %v1738 = vadd.f32 %v309, %v1737
    %v1739 = vpop.f32.mrf.mxu0
    %v1740 = vadd.f32 %v305, %v1739
    %v1741 = vpop.f32.mrf.mxu0
    %v1742 = vadd.f32 %v309, %v1741
    %1743 = vmatprep.mubr.bf16.mxu0 %v363
    %1744 = vmatmul.mubr.bf16.gmra.mxu0 %v347
    %v1745 = vpop.f32.mrf.mxu0
    %v1746 = vadd.f32 %v305, %v1745
    %v1747 = vpop.f32.mrf.mxu0
    %v1748 = vadd.f32 %v309, %v1747
    %v1749 = vpop.f32.mrf.mxu0
    %v1750 = vpop.f32.mrf.mxu0
    %1751 = vdwg.mxu0
    %1752 = vmatprep.subr.bf16.mxu0 0
    %1753 = vmatpush1.bf16.msra.mxu0 0
    %1754 = vmatprep.subr.bf16.mxu0 0
    %1755 = vmatpush1.bf16.msra.mxu0 0
    %1756 = vmatprep.subr.bf16.mxu0 0
    %1757 = vmatpush1.bf16.msra.mxu0 0
    %1758 = vmatprep.subr.bf16.mxu0 0
    %1759 = vmatpush1.bf16.msra.mxu0 0
    %1760 = vmatprep.subr.bf16.mxu0 %v1179
    %1761 = vmatpush1.bf16.msra.mxu0 %v1178
    %1762 = vmatprep.subr.bf16.mxu0 %v1169
    %1763 = vmatpush1.bf16.msra.mxu0 %v1168
    %1764 = vmatprep.subr.bf16.mxu0 %v1159
    %1765 = vmatpush1.bf16.msra.mxu0 %v1158
    %1766 = vmatprep.subr.bf16.mxu0 %v1149
    %1767 = vmatpush1.bf16.msra.mxu0 %v1148
    %1768 = vmatprep.subr.bf16.mxu0 0
    %1769 = vmatpush2.bf16.msra.mxu0 0
    %1770 = vmatprep.subr.bf16.mxu0 0
    %1771 = vmatpush2.bf16.msra.mxu0 0
    %1772 = vmatprep.subr.bf16.mxu0 0
    %1773 = vmatpush2.bf16.msra.mxu0 0
    %1774 = vmatprep.subr.bf16.mxu0 0
    %1775 = vmatpush2.bf16.msra.mxu0 0
    %1776 = vmatprep.subr.bf16.mxu0 0
    %1777 = vmatpush2.bf16.msra.mxu0 0
    %1778 = vmatprep.subr.bf16.mxu0 0
    %1779 = vmatpush2.bf16.msra.mxu0 0
    %1780 = vmatprep.subr.bf16.mxu0 0
    %1781 = vmatpush2.bf16.msra.mxu0 0
    %1782 = vmatprep.subr.bf16.mxu0 0
    %1783 = vmatpush2.bf16.msra.mxu0 0
    %1784 = vmatprep.mubr.bf16.mxu0 0
    %1785 = vmatmul.mubr.bf16.gmra.mxu0 %v1386
    %v1786 = vpop.f32.mrf.mxu0
    %v1787 = vadd.f32 %v1716, %v1786
    %v1788 = vpop.f32.mrf.mxu0
    %v1789 = vadd.f32 %v1718, %v1788
    %v1790 = vpop.f32.mrf.mxu0
    %v1791 = vadd.f32 %v1720, %v1790
    %v1792 = vpop.f32.mrf.mxu0
    %v1793 = vadd.f32 %v1722, %v1792
    %1794 = vmatprep.mubr.bf16.mxu0 0
    %1795 = vmatmul.mubr.bf16.gmra.mxu0 %v1389
    %v1796 = vpop.f32.mrf.mxu0
    %v1797 = vadd.f32 %v1726, %v1796
    %v1798 = vpop.f32.mrf.mxu0
    %v1799 = vadd.f32 %v1728, %v1798
    %v1800 = vpop.f32.mrf.mxu0
    %v1801 = vadd.f32 %v1730, %v1800
    %v1802 = vpop.f32.mrf.mxu0
    %v1803 = vadd.f32 %v1732, %v1802
    %1804 = vmatprep.mubr.bf16.mxu0 0
    %1805 = vmatmul.mubr.bf16.gmra.mxu0 %v1392
    %v1806 = vpop.f32.mrf.mxu0
    %v1807 = vadd.f32 %v1736, %v1806
    %v1808 = vpop.f32.mrf.mxu0
    %v1809 = vadd.f32 %v1738, %v1808
    %v1810 = vpop.f32.mrf.mxu0
    %v1811 = vadd.f32 %v1740, %v1810
    %v1812 = vpop.f32.mrf.mxu0
    %v1813 = vadd.f32 %v1742, %v1812
    %1814 = vmatprep.mubr.bf16.mxu0 0
    %1815 = vmatmul.mubr.bf16.gmra.mxu0 %v1395
    %v1816 = vpop.f32.mrf.mxu0
    %v1817 = vadd.f32 %v1746, %v1816
    %v1818 = vpop.f32.mrf.mxu0
    %v1819 = vadd.f32 %v1748, %v1818
    %v1820 = vpop.f32.mrf.mxu0
    %v1821 = vpop.f32.mrf.mxu0
    %1822 = vdwg.mxu0
    %1823 = vmatprep.subr.bf16.mxu0 %v1061
    %1824 = vmatpush1.bf16.msra.mxu0 %v1060
    %1825 = vmatprep.subr.bf16.mxu0 %v1051
    %1826 = vmatpush1.bf16.msra.mxu0 %v1050
    %1827 = vmatprep.subr.bf16.mxu0 %v1041
    %1828 = vmatpush1.bf16.msra.mxu0 %v1040
    %1829 = vmatprep.subr.bf16.mxu0 %v1031
    %1830 = vmatpush1.bf16.msra.mxu0 %v1030
    %1831 = vmatprep.subr.bf16.mxu0 %v1021
    %1832 = vmatpush1.bf16.msra.mxu0 %v1020
    %1833 = vmatprep.subr.bf16.mxu0 %v1011
    %1834 = vmatpush1.bf16.msra.mxu0 %v1010
    %1835 = vmatprep.subr.bf16.mxu0 %v1001
    %1836 = vmatpush1.bf16.msra.mxu0 %v1000
    %1837 = vmatprep.subr.bf16.mxu0 %v991
    %1838 = vmatpush1.bf16.msra.mxu0 %v990
    %1839 = vmatprep.subr.bf16.mxu0 %v1141
    %1840 = vmatpush2.bf16.msra.mxu0 %v1140
    %1841 = vmatprep.subr.bf16.mxu0 %v1131
    %1842 = vmatpush2.bf16.msra.mxu0 %v1130
    %1843 = vmatprep.subr.bf16.mxu0 %v1121
    %1844 = vmatpush2.bf16.msra.mxu0 %v1120
    %1845 = vmatprep.subr.bf16.mxu0 %v1111
    %1846 = vmatpush2.bf16.msra.mxu0 %v1110
    %1847 = vmatprep.subr.bf16.mxu0 %v1101
    %1848 = vmatpush2.bf16.msra.mxu0 %v1100
    %1849 = vmatprep.subr.bf16.mxu0 %v1091
    %1850 = vmatpush2.bf16.msra.mxu0 %v1090
    %1851 = vmatprep.subr.bf16.mxu0 %v1081
    %1852 = vmatpush2.bf16.msra.mxu0 %v1080
    %1853 = vmatprep.subr.bf16.mxu0 %v1071
    %1854 = vmatpush2.bf16.msra.mxu0 %v1070
    %1855 = vmatprep.mubr.bf16.mxu0 %v360
    %1856 = vmatmul.mubr.bf16.gmra.mxu0 %v344
    %v1857 = vpop.f32.mrf.mxu0
    %v1858 = vadd.f32 %v313, %v1857
    %v1859 = vpop.f32.mrf.mxu0
    %v1860 = vadd.f32 %v317, %v1859
    %v1861 = vpop.f32.mrf.mxu0
    %v1862 = vadd.f32 %v313, %v1861
    %v1863 = vpop.f32.mrf.mxu0
    %v1864 = vadd.f32 %v317, %v1863
    %1865 = vmatprep.mubr.bf16.mxu0 %v361
    %1866 = vmatmul.mubr.bf16.gmra.mxu0 %v345
    %v1867 = vpop.f32.mrf.mxu0
    %v1868 = vadd.f32 %v313, %v1867
    %v1869 = vpop.f32.mrf.mxu0
    %v1870 = vadd.f32 %v317, %v1869
    %v1871 = vpop.f32.mrf.mxu0
    %v1872 = vadd.f32 %v313, %v1871
    %v1873 = vpop.f32.mrf.mxu0
    %v1874 = vadd.f32 %v317, %v1873
    %1875 = vmatprep.mubr.bf16.mxu0 %v362
    %1876 = vmatmul.mubr.bf16.gmra.mxu0 %v346
    %v1877 = vpop.f32.mrf.mxu0
    %v1878 = vadd.f32 %v313, %v1877
    %v1879 = vpop.f32.mrf.mxu0
    %v1880 = vadd.f32 %v317, %v1879
    %v1881 = vpop.f32.mrf.mxu0
    %v1882 = vadd.f32 %v313, %v1881
    %v1883 = vpop.f32.mrf.mxu0
    %v1884 = vadd.f32 %v317, %v1883
    %1885 = vmatprep.mubr.bf16.mxu0 %v363
    %1886 = vmatmul.mubr.bf16.gmra.mxu0 %v347
    %v1887 = vpop.f32.mrf.mxu0
    %v1888 = vadd.f32 %v313, %v1887
    %v1889 = vpop.f32.mrf.mxu0
    %v1890 = vadd.f32 %v317, %v1889
    %v1891 = vpop.f32.mrf.mxu0
    %v1892 = vpop.f32.mrf.mxu0
    %1893 = vdwg.mxu0
    %1894 = vmatprep.subr.bf16.mxu0 0
    %1895 = vmatpush1.bf16.msra.mxu0 0
    %1896 = vmatprep.subr.bf16.mxu0 0
    %1897 = vmatpush1.bf16.msra.mxu0 0
    %1898 = vmatprep.subr.bf16.mxu0 0
    %1899 = vmatpush1.bf16.msra.mxu0 0
    %1900 = vmatprep.subr.bf16.mxu0 0
    %1901 = vmatpush1.bf16.msra.mxu0 0
    %1902 = vmatprep.subr.bf16.mxu0 %v1181
    %1903 = vmatpush1.bf16.msra.mxu0 %v1180
    %1904 = vmatprep.subr.bf16.mxu0 %v1171
    %1905 = vmatpush1.bf16.msra.mxu0 %v1170
    %1906 = vmatprep.subr.bf16.mxu0 %v1161
    %1907 = vmatpush1.bf16.msra.mxu0 %v1160
    %1908 = vmatprep.subr.bf16.mxu0 %v1151
    %1909 = vmatpush1.bf16.msra.mxu0 %v1150
    %1910 = vmatprep.subr.bf16.mxu0 0
    %1911 = vmatpush2.bf16.msra.mxu0 0
    %1912 = vmatprep.subr.bf16.mxu0 0
    %1913 = vmatpush2.bf16.msra.mxu0 0
    %1914 = vmatprep.subr.bf16.mxu0 0
    %1915 = vmatpush2.bf16.msra.mxu0 0
    %1916 = vmatprep.subr.bf16.mxu0 0
    %1917 = vmatpush2.bf16.msra.mxu0 0
    %1918 = vmatprep.subr.bf16.mxu0 0
    %1919 = vmatpush2.bf16.msra.mxu0 0
    %1920 = vmatprep.subr.bf16.mxu0 0
    %1921 = vmatpush2.bf16.msra.mxu0 0
    %1922 = vmatprep.subr.bf16.mxu0 0
    %1923 = vmatpush2.bf16.msra.mxu0 0
    %1924 = vmatprep.subr.bf16.mxu0 0
    %1925 = vmatpush2.bf16.msra.mxu0 0
    %1926 = vmatprep.mubr.bf16.mxu0 0
    %1927 = vmatmul.mubr.bf16.gmra.mxu0 %v1386
    %v1928 = vpop.f32.mrf.mxu0
    %v1929 = vadd.f32 %v1858, %v1928
    %v1930 = vpop.f32.mrf.mxu0
    %v1931 = vadd.f32 %v1860, %v1930
    %v1932 = vpop.f32.mrf.mxu0
    %v1933 = vadd.f32 %v1862, %v1932
    %v1934 = vpop.f32.mrf.mxu0
    %v1935 = vadd.f32 %v1864, %v1934
    %1936 = vmatprep.mubr.bf16.mxu0 0
    %1937 = vmatmul.mubr.bf16.gmra.mxu0 %v1389
    %v1938 = vpop.f32.mrf.mxu0
    %v1939 = vadd.f32 %v1868, %v1938
    %v1940 = vpop.f32.mrf.mxu0
    %v1941 = vadd.f32 %v1870, %v1940
    %v1942 = vpop.f32.mrf.mxu0
    %v1943 = vadd.f32 %v1872, %v1942
    %v1944 = vpop.f32.mrf.mxu0
    %v1945 = vadd.f32 %v1874, %v1944
    %1946 = vmatprep.mubr.bf16.mxu0 0
    %1947 = vmatmul.mubr.bf16.gmra.mxu0 %v1392
    %v1948 = vpop.f32.mrf.mxu0
    %v1949 = vadd.f32 %v1878, %v1948
    %v1950 = vpop.f32.mrf.mxu0
    %v1951 = vadd.f32 %v1880, %v1950
    %v1952 = vpop.f32.mrf.mxu0
    %v1953 = vadd.f32 %v1882, %v1952
    %v1954 = vpop.f32.mrf.mxu0
    %v1955 = vadd.f32 %v1884, %v1954
    %1956 = vmatprep.mubr.bf16.mxu0 0
    %1957 = vmatmul.mubr.bf16.gmra.mxu0 %v1395
    %v1958 = vpop.f32.mrf.mxu0
    %v1959 = vadd.f32 %v1888, %v1958
    %v1960 = vpop.f32.mrf.mxu0
    %v1961 = vadd.f32 %v1890, %v1960
    %v1962 = vpop.f32.mrf.mxu0
    %v1963 = vpop.f32.mrf.mxu0
    %1964 = vdwg.mxu0
    %1965 = vmatprep.subr.bf16.mxu0 %v1063
    %1966 = vmatpush1.bf16.msra.mxu0 %v1062
    %1967 = vmatprep.subr.bf16.mxu0 %v1053
    %1968 = vmatpush1.bf16.msra.mxu0 %v1052
    %1969 = vmatprep.subr.bf16.mxu0 %v1043
    %1970 = vmatpush1.bf16.msra.mxu0 %v1042
    %1971 = vmatprep.subr.bf16.mxu0 %v1033
    %1972 = vmatpush1.bf16.msra.mxu0 %v1032
    %1973 = vmatprep.subr.bf16.mxu0 %v1023
    %1974 = vmatpush1.bf16.msra.mxu0 %v1022
    %1975 = vmatprep.subr.bf16.mxu0 %v1013
    %1976 = vmatpush1.bf16.msra.mxu0 %v1012
    %1977 = vmatprep.subr.bf16.mxu0 %v1003
    %1978 = vmatpush1.bf16.msra.mxu0 %v1002
    %1979 = vmatprep.subr.bf16.mxu0 %v993
    %1980 = vmatpush1.bf16.msra.mxu0 %v992
    %1981 = vmatprep.subr.bf16.mxu0 %v1143
    %1982 = vmatpush2.bf16.msra.mxu0 %v1142
    %1983 = vmatprep.subr.bf16.mxu0 %v1133
    %1984 = vmatpush2.bf16.msra.mxu0 %v1132
    %1985 = vmatprep.subr.bf16.mxu0 %v1123
    %1986 = vmatpush2.bf16.msra.mxu0 %v1122
    %1987 = vmatprep.subr.bf16.mxu0 %v1113
    %1988 = vmatpush2.bf16.msra.mxu0 %v1112
    %1989 = vmatprep.subr.bf16.mxu0 %v1103
    %1990 = vmatpush2.bf16.msra.mxu0 %v1102
    %1991 = vmatprep.subr.bf16.mxu0 %v1093
    %1992 = vmatpush2.bf16.msra.mxu0 %v1092
    %1993 = vmatprep.subr.bf16.mxu0 %v1083
    %1994 = vmatpush2.bf16.msra.mxu0 %v1082
    %1995 = vmatprep.subr.bf16.mxu0 %v1073
    %1996 = vmatpush2.bf16.msra.mxu0 %v1072
    %1997 = vmatprep.mubr.bf16.mxu0 %v360
    %1998 = vmatmul.mubr.bf16.gmra.mxu0 %v344
    %v1999 = vpop.f32.mrf.mxu0
    %v2000 = vadd.f32 %v321, %v1999
    %v2001 = vpop.f32.mrf.mxu0
    %v2002 = vadd.f32 %v325, %v2001
    %v2003 = vpop.f32.mrf.mxu0
    %v2004 = vadd.f32 %v321, %v2003
    %v2005 = vpop.f32.mrf.mxu0
    %v2006 = vadd.f32 %v325, %v2005
    %2007 = vmatprep.mubr.bf16.mxu0 %v361
    %2008 = vmatmul.mubr.bf16.gmra.mxu0 %v345
    %v2009 = vpop.f32.mrf.mxu0
    %v2010 = vadd.f32 %v321, %v2009
    %v2011 = vpop.f32.mrf.mxu0
    %v2012 = vadd.f32 %v325, %v2011
    %v2013 = vpop.f32.mrf.mxu0
    %v2014 = vadd.f32 %v321, %v2013
    %v2015 = vpop.f32.mrf.mxu0
    %v2016 = vadd.f32 %v325, %v2015
    %2017 = vmatprep.mubr.bf16.mxu0 %v362
    %2018 = vmatmul.mubr.bf16.gmra.mxu0 %v346
    %v2019 = vpop.f32.mrf.mxu0
    %v2020 = vadd.f32 %v321, %v2019
    %v2021 = vpop.f32.mrf.mxu0
    %v2022 = vadd.f32 %v325, %v2021
    %v2023 = vpop.f32.mrf.mxu0
    %v2024 = vadd.f32 %v321, %v2023
    %v2025 = vpop.f32.mrf.mxu0
    %v2026 = vadd.f32 %v325, %v2025
    %2027 = vmatprep.mubr.bf16.mxu0 %v363
    %2028 = vmatmul.mubr.bf16.gmra.mxu0 %v347
    %v2029 = vpop.f32.mrf.mxu0
    %v2030 = vadd.f32 %v321, %v2029
    %v2031 = vpop.f32.mrf.mxu0
    %v2032 = vadd.f32 %v325, %v2031
    %v2033 = vpop.f32.mrf.mxu0
    %v2034 = vpop.f32.mrf.mxu0
    %2035 = vdwg.mxu0
    %2036 = vmatprep.subr.bf16.mxu0 0
    %2037 = vmatpush1.bf16.msra.mxu0 0
    %2038 = vmatprep.subr.bf16.mxu0 0
    %2039 = vmatpush1.bf16.msra.mxu0 0
    %2040 = vmatprep.subr.bf16.mxu0 0
    %2041 = vmatpush1.bf16.msra.mxu0 0
    %2042 = vmatprep.subr.bf16.mxu0 0
    %2043 = vmatpush1.bf16.msra.mxu0 0
    %2044 = vmatprep.subr.bf16.mxu0 %v1183
    %2045 = vmatpush1.bf16.msra.mxu0 %v1182
    %2046 = vmatprep.subr.bf16.mxu0 %v1173
    %2047 = vmatpush1.bf16.msra.mxu0 %v1172
    %2048 = vmatprep.subr.bf16.mxu0 %v1163
    %2049 = vmatpush1.bf16.msra.mxu0 %v1162
    %2050 = vmatprep.subr.bf16.mxu0 %v1153
    %2051 = vmatpush1.bf16.msra.mxu0 %v1152
    %2052 = vmatprep.subr.bf16.mxu0 0
    %2053 = vmatpush2.bf16.msra.mxu0 0
    %2054 = vmatprep.subr.bf16.mxu0 0
    %2055 = vmatpush2.bf16.msra.mxu0 0
    %2056 = vmatprep.subr.bf16.mxu0 0
    %2057 = vmatpush2.bf16.msra.mxu0 0
    %2058 = vmatprep.subr.bf16.mxu0 0
    %2059 = vmatpush2.bf16.msra.mxu0 0
    %2060 = vmatprep.subr.bf16.mxu0 0
    %2061 = vmatpush2.bf16.msra.mxu0 0
    %2062 = vmatprep.subr.bf16.mxu0 0
    %2063 = vmatpush2.bf16.msra.mxu0 0
    %2064 = vmatprep.subr.bf16.mxu0 0
    %2065 = vmatpush2.bf16.msra.mxu0 0
    %2066 = vmatprep.subr.bf16.mxu0 0
    %2067 = vmatpush2.bf16.msra.mxu0 0
    %2068 = vmatprep.mubr.bf16.mxu0 0
    %2069 = vmatmul.mubr.bf16.gmra.mxu0 %v1386
    %v2070 = vpop.f32.mrf.mxu0
    %v2071 = vadd.f32 %v2000, %v2070
    %v2072 = vpop.f32.mrf.mxu0
    %v2073 = vadd.f32 %v2002, %v2072
    %v2074 = vpop.f32.mrf.mxu0
    %v2075 = vadd.f32 %v2004, %v2074
    %v2076 = vpop.f32.mrf.mxu0
    %v2077 = vadd.f32 %v2006, %v2076
    %2078 = vmatprep.mubr.bf16.mxu0 0
    %2079 = vmatmul.mubr.bf16.gmra.mxu0 %v1389
    %v2080 = vpop.f32.mrf.mxu0
    %v2081 = vadd.f32 %v2010, %v2080
    %v2082 = vpop.f32.mrf.mxu0
    %v2083 = vadd.f32 %v2012, %v2082
    %v2084 = vpop.f32.mrf.mxu0
    %v2085 = vadd.f32 %v2014, %v2084
    %v2086 = vpop.f32.mrf.mxu0
    %v2087 = vadd.f32 %v2016, %v2086
    %2088 = vmatprep.mubr.bf16.mxu0 0
    %2089 = vmatmul.mubr.bf16.gmra.mxu0 %v1392
    %v2090 = vpop.f32.mrf.mxu0
    %v2091 = vadd.f32 %v2020, %v2090
    %v2092 = vpop.f32.mrf.mxu0
    %v2093 = vadd.f32 %v2022, %v2092
    %v2094 = vpop.f32.mrf.mxu0
    %v2095 = vadd.f32 %v2024, %v2094
    %v2096 = vpop.f32.mrf.mxu0
    %v2097 = vadd.f32 %v2026, %v2096
    %2098 = vmatprep.mubr.bf16.mxu0 0
    %2099 = vmatmul.mubr.bf16.gmra.mxu0 %v1395
    %v2100 = vpop.f32.mrf.mxu0
    %v2101 = vadd.f32 %v2030, %v2100
    %v2102 = vpop.f32.mrf.mxu0
    %v2103 = vadd.f32 %v2032, %v2102
    %v2104 = vpop.f32.mrf.mxu0
    %v2105 = vpop.f32.mrf.mxu0
    %2106 = vdwg.mxu0
    %v2107 = vxor.u32 %v1503, 2147483648
    %v2108 = vxor.u32 %v1505, 2147483648
    %v2109 = vxor.u32 %v1645, 2147483648
    %v2110 = vxor.u32 %v1647, 2147483648
    %v2111 = vxor.u32 %v1787, 2147483648
    %v2112 = vxor.u32 %v1789, 2147483648
    %v2113 = vxor.u32 %v1929, 2147483648
    %v2114 = vxor.u32 %v1931, 2147483648
    %v2115 = vxor.u32 %v2071, 2147483648
    %v2116 = vxor.u32 %v2073, 2147483648
    %v2117 = vxor.u32 %v1507, 2147483648
    %v2118 = vxor.u32 %v1509, 2147483648
    %v2119 = vxor.u32 %v1649, 2147483648
    %v2120 = vxor.u32 %v1651, 2147483648
    %v2121 = vxor.u32 %v1791, 2147483648
    %v2122 = vxor.u32 %v1793, 2147483648
    %v2123 = vxor.u32 %v1933, 2147483648
    %v2124 = vxor.u32 %v1935, 2147483648
    %v2125 = vxor.u32 %v2075, 2147483648
    %v2126 = vxor.u32 %v2077, 2147483648
    %v2127 = vxor.u32 %v1513, 2147483648
    %v2128 = vxor.u32 %v1515, 2147483648
    %v2129 = vxor.u32 %v1655, 2147483648
    %v2130 = vxor.u32 %v1657, 2147483648
    %v2131 = vxor.u32 %v1797, 2147483648
    %v2132 = vxor.u32 %v1799, 2147483648
    %v2133 = vxor.u32 %v1939, 2147483648
    %v2134 = vxor.u32 %v1941, 2147483648
    %v2135 = vxor.u32 %v2081, 2147483648
    %v2136 = vxor.u32 %v2083, 2147483648
    %v2137 = vxor.u32 %v1517, 2147483648
    %v2138 = vxor.u32 %v1519, 2147483648
    %v2139 = vxor.u32 %v1659, 2147483648
    %v2140 = vxor.u32 %v1661, 2147483648
    %v2141 = vxor.u32 %v1801, 2147483648
    %v2142 = vxor.u32 %v1803, 2147483648
    %v2143 = vxor.u32 %v1943, 2147483648
    %v2144 = vxor.u32 %v1945, 2147483648
    %v2145 = vxor.u32 %v2085, 2147483648
    %v2146 = vxor.u32 %v2087, 2147483648
    %v2147 = vxor.u32 %v1523, 2147483648
    %v2148 = vxor.u32 %v1525, 2147483648
    %v2149 = vxor.u32 %v1665, 2147483648
    %v2150 = vxor.u32 %v1667, 2147483648
    %v2151 = vxor.u32 %v1807, 2147483648
    %v2152 = vxor.u32 %v1809, 2147483648
    %v2153 = vxor.u32 %v1949, 2147483648
    %v2154 = vxor.u32 %v1951, 2147483648
    %v2155 = vxor.u32 %v2091, 2147483648
    %v2156 = vxor.u32 %v2093, 2147483648
    %v2157 = vxor.u32 %v1527, 2147483648
    %v2158 = vxor.u32 %v1529, 2147483648
    %v2159 = vxor.u32 %v1669, 2147483648
    %v2160 = vxor.u32 %v1671, 2147483648
    %v2161 = vxor.u32 %v1811, 2147483648
    %v2162 = vxor.u32 %v1813, 2147483648
    %v2163 = vxor.u32 %v1953, 2147483648
    %v2164 = vxor.u32 %v1955, 2147483648
    %v2165 = vxor.u32 %v2095, 2147483648
    %v2166 = vxor.u32 %v2097, 2147483648
    %v2167 = vxor.u32 %v1533, 2147483648
    %v2168 = vxor.u32 %v1535, 2147483648
    %v2169 = vxor.u32 %v1675, 2147483648
    %v2170 = vxor.u32 %v1677, 2147483648
    %v2171 = vxor.u32 %v1817, 2147483648
    %v2172 = vxor.u32 %v1819, 2147483648
    %v2173 = vxor.u32 %v1959, 2147483648
    %v2174 = vxor.u32 %v1961, 2147483648
    %v2175 = vxor.u32 %v2101, 2147483648
    %v2176 = vxor.u32 %v2103, 2147483648
    %v2177 = vmul.f32 %v2107, 1.442695
    %v2178 = vpow.pop %v2177
    %v2179 = vmul.f32 %v2108, 1.442695
    %v2180 = vpow.pop %v2179
    %v2181 = vmul.f32 %v2109, 1.442695
    %v2182 = vpow.pop %v2181
    %v2183 = vmul.f32 %v2110, 1.442695
    %v2184 = vpow.pop %v2183
    %v2185 = vmul.f32 %v2111, 1.442695
    %v2186 = vpow.pop %v2185
    %v2187 = vmul.f32 %v2112, 1.442695
    %v2188 = vpow.pop %v2187
    %v2189 = vmul.f32 %v2113, 1.442695
    %v2190 = vpow.pop %v2189
    %v2191 = vmul.f32 %v2114, 1.442695
    %v2192 = vpow.pop %v2191
    %v2193 = vmul.f32 %v2115, 1.442695
    %v2194 = vpow.pop %v2193
    %v2195 = vmul.f32 %v2116, 1.442695
    %v2196 = vpow.pop %v2195
    %v2197 = vmul.f32 %v2117, 1.442695
    %v2198 = vpow.pop %v2197
    %v2199 = vmul.f32 %v2118, 1.442695
    %v2200 = vpow.pop %v2199
    %v2201 = vmul.f32 %v2119, 1.442695
    %v2202 = vpow.pop %v2201
    %v2203 = vmul.f32 %v2120, 1.442695
    %v2204 = vpow.pop %v2203
    %v2205 = vmul.f32 %v2121, 1.442695
    %v2206 = vpow.pop %v2205
    %v2207 = vmul.f32 %v2122, 1.442695
    %v2208 = vpow.pop %v2207
    %v2209 = vmul.f32 %v2123, 1.442695
    %v2210 = vpow.pop %v2209
    %v2211 = vmul.f32 %v2124, 1.442695
    %v2212 = vpow.pop %v2211
    %v2213 = vmul.f32 %v2125, 1.442695
    %v2214 = vpow.pop %v2213
    %v2215 = vmul.f32 %v2126, 1.442695
    %v2216 = vpow.pop %v2215
    %v2217 = vmul.f32 %v2127, 1.442695
    %v2218 = vpow.pop %v2217
    %v2219 = vmul.f32 %v2128, 1.442695
    %v2220 = vpow.pop %v2219
    %v2221 = vmul.f32 %v2129, 1.442695
    %v2222 = vpow.pop %v2221
    %v2223 = vmul.f32 %v2130, 1.442695
    %v2224 = vpow.pop %v2223
    %v2225 = vmul.f32 %v2131, 1.442695
    %v2226 = vpow.pop %v2225
    %v2227 = vmul.f32 %v2132, 1.442695
    %v2228 = vpow.pop %v2227
    %v2229 = vmul.f32 %v2133, 1.442695
    %v2230 = vpow.pop %v2229
    %v2231 = vmul.f32 %v2134, 1.442695
    %v2232 = vpow.pop %v2231
    %v2233 = vmul.f32 %v2135, 1.442695
    %v2234 = vpow.pop %v2233
    %v2235 = vmul.f32 %v2136, 1.442695
    %v2236 = vpow.pop %v2235
    %v2237 = vmul.f32 %v2137, 1.442695
    %v2238 = vpow.pop %v2237
    %v2239 = vmul.f32 %v2138, 1.442695
    %v2240 = vpow.pop %v2239
    %v2241 = vmul.f32 %v2139, 1.442695
    %v2242 = vpow.pop %v2241
    %v2243 = vmul.f32 %v2140, 1.442695
    %v2244 = vpow.pop %v2243
    %v2245 = vmul.f32 %v2141, 1.442695
    %v2246 = vpow.pop %v2245
    %v2247 = vmul.f32 %v2142, 1.442695
    %v2248 = vpow.pop %v2247
    %v2249 = vmul.f32 %v2143, 1.442695
    %v2250 = vpow.pop %v2249
    %v2251 = vmul.f32 %v2144, 1.442695
    %v2252 = vpow.pop %v2251
    %v2253 = vmul.f32 %v2145, 1.442695
    %v2254 = vpow.pop %v2253
    %v2255 = vmul.f32 %v2146, 1.442695
    %v2256 = vpow.pop %v2255
    %v2257 = vmul.f32 %v2147, 1.442695
    %v2258 = vpow.pop %v2257
    %v2259 = vmul.f32 %v2148, 1.442695
    %v2260 = vpow.pop %v2259
    %v2261 = vmul.f32 %v2149, 1.442695
    %v2262 = vpow.pop %v2261
    %v2263 = vmul.f32 %v2150, 1.442695
    %v2264 = vpow.pop %v2263
    %v2265 = vmul.f32 %v2151, 1.442695
    %v2266 = vpow.pop %v2265
    %v2267 = vmul.f32 %v2152, 1.442695
    %v2268 = vpow.pop %v2267
    %v2269 = vmul.f32 %v2153, 1.442695
    %v2270 = vpow.pop %v2269
    %v2271 = vmul.f32 %v2154, 1.442695
    %v2272 = vpow.pop %v2271
    %v2273 = vmul.f32 %v2155, 1.442695
    %v2274 = vpow.pop %v2273
    %v2275 = vmul.f32 %v2156, 1.442695
    %v2276 = vpow.pop %v2275
    %v2277 = vmul.f32 %v2157, 1.442695
    %v2278 = vpow.pop %v2277
    %v2279 = vmul.f32 %v2158, 1.442695
    %v2280 = vpow.pop %v2279
    %v2281 = vmul.f32 %v2159, 1.442695
    %v2282 = vpow.pop %v2281
    %v2283 = vmul.f32 %v2160, 1.442695
    %v2284 = vpow.pop %v2283
    %v2285 = vmul.f32 %v2161, 1.442695
    %v2286 = vpow.pop %v2285
    %v2287 = vmul.f32 %v2162, 1.442695
    %v2288 = vpow.pop %v2287
    %v2289 = vmul.f32 %v2163, 1.442695
    %v2290 = vpow.pop %v2289
    %v2291 = vmul.f32 %v2164, 1.442695
    %v2292 = vpow.pop %v2291
    %v2293 = vmul.f32 %v2165, 1.442695
    %v2294 = vpow.pop %v2293
    %v2295 = vmul.f32 %v2166, 1.442695
    %v2296 = vpow.pop %v2295
    %v2297 = vmul.f32 %v2167, 1.442695
    %v2298 = vpow.pop %v2297
    %v2299 = vmul.f32 %v2168, 1.442695
    %v2300 = vpow.pop %v2299
    %v2301 = vmul.f32 %v2169, 1.442695
    %v2302 = vpow.pop %v2301
    %v2303 = vmul.f32 %v2170, 1.442695
    %v2304 = vpow.pop %v2303
    %v2305 = vmul.f32 %v2171, 1.442695
    %v2306 = vpow.pop %v2305
    %v2307 = vmul.f32 %v2172, 1.442695
    %v2308 = vpow.pop %v2307
    %v2309 = vmul.f32 %v2173, 1.442695
    %v2310 = vpow.pop %v2309
    %v2311 = vmul.f32 %v2174, 1.442695
    %v2312 = vpow.pop %v2311
    %v2313 = vmul.f32 %v2175, 1.442695
    %v2314 = vpow.pop %v2313
    %v2315 = vmul.f32 %v2176, 1.442695
    %v2316 = vpow.pop %v2315
    %v2317 = vadd.f32 %v2178, 1.0
    %v2318 = vadd.f32 %v2180, 1.0
    %v2319 = vadd.f32 %v2182, 1.0
    %v2320 = vadd.f32 %v2184, 1.0
    %v2321 = vadd.f32 %v2186, 1.0
    %v2322 = vadd.f32 %v2188, 1.0
    %v2323 = vadd.f32 %v2190, 1.0
    %v2324 = vadd.f32 %v2192, 1.0
    %v2325 = vadd.f32 %v2194, 1.0
    %v2326 = vadd.f32 %v2196, 1.0
    %v2327 = vadd.f32 %v2198, 1.0
    %v2328 = vadd.f32 %v2200, 1.0
    %v2329 = vadd.f32 %v2202, 1.0
    %v2330 = vadd.f32 %v2204, 1.0
    %v2331 = vadd.f32 %v2206, 1.0
    %v2332 = vadd.f32 %v2208, 1.0
    %v2333 = vadd.f32 %v2210, 1.0
    %v2334 = vadd.f32 %v2212, 1.0
    %v2335 = vadd.f32 %v2214, 1.0
    %v2336 = vadd.f32 %v2216, 1.0
    %v2337 = vadd.f32 %v2218, 1.0
    %v2338 = vadd.f32 %v2220, 1.0
    %v2339 = vadd.f32 %v2222, 1.0
    %v2340 = vadd.f32 %v2224, 1.0
    %v2341 = vadd.f32 %v2226, 1.0
    %v2342 = vadd.f32 %v2228, 1.0
    %v2343 = vadd.f32 %v2230, 1.0
    %v2344 = vadd.f32 %v2232, 1.0
    %v2345 = vadd.f32 %v2234, 1.0
    %v2346 = vadd.f32 %v2236, 1.0
    %v2347 = vadd.f32 %v2238, 1.0
    %v2348 = vadd.f32 %v2240, 1.0
    %v2349 = vadd.f32 %v2242, 1.0
    %v2350 = vadd.f32 %v2244, 1.0
    %v2351 = vadd.f32 %v2246, 1.0
    %v2352 = vadd.f32 %v2248, 1.0
    %v2353 = vadd.f32 %v2250, 1.0
    %v2354 = vadd.f32 %v2252, 1.0
    %v2355 = vadd.f32 %v2254, 1.0
    %v2356 = vadd.f32 %v2256, 1.0
    %v2357 = vadd.f32 %v2258, 1.0
    %v2358 = vadd.f32 %v2260, 1.0
    %v2359 = vadd.f32 %v2262, 1.0
    %v2360 = vadd.f32 %v2264, 1.0
    %v2361 = vadd.f32 %v2266, 1.0
    %v2362 = vadd.f32 %v2268, 1.0
    %v2363 = vadd.f32 %v2270, 1.0
    %v2364 = vadd.f32 %v2272, 1.0
    %v2365 = vadd.f32 %v2274, 1.0
    %v2366 = vadd.f32 %v2276, 1.0
    %v2367 = vadd.f32 %v2278, 1.0
    %v2368 = vadd.f32 %v2280, 1.0
    %v2369 = vadd.f32 %v2282, 1.0
    %v2370 = vadd.f32 %v2284, 1.0
    %v2371 = vadd.f32 %v2286, 1.0
    %v2372 = vadd.f32 %v2288, 1.0
    %v2373 = vadd.f32 %v2290, 1.0
    %v2374 = vadd.f32 %v2292, 1.0
    %v2375 = vadd.f32 %v2294, 1.0
    %v2376 = vadd.f32 %v2296, 1.0
    %v2377 = vadd.f32 %v2298, 1.0
    %v2378 = vadd.f32 %v2300, 1.0
    %v2379 = vadd.f32 %v2302, 1.0
    %v2380 = vadd.f32 %v2304, 1.0
    %v2381 = vadd.f32 %v2306, 1.0
    %v2382 = vadd.f32 %v2308, 1.0
    %v2383 = vadd.f32 %v2310, 1.0
    %v2384 = vadd.f32 %v2312, 1.0
    %v2385 = vadd.f32 %v2314, 1.0
    %v2386 = vadd.f32 %v2316, 1.0
    %v2387 = vrcp.pop %v2317
    %v2388 = vmul.f32 1.0, %v2387
    %v2389 = vrcp.pop %v2318
    %v2390 = vmul.f32 1.0, %v2389
    %v2391 = vrcp.pop %v2319
    %v2392 = vmul.f32 1.0, %v2391
    %v2393 = vrcp.pop %v2320
    %v2394 = vmul.f32 1.0, %v2393
    %v2395 = vrcp.pop %v2321
    %v2396 = vmul.f32 1.0, %v2395
    %v2397 = vrcp.pop %v2322
    %v2398 = vmul.f32 1.0, %v2397
    %v2399 = vrcp.pop %v2323
    %v2400 = vmul.f32 1.0, %v2399
    %v2401 = vrcp.pop %v2324
    %v2402 = vmul.f32 1.0, %v2401
    %v2403 = vrcp.pop %v2325
    %v2404 = vmul.f32 1.0, %v2403
    %v2405 = vrcp.pop %v2326
    %v2406 = vmul.f32 1.0, %v2405
    %v2407 = vrcp.pop %v2327
    %v2408 = vmul.f32 1.0, %v2407
    %v2409 = vrcp.pop %v2328
    %v2410 = vmul.f32 1.0, %v2409
    %v2411 = vrcp.pop %v2329
    %v2412 = vmul.f32 1.0, %v2411
    %v2413 = vrcp.pop %v2330
    %v2414 = vmul.f32 1.0, %v2413
    %v2415 = vrcp.pop %v2331
    %v2416 = vmul.f32 1.0, %v2415
    %v2417 = vrcp.pop %v2332
    %v2418 = vmul.f32 1.0, %v2417
    %v2419 = vrcp.pop %v2333
    %v2420 = vmul.f32 1.0, %v2419
    %v2421 = vrcp.pop %v2334
    %v2422 = vmul.f32 1.0, %v2421
    %v2423 = vrcp.pop %v2335
    %v2424 = vmul.f32 1.0, %v2423
    %v2425 = vrcp.pop %v2336
    %v2426 = vmul.f32 1.0, %v2425
    %v2427 = vrcp.pop %v2337
    %v2428 = vmul.f32 1.0, %v2427
    %v2429 = vrcp.pop %v2338
    %v2430 = vmul.f32 1.0, %v2429
    %v2431 = vrcp.pop %v2339
    %v2432 = vmul.f32 1.0, %v2431
    %v2433 = vrcp.pop %v2340
    %v2434 = vmul.f32 1.0, %v2433
    %v2435 = vrcp.pop %v2341
    %v2436 = vmul.f32 1.0, %v2435
    %v2437 = vrcp.pop %v2342
    %v2438 = vmul.f32 1.0, %v2437
    %v2439 = vrcp.pop %v2343
    %v2440 = vmul.f32 1.0, %v2439
    %v2441 = vrcp.pop %v2344
    %v2442 = vmul.f32 1.0, %v2441
    %v2443 = vrcp.pop %v2345
    %v2444 = vmul.f32 1.0, %v2443
    %v2445 = vrcp.pop %v2346
    %v2446 = vmul.f32 1.0, %v2445
    %v2447 = vrcp.pop %v2347
    %v2448 = vmul.f32 1.0, %v2447
    %v2449 = vrcp.pop %v2348
    %v2450 = vmul.f32 1.0, %v2449
    %v2451 = vrcp.pop %v2349
    %v2452 = vmul.f32 1.0, %v2451
    %v2453 = vrcp.pop %v2350
    %v2454 = vmul.f32 1.0, %v2453
    %v2455 = vrcp.pop %v2351
    %v2456 = vmul.f32 1.0, %v2455
    %v2457 = vrcp.pop %v2352
    %v2458 = vmul.f32 1.0, %v2457
    %v2459 = vrcp.pop %v2353
    %v2460 = vmul.f32 1.0, %v2459
    %v2461 = vrcp.pop %v2354
    %v2462 = vmul.f32 1.0, %v2461
    %v2463 = vrcp.pop %v2355
    %v2464 = vmul.f32 1.0, %v2463
    %v2465 = vrcp.pop %v2356
    %v2466 = vmul.f32 1.0, %v2465
    %v2467 = vrcp.pop %v2357
    %v2468 = vmul.f32 1.0, %v2467
    %v2469 = vrcp.pop %v2358
    %v2470 = vmul.f32 1.0, %v2469
    %v2471 = vrcp.pop %v2359
    %v2472 = vmul.f32 1.0, %v2471
    %v2473 = vrcp.pop %v2360
    %v2474 = vmul.f32 1.0, %v2473
    %v2475 = vrcp.pop %v2361
    %v2476 = vmul.f32 1.0, %v2475
    %v2477 = vrcp.pop %v2362
    %v2478 = vmul.f32 1.0, %v2477
    %v2479 = vrcp.pop %v2363
    %v2480 = vmul.f32 1.0, %v2479
    %v2481 = vrcp.pop %v2364
    %v2482 = vmul.f32 1.0, %v2481
    %v2483 = vrcp.pop %v2365
    %v2484 = vmul.f32 1.0, %v2483
    %v2485 = vrcp.pop %v2366
    %v2486 = vmul.f32 1.0, %v2485
    %v2487 = vrcp.pop %v2367
    %v2488 = vmul.f32 1.0, %v2487
    %v2489 = vrcp.pop %v2368
    %v2490 = vmul.f32 1.0, %v2489
    %v2491 = vrcp.pop %v2369
    %v2492 = vmul.f32 1.0, %v2491
    %v2493 = vrcp.pop %v2370
    %v2494 = vmul.f32 1.0, %v2493
    %v2495 = vrcp.pop %v2371
    %v2496 = vmul.f32 1.0, %v2495
    %v2497 = vrcp.pop %v2372
    %v2498 = vmul.f32 1.0, %v2497
    %v2499 = vrcp.pop %v2373
    %v2500 = vmul.f32 1.0, %v2499
    %v2501 = vrcp.pop %v2374
    %v2502 = vmul.f32 1.0, %v2501
    %v2503 = vrcp.pop %v2375
    %v2504 = vmul.f32 1.0, %v2503
    %v2505 = vrcp.pop %v2376
    %v2506 = vmul.f32 1.0, %v2505
    %v2507 = vrcp.pop %v2377
    %v2508 = vmul.f32 1.0, %v2507
    %v2509 = vrcp.pop %v2378
    %v2510 = vmul.f32 1.0, %v2509
    %v2511 = vrcp.pop %v2379
    %v2512 = vmul.f32 1.0, %v2511
    %v2513 = vrcp.pop %v2380
    %v2514 = vmul.f32 1.0, %v2513
    %v2515 = vrcp.pop %v2381
    %v2516 = vmul.f32 1.0, %v2515
    %v2517 = vrcp.pop %v2382
    %v2518 = vmul.f32 1.0, %v2517
    %v2519 = vrcp.pop %v2383
    %v2520 = vmul.f32 1.0, %v2519
    %v2521 = vrcp.pop %v2384
    %v2522 = vmul.f32 1.0, %v2521
    %v2523 = vrcp.pop %v2385
    %v2524 = vmul.f32 1.0, %v2523
    %v2525 = vrcp.pop %v2386
    %v2526 = vmul.f32 1.0, %v2525
    %v2527 = vmul.f32 %v1503, %v2388
    %v2528 = vmul.f32 %v1505, %v2390
    %v2529 = vmul.f32 %v1645, %v2392
    %v2530 = vmul.f32 %v1647, %v2394
    %v2531 = vmul.f32 %v1787, %v2396
    %v2532 = vmul.f32 %v1789, %v2398
    %v2533 = vmul.f32 %v1929, %v2400
    %v2534 = vmul.f32 %v1931, %v2402
    %v2535 = vmul.f32 %v2071, %v2404
    %v2536 = vmul.f32 %v2073, %v2406
    %v2537 = vmul.f32 %v1507, %v2408
    %v2538 = vmul.f32 %v1509, %v2410
    %v2539 = vmul.f32 %v1649, %v2412
    %v2540 = vmul.f32 %v1651, %v2414
    %v2541 = vmul.f32 %v1791, %v2416
    %v2542 = vmul.f32 %v1793, %v2418
    %v2543 = vmul.f32 %v1933, %v2420
    %v2544 = vmul.f32 %v1935, %v2422
    %v2545 = vmul.f32 %v2075, %v2424
    %v2546 = vmul.f32 %v2077, %v2426
    %v2547 = vmul.f32 %v1513, %v2428
    %v2548 = vmul.f32 %v1515, %v2430
    %v2549 = vmul.f32 %v1655, %v2432
    %v2550 = vmul.f32 %v1657, %v2434
    %v2551 = vmul.f32 %v1797, %v2436
    %v2552 = vmul.f32 %v1799, %v2438
    %v2553 = vmul.f32 %v1939, %v2440
    %v2554 = vmul.f32 %v1941, %v2442
    %v2555 = vmul.f32 %v2081, %v2444
    %v2556 = vmul.f32 %v2083, %v2446
    %v2557 = vmul.f32 %v1517, %v2448
    %v2558 = vmul.f32 %v1519, %v2450
    %v2559 = vmul.f32 %v1659, %v2452
    %v2560 = vmul.f32 %v1661, %v2454
    %v2561 = vmul.f32 %v1801, %v2456
    %v2562 = vmul.f32 %v1803, %v2458
    %v2563 = vmul.f32 %v1943, %v2460
    %v2564 = vmul.f32 %v1945, %v2462
    %v2565 = vmul.f32 %v2085, %v2464
    %v2566 = vmul.f32 %v2087, %v2466
    %v2567 = vmul.f32 %v1523, %v2468
    %v2568 = vmul.f32 %v1525, %v2470
    %v2569 = vmul.f32 %v1665, %v2472
    %v2570 = vmul.f32 %v1667, %v2474
    %v2571 = vmul.f32 %v1807, %v2476
    %v2572 = vmul.f32 %v1809, %v2478
    %v2573 = vmul.f32 %v1949, %v2480
    %v2574 = vmul.f32 %v1951, %v2482
    %v2575 = vmul.f32 %v2091, %v2484
    %v2576 = vmul.f32 %v2093, %v2486
    %v2577 = vmul.f32 %v1527, %v2488
    %v2578 = vmul.f32 %v1529, %v2490
    %v2579 = vmul.f32 %v1669, %v2492
    %v2580 = vmul.f32 %v1671, %v2494
    %v2581 = vmul.f32 %v1811, %v2496
    %v2582 = vmul.f32 %v1813, %v2498
    %v2583 = vmul.f32 %v1953, %v2500
    %v2584 = vmul.f32 %v1955, %v2502
    %v2585 = vmul.f32 %v2095, %v2504
    %v2586 = vmul.f32 %v2097, %v2506
    %v2587 = vmul.f32 %v1533, %v2508
    %v2588 = vmul.f32 %v1535, %v2510
    %v2589 = vmul.f32 %v1675, %v2512
    %v2590 = vmul.f32 %v1677, %v2514
    %v2591 = vmul.f32 %v1817, %v2516
    %v2592 = vmul.f32 %v1819, %v2518
    %v2593 = vmul.f32 %v1959, %v2520
    %v2594 = vmul.f32 %v1961, %v2522
    %v2595 = vmul.f32 %v2101, %v2524
    %v2596 = vmul.f32 %v2103, %v2526
    %v2597 = vadd.f32 %v2527, %v2537
    %v2598 = vadd.f32 %v2597, %v2547
    %v2599 = vadd.f32 %v2598, %v2557
    %v2600 = vadd.f32 %v2599, %v2567
    %v2601 = vadd.f32 %v2600, %v2577
    %vm2602 = vcmask 1040384
    %v2603 = vsel %vm2602, %v2587, 0.0
    %v2604 = vadd.f32 %v2601, %v2603
    %v2605 = vrot.slane %v2604, 4
    %v2606 = vadd.f32 %v2604, %v2605
    %v2607 = vrot.slane %v2606, 2
    %v2608 = vadd.f32 %v2606, %v2607
    %v2609 = vrot.slane %v2608, 1
    %v2610 = vadd.f32 %v2608, %v2609
    %v2611 = vadd.f32 %v2528, %v2538
    %v2612 = vadd.f32 %v2611, %v2548
    %v2613 = vadd.f32 %v2612, %v2558
    %v2614 = vadd.f32 %v2613, %v2568
    %v2615 = vadd.f32 %v2614, %v2578
    %v2616 = vsel %vm2602, %v2588, 0.0
    %v2617 = vadd.f32 %v2615, %v2616
    %v2618 = vrot.slane %v2617, 4
    %v2619 = vadd.f32 %v2617, %v2618
    %v2620 = vrot.slane %v2619, 2
    %v2621 = vadd.f32 %v2619, %v2620
    %v2622 = vrot.slane %v2621, 1
    %v2623 = vadd.f32 %v2621, %v2622
    %v2624 = vadd.f32 %v2529, %v2539
    %v2625 = vadd.f32 %v2624, %v2549
    %v2626 = vadd.f32 %v2625, %v2559
    %v2627 = vadd.f32 %v2626, %v2569
    %v2628 = vadd.f32 %v2627, %v2579
    %v2629 = vsel %vm2602, %v2589, 0.0
    %v2630 = vadd.f32 %v2628, %v2629
    %v2631 = vrot.slane %v2630, 4
    %v2632 = vadd.f32 %v2630, %v2631
    %v2633 = vrot.slane %v2632, 2
    %v2634 = vadd.f32 %v2632, %v2633
    %v2635 = vrot.slane %v2634, 1
    %v2636 = vadd.f32 %v2634, %v2635
    %v2637 = vadd.f32 %v2530, %v2540
    %v2638 = vadd.f32 %v2637, %v2550
    %v2639 = vadd.f32 %v2638, %v2560
    %v2640 = vadd.f32 %v2639, %v2570
    %v2641 = vadd.f32 %v2640, %v2580
    %v2642 = vsel %vm2602, %v2590, 0.0
    %v2643 = vadd.f32 %v2641, %v2642
    %v2644 = vrot.slane %v2643, 4
    %v2645 = vadd.f32 %v2643, %v2644
    %v2646 = vrot.slane %v2645, 2
    %v2647 = vadd.f32 %v2645, %v2646
    %v2648 = vrot.slane %v2647, 1
    %v2649 = vadd.f32 %v2647, %v2648
    %v2650 = vadd.f32 %v2531, %v2541
    %v2651 = vadd.f32 %v2650, %v2551
    %v2652 = vadd.f32 %v2651, %v2561
    %v2653 = vadd.f32 %v2652, %v2571
    %v2654 = vadd.f32 %v2653, %v2581
    %v2655 = vsel %vm2602, %v2591, 0.0
    %v2656 = vadd.f32 %v2654, %v2655
    %v2657 = vrot.slane %v2656, 4
    %v2658 = vadd.f32 %v2656, %v2657
    %v2659 = vrot.slane %v2658, 2
    %v2660 = vadd.f32 %v2658, %v2659
    %v2661 = vrot.slane %v2660, 1
    %v2662 = vadd.f32 %v2660, %v2661
    %v2663 = vadd.f32 %v2532, %v2542
    %v2664 = vadd.f32 %v2663, %v2552
    %v2665 = vadd.f32 %v2664, %v2562
    %v2666 = vadd.f32 %v2665, %v2572
    %v2667 = vadd.f32 %v2666, %v2582
    %v2668 = vsel %vm2602, %v2592, 0.0
    %v2669 = vadd.f32 %v2667, %v2668
    %v2670 = vrot.slane %v2669, 4
    %v2671 = vadd.f32 %v2669, %v2670
    %v2672 = vrot.slane %v2671, 2
    %v2673 = vadd.f32 %v2671, %v2672
    %v2674 = vrot.slane %v2673, 1
    %v2675 = vadd.f32 %v2673, %v2674
    %v2676 = vadd.f32 %v2533, %v2543
    %v2677 = vadd.f32 %v2676, %v2553
    %v2678 = vadd.f32 %v2677, %v2563
    %v2679 = vadd.f32 %v2678, %v2573
    %v2680 = vadd.f32 %v2679, %v2583
    %v2681 = vsel %vm2602, %v2593, 0.0
    %v2682 = vadd.f32 %v2680, %v2681
    %v2683 = vrot.slane %v2682, 4
    %v2684 = vadd.f32 %v2682, %v2683
    %v2685 = vrot.slane %v2684, 2
    %v2686 = vadd.f32 %v2684, %v2685
    %v2687 = vrot.slane %v2686, 1
    %v2688 = vadd.f32 %v2686, %v2687
    %v2689 = vadd.f32 %v2534, %v2544
    %v2690 = vadd.f32 %v2689, %v2554
    %v2691 = vadd.f32 %v2690, %v2564
    %v2692 = vadd.f32 %v2691, %v2574
    %v2693 = vadd.f32 %v2692, %v2584
    %v2694 = vsel %vm2602, %v2594, 0.0
    %v2695 = vadd.f32 %v2693, %v2694
    %v2696 = vrot.slane %v2695, 4
    %v2697 = vadd.f32 %v2695, %v2696
    %v2698 = vrot.slane %v2697, 2
    %v2699 = vadd.f32 %v2697, %v2698
    %v2700 = vrot.slane %v2699, 1
    %v2701 = vadd.f32 %v2699, %v2700
    %v2702 = vadd.f32 %v2535, %v2545
    %v2703 = vadd.f32 %v2702, %v2555
    %v2704 = vadd.f32 %v2703, %v2565
    %v2705 = vadd.f32 %v2704, %v2575
    %v2706 = vadd.f32 %v2705, %v2585
    %v2707 = vsel %vm2602, %v2595, 0.0
    %v2708 = vadd.f32 %v2706, %v2707
    %v2709 = vrot.slane %v2708, 4
    %v2710 = vadd.f32 %v2708, %v2709
    %v2711 = vrot.slane %v2710, 2
    %v2712 = vadd.f32 %v2710, %v2711
    %v2713 = vrot.slane %v2712, 1
    %v2714 = vadd.f32 %v2712, %v2713
    %v2715 = vadd.f32 %v2536, %v2546
    %v2716 = vadd.f32 %v2715, %v2556
    %v2717 = vadd.f32 %v2716, %v2566
    %v2718 = vadd.f32 %v2717, %v2576
    %v2719 = vadd.f32 %v2718, %v2586
    %v2720 = vsel %vm2602, %v2596, 0.0
    %v2721 = vadd.f32 %v2719, %v2720
    %v2722 = vrot.slane %v2721, 4
    %v2723 = vadd.f32 %v2721, %v2722
    %v2724 = vrot.slane %v2723, 2
    %v2725 = vadd.f32 %v2723, %v2724
    %v2726 = vrot.slane %v2725, 1
    %v2727 = vadd.f32 %v2725, %v2726
    %v2728 = vrcp.pop 49.0
    %v2729 = vmul.f32 %v2610, %v2728
    %v2730 = vmul.f32 %v2623, %v2728
    %v2731 = vmul.f32 %v2636, %v2728
    %v2732 = vmul.f32 %v2649, %v2728
    %v2733 = vmul.f32 %v2662, %v2728
    %v2734 = vmul.f32 %v2675, %v2728
    %v2735 = vmul.f32 %v2688, %v2728
    %v2736 = vmul.f32 %v2701, %v2728
    %v2737 = vmul.f32 %v2714, %v2728
    %v2738 = vmul.f32 %v2727, %v2728
    %s2739 = scalar_lea.vmem %s0, 320
    %v2740 = vld [vmem:[%s2739] sm:$0xff]
    %v2741 = vld [vmem:[%s2739 + $0x8] sm:$0xff]
    %v2742 = vld [vmem:[%s2739 + $0x10] sm:$0xff]
    %v2743 = vld [vmem:[%s2739 + $0x18] sm:$0xff]
    %v2744 = vld [vmem:[%s2739 + $0x20] sm:$0xff]
    %v2745 = vld [vmem:[%s2739 + $0x28] sm:$0xff]
    %v2746 = vld [vmem:[%s2739 + $0x30] sm:$0xff]
    %v2747 = vld [vmem:[%s2739 + $0x38] sm:$0xff]
    %v2748 = vld [vmem:[%s2739 + $0x40] sm:$0xff]
    %v2749 = vld [vmem:[%s2739 + $0x48] sm:$0xff]
    %v2750 = vld [vmem:[%s2739 + $0x50] sm:$0xff]
    %v2751 = vld [vmem:[%s2739 + $0x58] sm:$0xff]
    %v2752 = vld [vmem:[%s2739 + $0x60] sm:$0xff]
    %v2753 = vld [vmem:[%s2739 + $0x68] sm:$0xff]
    %v2754 = vld [vmem:[%s2739 + $0x70] sm:$0xff]
    %v2755 = vld [vmem:[%s2739 + $0x78] sm:$0xff]
    %v2756 = vld [vmem:[%s2739 + $0x80] sm:$0xff]
    %v2757 = vld [vmem:[%s2739 + $0x88] sm:$0xff]
    %v2758 = vld [vmem:[%s2739 + $0x90] sm:$0xff]
    %v2759 = vld [vmem:[%s2739 + $0x98] sm:$0xff]
    %v2760 = vld [vmem:[%s2739 + $0xa0] sm:$0xff]
    %v2761 = vld [vmem:[%s2739 + $0xa8] sm:$0xff]
    %v2762 = vld [vmem:[%s2739 + $0xb0] sm:$0xff]
    %v2763 = vld [vmem:[%s2739 + $0xb8] sm:$0xff]
    %v2764 = vld [vmem:[%s2739 + $0xc0] sm:$0xff]
    %v2765 = vld [vmem:[%s2739 + $0xc8] sm:$0xff]
    %v2766 = vld [vmem:[%s2739 + $0xd0] sm:$0xff]
    %v2767 = vld [vmem:[%s2739 + $0xd8] sm:$0xff]
    %v2768 = vld [vmem:[%s2739 + $0xe0] sm:$0xff]
    %v2769 = vld [vmem:[%s2739 + $0xe8] sm:$0xff]
    %v2770 = vld [vmem:[%s2739 + $0xf0] sm:$0xff]
    %v2771 = vld [vmem:[%s2739 + $0xf8] sm:$0xff]
    %v2772 = vld [vmem:[%s2739 + $0x100] sm:$0xff]
    %v2773 = vld [vmem:[%s2739 + $0x108] sm:$0xff]
    %v2774 = vld [vmem:[%s2739 + $0x110] sm:$0xff]
    %v2775 = vld [vmem:[%s2739 + $0x118] sm:$0xff]
    %v2776 = vld [vmem:[%s2739 + $0x120] sm:$0xff]
    %v2777 = vld [vmem:[%s2739 + $0x128] sm:$0xff]
    %v2778 = vld [vmem:[%s2739 + $0x130] sm:$0xff]
    %v2779 = vld [vmem:[%s2739 + $0x138] sm:$0xff]
    %v2780 = vpack.c.bf16 %v2741, %v2740
    %v2781 = vpack.c.bf16 %v2743, %v2742
    %v2782 = vpack.c.bf16 %v2745, %v2744
    %v2783 = vpack.c.bf16 %v2747, %v2746
    %v2784 = vpack.c.bf16 %v2749, %v2748
    %v2785 = vpack.c.bf16 %v2751, %v2750
    %v2786 = vpack.c.bf16 %v2753, %v2752
    %v2787 = vpack.c.bf16 %v2755, %v2754
    %v2788 = vpack.c.bf16 %v2757, %v2756
    %v2789 = vpack.c.bf16 %v2759, %v2758
    %v2790 = vpack.c.bf16 %v2761, %v2760
    %v2791 = vpack.c.bf16 %v2763, %v2762
    %v2792 = vpack.c.bf16 %v2765, %v2764
    %v2793 = vpack.c.bf16 %v2767, %v2766
    %v2794 = vpack.c.bf16 %v2769, %v2768
    %v2795 = vpack.c.bf16 %v2771, %v2770
    %v2796 = vpack.c.bf16 %v2773, %v2772
    %v2797 = vpack.c.bf16 %v2775, %v2774
    %v2798 = vpack.c.bf16 %v2777, %v2776
    %v2799 = vpack.c.bf16 %v2779, %v2778
    %2800 = vxpose.xlu0.c.b16.start [1/8] %v2780, 128
    %2801 = vxpose.xlu0.c.b16.cont [2/8] %v2781, 128
    %2802 = vxpose.xlu0.c.b16.cont [3/8] %v2782, 128
    %2803 = vxpose.xlu0.c.b16.cont [4/8] %v2783, 128
    %2804 = vxpose.xlu0.c.b16.cont [5/8] %v2784, 128
    %2805 = vxpose.xlu0.c.b16.cont [6/8] %v2785, 128
    %2806 = vxpose.xlu0.c.b16.cont [7/8] %v2786, 128
    %2807 = vxpose.xlu0.c.b16.end [8/8] %v2787, 128
    %v2808 = vpop.trf.xlu0
    %v2809 = vpop.trf.xlu0
    %v2810 = vpop.trf.xlu0
    %v2811 = vpop.trf.xlu0
    %v2812 = vpop.trf.xlu0
    %v2813 = vpop.trf.xlu0
    %v2814 = vpop.trf.xlu0
    %v2815 = vpop.trf.xlu0
    %2816 = vxpose.xlu0.c.b16.start [1/8] %v2788, 128
    %2817 = vxpose.xlu0.c.b16.cont [2/8] %v2789, 128
    %2818 = vxpose.xlu0.c.b16.cont [3/8] %v2790, 128
    %2819 = vxpose.xlu0.c.b16.cont [4/8] %v2791, 128
    %2820 = vxpose.xlu0.c.b16.cont [5/8] %v2792, 128
    %2821 = vxpose.xlu0.c.b16.cont [6/8] %v2793, 128
    %2822 = vxpose.xlu0.c.b16.cont [7/8] %v2794, 128
    %2823 = vxpose.xlu0.c.b16.end [8/8] %v2795, 128
    %v2824 = vpop.trf.xlu0
    %v2825 = vpop.trf.xlu0
    %v2826 = vpop.trf.xlu0
    %v2827 = vpop.trf.xlu0
    %v2828 = vpop.trf.xlu0
    %v2829 = vpop.trf.xlu0
    %v2830 = vpop.trf.xlu0
    %v2831 = vpop.trf.xlu0
    %2832 = vxpose.xlu0.c.b16.start [1/8] %v2796, 128
    %2833 = vxpose.xlu0.c.b16.cont [2/8] %v2797, 128
    %2834 = vxpose.xlu0.c.b16.cont [3/8] %v2798, 128
    %2835 = vxpose.xlu0.c.b16.cont [4/8] %v2799, 128
    %2836 = vxpose.xlu0.c.b16.cont [5/8] 0, 128
    %2837 = vxpose.xlu0.c.b16.cont [6/8] 0, 128
    %2838 = vxpose.xlu0.c.b16.cont [7/8] 0, 128
    %2839 = vxpose.xlu0.c.b16.end [8/8] 0, 128
    %v2840 = vpop.trf.xlu0
    %v2841 = vpop.trf.xlu0
    %v2842 = vpop.trf.xlu0
    %v2843 = vpop.trf.xlu0
    %v2844 = vpop.trf.xlu0
    %v2845 = vpop.trf.xlu0
    %v2846 = vpop.trf.xlu0
    %v2847 = vpop.trf.xlu0
    %v2849 = vsel %vm1384, %v2840, 0
    %v2852 = vsel %vm1384, %v2841, 0
    %v2855 = vsel %vm1384, %v2842, 0
    %v2858 = vsel %vm1384, %v2843, 0
    %2860 = vmatprep.subr.bf16.mxu0 %v1055
    %2861 = vmatpush1.bf16.msra.mxu0 %v1054
    %2862 = vmatprep.subr.bf16.mxu0 %v1045
    %2863 = vmatpush1.bf16.msra.mxu0 %v1044
    %2864 = vmatprep.subr.bf16.mxu0 %v1035
    %2865 = vmatpush1.bf16.msra.mxu0 %v1034
    %2866 = vmatprep.subr.bf16.mxu0 %v1025
    %2867 = vmatpush1.bf16.msra.mxu0 %v1024
    %2868 = vmatprep.subr.bf16.mxu0 %v1015
    %2869 = vmatpush1.bf16.msra.mxu0 %v1014
    %2870 = vmatprep.subr.bf16.mxu0 %v1005
    %2871 = vmatpush1.bf16.msra.mxu0 %v1004
    %2872 = vmatprep.subr.bf16.mxu0 %v995
    %2873 = vmatpush1.bf16.msra.mxu0 %v994
    %2874 = vmatprep.subr.bf16.mxu0 %v985
    %2875 = vmatpush1.bf16.msra.mxu0 %v984
    %2876 = vmatprep.subr.bf16.mxu0 %v1135
    %2877 = vmatpush2.bf16.msra.mxu0 %v1134
    %2878 = vmatprep.subr.bf16.mxu0 %v1125
    %2879 = vmatpush2.bf16.msra.mxu0 %v1124
    %2880 = vmatprep.subr.bf16.mxu0 %v1115
    %2881 = vmatpush2.bf16.msra.mxu0 %v1114
    %2882 = vmatprep.subr.bf16.mxu0 %v1105
    %2883 = vmatpush2.bf16.msra.mxu0 %v1104
    %2884 = vmatprep.subr.bf16.mxu0 %v1095
    %2885 = vmatpush2.bf16.msra.mxu0 %v1094
    %2886 = vmatprep.subr.bf16.mxu0 %v1085
    %2887 = vmatpush2.bf16.msra.mxu0 %v1084
    %2888 = vmatprep.subr.bf16.mxu0 %v1075
    %2889 = vmatpush2.bf16.msra.mxu0 %v1074
    %2890 = vmatprep.subr.bf16.mxu0 %v1065
    %2891 = vmatpush2.bf16.msra.mxu0 %v1064
    %2892 = vmatprep.mubr.bf16.mxu0 %v2824
    %2893 = vmatmul.mubr.bf16.gmra.mxu0 %v2808
    %v2894 = vpop.f32.mrf.mxu0
    %v2895 = vadd.f32 %v289, %v2894
    %v2896 = vpop.f32.mrf.mxu0
    %v2897 = vadd.f32 %v293, %v2896
    %v2898 = vpop.f32.mrf.mxu0
    %v2899 = vadd.f32 %v289, %v2898
    %v2900 = vpop.f32.mrf.mxu0
    %v2901 = vadd.f32 %v293, %v2900
    %2902 = vmatprep.mubr.bf16.mxu0 %v2825
    %2903 = vmatmul.mubr.bf16.gmra.mxu0 %v2809
    %v2904 = vpop.f32.mrf.mxu0
    %v2905 = vadd.f32 %v289, %v2904
    %v2906 = vpop.f32.mrf.mxu0
    %v2907 = vadd.f32 %v293, %v2906
    %v2908 = vpop.f32.mrf.mxu0
    %v2909 = vadd.f32 %v289, %v2908
    %v2910 = vpop.f32.mrf.mxu0
    %v2911 = vadd.f32 %v293, %v2910
    %2912 = vmatprep.mubr.bf16.mxu0 %v2826
    %2913 = vmatmul.mubr.bf16.gmra.mxu0 %v2810
    %v2914 = vpop.f32.mrf.mxu0
    %v2915 = vadd.f32 %v289, %v2914
    %v2916 = vpop.f32.mrf.mxu0
    %v2917 = vadd.f32 %v293, %v2916
    %v2918 = vpop.f32.mrf.mxu0
    %v2919 = vadd.f32 %v289, %v2918
    %v2920 = vpop.f32.mrf.mxu0
    %v2921 = vadd.f32 %v293, %v2920
    %2922 = vmatprep.mubr.bf16.mxu0 %v2827
    %2923 = vmatmul.mubr.bf16.gmra.mxu0 %v2811
    %v2924 = vpop.f32.mrf.mxu0
    %v2925 = vadd.f32 %v289, %v2924
    %v2926 = vpop.f32.mrf.mxu0
    %v2927 = vadd.f32 %v293, %v2926
    %v2928 = vpop.f32.mrf.mxu0
    %v2929 = vpop.f32.mrf.mxu0
    %2930 = vdwg.mxu0
    %2931 = vmatprep.subr.bf16.mxu0 0
    %2932 = vmatpush1.bf16.msra.mxu0 0
    %2933 = vmatprep.subr.bf16.mxu0 0
    %2934 = vmatpush1.bf16.msra.mxu0 0
    %2935 = vmatprep.subr.bf16.mxu0 0
    %2936 = vmatpush1.bf16.msra.mxu0 0
    %2937 = vmatprep.subr.bf16.mxu0 0
    %2938 = vmatpush1.bf16.msra.mxu0 0
    %2939 = vmatprep.subr.bf16.mxu0 %v1175
    %2940 = vmatpush1.bf16.msra.mxu0 %v1174
    %2941 = vmatprep.subr.bf16.mxu0 %v1165
    %2942 = vmatpush1.bf16.msra.mxu0 %v1164
    %2943 = vmatprep.subr.bf16.mxu0 %v1155
    %2944 = vmatpush1.bf16.msra.mxu0 %v1154
    %2945 = vmatprep.subr.bf16.mxu0 %v1145
    %2946 = vmatpush1.bf16.msra.mxu0 %v1144
    %2947 = vmatprep.subr.bf16.mxu0 0
    %2948 = vmatpush2.bf16.msra.mxu0 0
    %2949 = vmatprep.subr.bf16.mxu0 0
    %2950 = vmatpush2.bf16.msra.mxu0 0
    %2951 = vmatprep.subr.bf16.mxu0 0
    %2952 = vmatpush2.bf16.msra.mxu0 0
    %2953 = vmatprep.subr.bf16.mxu0 0
    %2954 = vmatpush2.bf16.msra.mxu0 0
    %2955 = vmatprep.subr.bf16.mxu0 0
    %2956 = vmatpush2.bf16.msra.mxu0 0
    %2957 = vmatprep.subr.bf16.mxu0 0
    %2958 = vmatpush2.bf16.msra.mxu0 0
    %2959 = vmatprep.subr.bf16.mxu0 0
    %2960 = vmatpush2.bf16.msra.mxu0 0
    %2961 = vmatprep.subr.bf16.mxu0 0
    %2962 = vmatpush2.bf16.msra.mxu0 0
    %2963 = vmatprep.mubr.bf16.mxu0 0
    %2964 = vmatmul.mubr.bf16.gmra.mxu0 %v2849
    %v2965 = vpop.f32.mrf.mxu0
    %v2966 = vadd.f32 %v2895, %v2965
    %v2967 = vpop.f32.mrf.mxu0
    %v2968 = vadd.f32 %v2897, %v2967
    %v2969 = vpop.f32.mrf.mxu0
    %v2970 = vadd.f32 %v2899, %v2969
    %v2971 = vpop.f32.mrf.mxu0
    %v2972 = vadd.f32 %v2901, %v2971
    %2973 = vmatprep.mubr.bf16.mxu0 0
    %2974 = vmatmul.mubr.bf16.gmra.mxu0 %v2852
    %v2975 = vpop.f32.mrf.mxu0
    %v2976 = vadd.f32 %v2905, %v2975
    %v2977 = vpop.f32.mrf.mxu0
    %v2978 = vadd.f32 %v2907, %v2977
    %v2979 = vpop.f32.mrf.mxu0
    %v2980 = vadd.f32 %v2909, %v2979
    %v2981 = vpop.f32.mrf.mxu0
    %v2982 = vadd.f32 %v2911, %v2981
    %2983 = vmatprep.mubr.bf16.mxu0 0
    %2984 = vmatmul.mubr.bf16.gmra.mxu0 %v2855
    %v2985 = vpop.f32.mrf.mxu0
    %v2986 = vadd.f32 %v2915, %v2985
    %v2987 = vpop.f32.mrf.mxu0
    %v2988 = vadd.f32 %v2917, %v2987
    %v2989 = vpop.f32.mrf.mxu0
    %v2990 = vadd.f32 %v2919, %v2989
    %v2991 = vpop.f32.mrf.mxu0
    %v2992 = vadd.f32 %v2921, %v2991
    %2993 = vmatprep.mubr.bf16.mxu0 0
    %2994 = vmatmul.mubr.bf16.gmra.mxu0 %v2858
    %v2995 = vpop.f32.mrf.mxu0
    %v2996 = vadd.f32 %v2925, %v2995
    %v2997 = vpop.f32.mrf.mxu0
    %v2998 = vadd.f32 %v2927, %v2997
    %v2999 = vpop.f32.mrf.mxu0
    %v3000 = vpop.f32.mrf.mxu0
    %3001 = vdwg.mxu0
    %3002 = vmatprep.subr.bf16.mxu0 %v1057
    %3003 = vmatpush1.bf16.msra.mxu0 %v1056
    %3004 = vmatprep.subr.bf16.mxu0 %v1047
    %3005 = vmatpush1.bf16.msra.mxu0 %v1046
    %3006 = vmatprep.subr.bf16.mxu0 %v1037
    %3007 = vmatpush1.bf16.msra.mxu0 %v1036
    %3008 = vmatprep.subr.bf16.mxu0 %v1027
    %3009 = vmatpush1.bf16.msra.mxu0 %v1026
    %3010 = vmatprep.subr.bf16.mxu0 %v1017
    %3011 = vmatpush1.bf16.msra.mxu0 %v1016
    %3012 = vmatprep.subr.bf16.mxu0 %v1007
    %3013 = vmatpush1.bf16.msra.mxu0 %v1006
    %3014 = vmatprep.subr.bf16.mxu0 %v997
    %3015 = vmatpush1.bf16.msra.mxu0 %v996
    %3016 = vmatprep.subr.bf16.mxu0 %v987
    %3017 = vmatpush1.bf16.msra.mxu0 %v986
    %3018 = vmatprep.subr.bf16.mxu0 %v1137
    %3019 = vmatpush2.bf16.msra.mxu0 %v1136
    %3020 = vmatprep.subr.bf16.mxu0 %v1127
    %3021 = vmatpush2.bf16.msra.mxu0 %v1126
    %3022 = vmatprep.subr.bf16.mxu0 %v1117
    %3023 = vmatpush2.bf16.msra.mxu0 %v1116
    %3024 = vmatprep.subr.bf16.mxu0 %v1107
    %3025 = vmatpush2.bf16.msra.mxu0 %v1106
    %3026 = vmatprep.subr.bf16.mxu0 %v1097
    %3027 = vmatpush2.bf16.msra.mxu0 %v1096
    %3028 = vmatprep.subr.bf16.mxu0 %v1087
    %3029 = vmatpush2.bf16.msra.mxu0 %v1086
    %3030 = vmatprep.subr.bf16.mxu0 %v1077
    %3031 = vmatpush2.bf16.msra.mxu0 %v1076
    %3032 = vmatprep.subr.bf16.mxu0 %v1067
    %3033 = vmatpush2.bf16.msra.mxu0 %v1066
    %3034 = vmatprep.mubr.bf16.mxu0 %v2824
    %3035 = vmatmul.mubr.bf16.gmra.mxu0 %v2808
    %v3036 = vpop.f32.mrf.mxu0
    %v3037 = vadd.f32 %v297, %v3036
    %v3038 = vpop.f32.mrf.mxu0
    %v3039 = vadd.f32 %v301, %v3038
    %v3040 = vpop.f32.mrf.mxu0
    %v3041 = vadd.f32 %v297, %v3040
    %v3042 = vpop.f32.mrf.mxu0
    %v3043 = vadd.f32 %v301, %v3042
    %3044 = vmatprep.mubr.bf16.mxu0 %v2825
    %3045 = vmatmul.mubr.bf16.gmra.mxu0 %v2809
    %v3046 = vpop.f32.mrf.mxu0
    %v3047 = vadd.f32 %v297, %v3046
    %v3048 = vpop.f32.mrf.mxu0
    %v3049 = vadd.f32 %v301, %v3048
    %v3050 = vpop.f32.mrf.mxu0
    %v3051 = vadd.f32 %v297, %v3050
    %v3052 = vpop.f32.mrf.mxu0
    %v3053 = vadd.f32 %v301, %v3052
    %3054 = vmatprep.mubr.bf16.mxu0 %v2826
    %3055 = vmatmul.mubr.bf16.gmra.mxu0 %v2810
    %v3056 = vpop.f32.mrf.mxu0
    %v3057 = vadd.f32 %v297, %v3056
    %v3058 = vpop.f32.mrf.mxu0
    %v3059 = vadd.f32 %v301, %v3058
    %v3060 = vpop.f32.mrf.mxu0
    %v3061 = vadd.f32 %v297, %v3060
    %v3062 = vpop.f32.mrf.mxu0
    %v3063 = vadd.f32 %v301, %v3062
    %3064 = vmatprep.mubr.bf16.mxu0 %v2827
    %3065 = vmatmul.mubr.bf16.gmra.mxu0 %v2811
    %v3066 = vpop.f32.mrf.mxu0
    %v3067 = vadd.f32 %v297, %v3066
    %v3068 = vpop.f32.mrf.mxu0
    %v3069 = vadd.f32 %v301, %v3068
    %v3070 = vpop.f32.mrf.mxu0
    %v3071 = vpop.f32.mrf.mxu0
    %3072 = vdwg.mxu0
    %3073 = vmatprep.subr.bf16.mxu0 0
    %3074 = vmatpush1.bf16.msra.mxu0 0
    %3075 = vmatprep.subr.bf16.mxu0 0
    %3076 = vmatpush1.bf16.msra.mxu0 0
    %3077 = vmatprep.subr.bf16.mxu0 0
    %3078 = vmatpush1.bf16.msra.mxu0 0
    %3079 = vmatprep.subr.bf16.mxu0 0
    %3080 = vmatpush1.bf16.msra.mxu0 0
    %3081 = vmatprep.subr.bf16.mxu0 %v1177
    %3082 = vmatpush1.bf16.msra.mxu0 %v1176
    %3083 = vmatprep.subr.bf16.mxu0 %v1167
    %3084 = vmatpush1.bf16.msra.mxu0 %v1166
    %3085 = vmatprep.subr.bf16.mxu0 %v1157
    %3086 = vmatpush1.bf16.msra.mxu0 %v1156
    %3087 = vmatprep.subr.bf16.mxu0 %v1147
    %3088 = vmatpush1.bf16.msra.mxu0 %v1146
    %3089 = vmatprep.subr.bf16.mxu0 0
    %3090 = vmatpush2.bf16.msra.mxu0 0
    %3091 = vmatprep.subr.bf16.mxu0 0
    %3092 = vmatpush2.bf16.msra.mxu0 0
    %3093 = vmatprep.subr.bf16.mxu0 0
    %3094 = vmatpush2.bf16.msra.mxu0 0
    %3095 = vmatprep.subr.bf16.mxu0 0
    %3096 = vmatpush2.bf16.msra.mxu0 0
    %3097 = vmatprep.subr.bf16.mxu0 0
    %3098 = vmatpush2.bf16.msra.mxu0 0
    %3099 = vmatprep.subr.bf16.mxu0 0
    %3100 = vmatpush2.bf16.msra.mxu0 0
    %3101 = vmatprep.subr.bf16.mxu0 0
    %3102 = vmatpush2.bf16.msra.mxu0 0
    %3103 = vmatprep.subr.bf16.mxu0 0
    %3104 = vmatpush2.bf16.msra.mxu0 0
    %3105 = vmatprep.mubr.bf16.mxu0 0
    %3106 = vmatmul.mubr.bf16.gmra.mxu0 %v2849
    %v3107 = vpop.f32.mrf.mxu0
    %v3108 = vadd.f32 %v3037, %v3107
    %v3109 = vpop.f32.mrf.mxu0
    %v3110 = vadd.f32 %v3039, %v3109
    %v3111 = vpop.f32.mrf.mxu0
    %v3112 = vadd.f32 %v3041, %v3111
    %v3113 = vpop.f32.mrf.mxu0
    %v3114 = vadd.f32 %v3043, %v3113
    %3115 = vmatprep.mubr.bf16.mxu0 0
    %3116 = vmatmul.mubr.bf16.gmra.mxu0 %v2852
    %v3117 = vpop.f32.mrf.mxu0
    %v3118 = vadd.f32 %v3047, %v3117
    %v3119 = vpop.f32.mrf.mxu0
    %v3120 = vadd.f32 %v3049, %v3119
    %v3121 = vpop.f32.mrf.mxu0
    %v3122 = vadd.f32 %v3051, %v3121
    %v3123 = vpop.f32.mrf.mxu0
    %v3124 = vadd.f32 %v3053, %v3123
    %3125 = vmatprep.mubr.bf16.mxu0 0
    %3126 = vmatmul.mubr.bf16.gmra.mxu0 %v2855
    %v3127 = vpop.f32.mrf.mxu0
    %v3128 = vadd.f32 %v3057, %v3127
    %v3129 = vpop.f32.mrf.mxu0
    %v3130 = vadd.f32 %v3059, %v3129
    %v3131 = vpop.f32.mrf.mxu0
    %v3132 = vadd.f32 %v3061, %v3131
    %v3133 = vpop.f32.mrf.mxu0
    %v3134 = vadd.f32 %v3063, %v3133
    %3135 = vmatprep.mubr.bf16.mxu0 0
    %3136 = vmatmul.mubr.bf16.gmra.mxu0 %v2858
    %v3137 = vpop.f32.mrf.mxu0
    %v3138 = vadd.f32 %v3067, %v3137
    %v3139 = vpop.f32.mrf.mxu0
    %v3140 = vadd.f32 %v3069, %v3139
    %v3141 = vpop.f32.mrf.mxu0
    %v3142 = vpop.f32.mrf.mxu0
    %3143 = vdwg.mxu0
    %3144 = vmatprep.subr.bf16.mxu0 %v1059
    %3145 = vmatpush1.bf16.msra.mxu0 %v1058
    %3146 = vmatprep.subr.bf16.mxu0 %v1049
    %3147 = vmatpush1.bf16.msra.mxu0 %v1048
    %3148 = vmatprep.subr.bf16.mxu0 %v1039
    %3149 = vmatpush1.bf16.msra.mxu0 %v1038
    %3150 = vmatprep.subr.bf16.mxu0 %v1029
    %3151 = vmatpush1.bf16.msra.mxu0 %v1028
    %3152 = vmatprep.subr.bf16.mxu0 %v1019
    %3153 = vmatpush1.bf16.msra.mxu0 %v1018
    %3154 = vmatprep.subr.bf16.mxu0 %v1009
    %3155 = vmatpush1.bf16.msra.mxu0 %v1008
    %3156 = vmatprep.subr.bf16.mxu0 %v999
    %3157 = vmatpush1.bf16.msra.mxu0 %v998
    %3158 = vmatprep.subr.bf16.mxu0 %v989
    %3159 = vmatpush1.bf16.msra.mxu0 %v988
    %3160 = vmatprep.subr.bf16.mxu0 %v1139
    %3161 = vmatpush2.bf16.msra.mxu0 %v1138
    %3162 = vmatprep.subr.bf16.mxu0 %v1129
    %3163 = vmatpush2.bf16.msra.mxu0 %v1128
    %3164 = vmatprep.subr.bf16.mxu0 %v1119
    %3165 = vmatpush2.bf16.msra.mxu0 %v1118
    %3166 = vmatprep.subr.bf16.mxu0 %v1109
    %3167 = vmatpush2.bf16.msra.mxu0 %v1108
    %3168 = vmatprep.subr.bf16.mxu0 %v1099
    %3169 = vmatpush2.bf16.msra.mxu0 %v1098
    %3170 = vmatprep.subr.bf16.mxu0 %v1089
    %3171 = vmatpush2.bf16.msra.mxu0 %v1088
    %3172 = vmatprep.subr.bf16.mxu0 %v1079
    %3173 = vmatpush2.bf16.msra.mxu0 %v1078
    %3174 = vmatprep.subr.bf16.mxu0 %v1069
    %3175 = vmatpush2.bf16.msra.mxu0 %v1068
    %3176 = vmatprep.mubr.bf16.mxu0 %v2824
    %3177 = vmatmul.mubr.bf16.gmra.mxu0 %v2808
    %v3178 = vpop.f32.mrf.mxu0
    %v3179 = vadd.f32 %v305, %v3178
    %v3180 = vpop.f32.mrf.mxu0
    %v3181 = vadd.f32 %v309, %v3180
    %v3182 = vpop.f32.mrf.mxu0
    %v3183 = vadd.f32 %v305, %v3182
    %v3184 = vpop.f32.mrf.mxu0
    %v3185 = vadd.f32 %v309, %v3184
    %3186 = vmatprep.mubr.bf16.mxu0 %v2825
    %3187 = vmatmul.mubr.bf16.gmra.mxu0 %v2809
    %v3188 = vpop.f32.mrf.mxu0
    %v3189 = vadd.f32 %v305, %v3188
    %v3190 = vpop.f32.mrf.mxu0
    %v3191 = vadd.f32 %v309, %v3190
    %v3192 = vpop.f32.mrf.mxu0
    %v3193 = vadd.f32 %v305, %v3192
    %v3194 = vpop.f32.mrf.mxu0
    %v3195 = vadd.f32 %v309, %v3194
    %3196 = vmatprep.mubr.bf16.mxu0 %v2826
    %3197 = vmatmul.mubr.bf16.gmra.mxu0 %v2810
    %v3198 = vpop.f32.mrf.mxu0
    %v3199 = vadd.f32 %v305, %v3198
    %v3200 = vpop.f32.mrf.mxu0
    %v3201 = vadd.f32 %v309, %v3200
    %v3202 = vpop.f32.mrf.mxu0
    %v3203 = vadd.f32 %v305, %v3202
    %v3204 = vpop.f32.mrf.mxu0
    %v3205 = vadd.f32 %v309, %v3204
    %3206 = vmatprep.mubr.bf16.mxu0 %v2827
    %3207 = vmatmul.mubr.bf16.gmra.mxu0 %v2811
    %v3208 = vpop.f32.mrf.mxu0
    %v3209 = vadd.f32 %v305, %v3208
    %v3210 = vpop.f32.mrf.mxu0
    %v3211 = vadd.f32 %v309, %v3210
    %v3212 = vpop.f32.mrf.mxu0
    %v3213 = vpop.f32.mrf.mxu0
    %3214 = vdwg.mxu0
    %3215 = vmatprep.subr.bf16.mxu0 0
    %3216 = vmatpush1.bf16.msra.mxu0 0
    %3217 = vmatprep.subr.bf16.mxu0 0
    %3218 = vmatpush1.bf16.msra.mxu0 0
    %3219 = vmatprep.subr.bf16.mxu0 0
    %3220 = vmatpush1.bf16.msra.mxu0 0
    %3221 = vmatprep.subr.bf16.mxu0 0
    %3222 = vmatpush1.bf16.msra.mxu0 0
    %3223 = vmatprep.subr.bf16.mxu0 %v1179
    %3224 = vmatpush1.bf16.msra.mxu0 %v1178
    %3225 = vmatprep.subr.bf16.mxu0 %v1169
    %3226 = vmatpush1.bf16.msra.mxu0 %v1168
    %3227 = vmatprep.subr.bf16.mxu0 %v1159
    %3228 = vmatpush1.bf16.msra.mxu0 %v1158
    %3229 = vmatprep.subr.bf16.mxu0 %v1149
    %3230 = vmatpush1.bf16.msra.mxu0 %v1148
    %3231 = vmatprep.subr.bf16.mxu0 0
    %3232 = vmatpush2.bf16.msra.mxu0 0
    %3233 = vmatprep.subr.bf16.mxu0 0
    %3234 = vmatpush2.bf16.msra.mxu0 0
    %3235 = vmatprep.subr.bf16.mxu0 0
    %3236 = vmatpush2.bf16.msra.mxu0 0
    %3237 = vmatprep.subr.bf16.mxu0 0
    %3238 = vmatpush2.bf16.msra.mxu0 0
    %3239 = vmatprep.subr.bf16.mxu0 0
    %3240 = vmatpush2.bf16.msra.mxu0 0
    %3241 = vmatprep.subr.bf16.mxu0 0
    %3242 = vmatpush2.bf16.msra.mxu0 0
    %3243 = vmatprep.subr.bf16.mxu0 0
    %3244 = vmatpush2.bf16.msra.mxu0 0
    %3245 = vmatprep.subr.bf16.mxu0 0
    %3246 = vmatpush2.bf16.msra.mxu0 0
    %3247 = vmatprep.mubr.bf16.mxu0 0
    %3248 = vmatmul.mubr.bf16.gmra.mxu0 %v2849
    %v3249 = vpop.f32.mrf.mxu0
    %v3250 = vadd.f32 %v3179, %v3249
    %v3251 = vpop.f32.mrf.mxu0
    %v3252 = vadd.f32 %v3181, %v3251
    %v3253 = vpop.f32.mrf.mxu0
    %v3254 = vadd.f32 %v3183, %v3253
    %v3255 = vpop.f32.mrf.mxu0
    %v3256 = vadd.f32 %v3185, %v3255
    %3257 = vmatprep.mubr.bf16.mxu0 0
    %3258 = vmatmul.mubr.bf16.gmra.mxu0 %v2852
    %v3259 = vpop.f32.mrf.mxu0
    %v3260 = vadd.f32 %v3189, %v3259
    %v3261 = vpop.f32.mrf.mxu0
    %v3262 = vadd.f32 %v3191, %v3261
    %v3263 = vpop.f32.mrf.mxu0
    %v3264 = vadd.f32 %v3193, %v3263
    %v3265 = vpop.f32.mrf.mxu0
    %v3266 = vadd.f32 %v3195, %v3265
    %3267 = vmatprep.mubr.bf16.mxu0 0
    %3268 = vmatmul.mubr.bf16.gmra.mxu0 %v2855
    %v3269 = vpop.f32.mrf.mxu0
    %v3270 = vadd.f32 %v3199, %v3269
    %v3271 = vpop.f32.mrf.mxu0
    %v3272 = vadd.f32 %v3201, %v3271
    %v3273 = vpop.f32.mrf.mxu0
    %v3274 = vadd.f32 %v3203, %v3273
    %v3275 = vpop.f32.mrf.mxu0
    %v3276 = vadd.f32 %v3205, %v3275
    %3277 = vmatprep.mubr.bf16.mxu0 0
    %3278 = vmatmul.mubr.bf16.gmra.mxu0 %v2858
    %v3279 = vpop.f32.mrf.mxu0
    %v3280 = vadd.f32 %v3209, %v3279
    %v3281 = vpop.f32.mrf.mxu0
    %v3282 = vadd.f32 %v3211, %v3281
    %v3283 = vpop.f32.mrf.mxu0
    %v3284 = vpop.f32.mrf.mxu0
    %3285 = vdwg.mxu0
    %3286 = vmatprep.subr.bf16.mxu0 %v1061
    %3287 = vmatpush1.bf16.msra.mxu0 %v1060
    %3288 = vmatprep.subr.bf16.mxu0 %v1051
    %3289 = vmatpush1.bf16.msra.mxu0 %v1050
    %3290 = vmatprep.subr.bf16.mxu0 %v1041
    %3291 = vmatpush1.bf16.msra.mxu0 %v1040
    %3292 = vmatprep.subr.bf16.mxu0 %v1031
    %3293 = vmatpush1.bf16.msra.mxu0 %v1030
    %3294 = vmatprep.subr.bf16.mxu0 %v1021
    %3295 = vmatpush1.bf16.msra.mxu0 %v1020
    %3296 = vmatprep.subr.bf16.mxu0 %v1011
    %3297 = vmatpush1.bf16.msra.mxu0 %v1010
    %3298 = vmatprep.subr.bf16.mxu0 %v1001
    %3299 = vmatpush1.bf16.msra.mxu0 %v1000
    %3300 = vmatprep.subr.bf16.mxu0 %v991
    %3301 = vmatpush1.bf16.msra.mxu0 %v990
    %3302 = vmatprep.subr.bf16.mxu0 %v1141
    %3303 = vmatpush2.bf16.msra.mxu0 %v1140
    %3304 = vmatprep.subr.bf16.mxu0 %v1131
    %3305 = vmatpush2.bf16.msra.mxu0 %v1130
    %3306 = vmatprep.subr.bf16.mxu0 %v1121
    %3307 = vmatpush2.bf16.msra.mxu0 %v1120
    %3308 = vmatprep.subr.bf16.mxu0 %v1111
    %3309 = vmatpush2.bf16.msra.mxu0 %v1110
    %3310 = vmatprep.subr.bf16.mxu0 %v1101
    %3311 = vmatpush2.bf16.msra.mxu0 %v1100
    %3312 = vmatprep.subr.bf16.mxu0 %v1091
    %3313 = vmatpush2.bf16.msra.mxu0 %v1090
    %3314 = vmatprep.subr.bf16.mxu0 %v1081
    %3315 = vmatpush2.bf16.msra.mxu0 %v1080
    %3316 = vmatprep.subr.bf16.mxu0 %v1071
    %3317 = vmatpush2.bf16.msra.mxu0 %v1070
    %3318 = vmatprep.mubr.bf16.mxu0 %v2824
    %3319 = vmatmul.mubr.bf16.gmra.mxu0 %v2808
    %v3320 = vpop.f32.mrf.mxu0
    %v3321 = vadd.f32 %v313, %v3320
    %v3322 = vpop.f32.mrf.mxu0
    %v3323 = vadd.f32 %v317, %v3322
    %v3324 = vpop.f32.mrf.mxu0
    %v3325 = vadd.f32 %v313, %v3324
    %v3326 = vpop.f32.mrf.mxu0
    %v3327 = vadd.f32 %v317, %v3326
    %3328 = vmatprep.mubr.bf16.mxu0 %v2825
    %3329 = vmatmul.mubr.bf16.gmra.mxu0 %v2809
    %v3330 = vpop.f32.mrf.mxu0
    %v3331 = vadd.f32 %v313, %v3330
    %v3332 = vpop.f32.mrf.mxu0
    %v3333 = vadd.f32 %v317, %v3332
    %v3334 = vpop.f32.mrf.mxu0
    %v3335 = vadd.f32 %v313, %v3334
    %v3336 = vpop.f32.mrf.mxu0
    %v3337 = vadd.f32 %v317, %v3336
    %3338 = vmatprep.mubr.bf16.mxu0 %v2826
    %3339 = vmatmul.mubr.bf16.gmra.mxu0 %v2810
    %v3340 = vpop.f32.mrf.mxu0
    %v3341 = vadd.f32 %v313, %v3340
    %v3342 = vpop.f32.mrf.mxu0
    %v3343 = vadd.f32 %v317, %v3342
    %v3344 = vpop.f32.mrf.mxu0
    %v3345 = vadd.f32 %v313, %v3344
    %v3346 = vpop.f32.mrf.mxu0
    %v3347 = vadd.f32 %v317, %v3346
    %3348 = vmatprep.mubr.bf16.mxu0 %v2827
    %3349 = vmatmul.mubr.bf16.gmra.mxu0 %v2811
    %v3350 = vpop.f32.mrf.mxu0
    %v3351 = vadd.f32 %v313, %v3350
    %v3352 = vpop.f32.mrf.mxu0
    %v3353 = vadd.f32 %v317, %v3352
    %v3354 = vpop.f32.mrf.mxu0
    %v3355 = vpop.f32.mrf.mxu0
    %3356 = vdwg.mxu0
    %3357 = vmatprep.subr.bf16.mxu0 0
    %3358 = vmatpush1.bf16.msra.mxu0 0
    %3359 = vmatprep.subr.bf16.mxu0 0
    %3360 = vmatpush1.bf16.msra.mxu0 0
    %3361 = vmatprep.subr.bf16.mxu0 0
    %3362 = vmatpush1.bf16.msra.mxu0 0
    %3363 = vmatprep.subr.bf16.mxu0 0
    %3364 = vmatpush1.bf16.msra.mxu0 0
    %3365 = vmatprep.subr.bf16.mxu0 %v1181
    %3366 = vmatpush1.bf16.msra.mxu0 %v1180
    %3367 = vmatprep.subr.bf16.mxu0 %v1171
    %3368 = vmatpush1.bf16.msra.mxu0 %v1170
    %3369 = vmatprep.subr.bf16.mxu0 %v1161
    %3370 = vmatpush1.bf16.msra.mxu0 %v1160
    %3371 = vmatprep.subr.bf16.mxu0 %v1151
    %3372 = vmatpush1.bf16.msra.mxu0 %v1150
    %3373 = vmatprep.subr.bf16.mxu0 0
    %3374 = vmatpush2.bf16.msra.mxu0 0
    %3375 = vmatprep.subr.bf16.mxu0 0
    %3376 = vmatpush2.bf16.msra.mxu0 0
    %3377 = vmatprep.subr.bf16.mxu0 0
    %3378 = vmatpush2.bf16.msra.mxu0 0
    %3379 = vmatprep.subr.bf16.mxu0 0
    %3380 = vmatpush2.bf16.msra.mxu0 0
    %3381 = vmatprep.subr.bf16.mxu0 0
    %3382 = vmatpush2.bf16.msra.mxu0 0
    %3383 = vmatprep.subr.bf16.mxu0 0
    %3384 = vmatpush2.bf16.msra.mxu0 0
    %3385 = vmatprep.subr.bf16.mxu0 0
    %3386 = vmatpush2.bf16.msra.mxu0 0
    %3387 = vmatprep.subr.bf16.mxu0 0
    %3388 = vmatpush2.bf16.msra.mxu0 0
    %3389 = vmatprep.mubr.bf16.mxu0 0
    %3390 = vmatmul.mubr.bf16.gmra.mxu0 %v2849
    %v3391 = vpop.f32.mrf.mxu0
    %v3392 = vadd.f32 %v3321, %v3391
    %v3393 = vpop.f32.mrf.mxu0
    %v3394 = vadd.f32 %v3323, %v3393
    %v3395 = vpop.f32.mrf.mxu0
    %v3396 = vadd.f32 %v3325, %v3395
    %v3397 = vpop.f32.mrf.mxu0
    %v3398 = vadd.f32 %v3327, %v3397
    %3399 = vmatprep.mubr.bf16.mxu0 0
    %3400 = vmatmul.mubr.bf16.gmra.mxu0 %v2852
    %v3401 = vpop.f32.mrf.mxu0
    %v3402 = vadd.f32 %v3331, %v3401
    %v3403 = vpop.f32.mrf.mxu0
    %v3404 = vadd.f32 %v3333, %v3403
    %v3405 = vpop.f32.mrf.mxu0
    %v3406 = vadd.f32 %v3335, %v3405
    %v3407 = vpop.f32.mrf.mxu0
    %v3408 = vadd.f32 %v3337, %v3407
    %3409 = vmatprep.mubr.bf16.mxu0 0
    %3410 = vmatmul.mubr.bf16.gmra.mxu0 %v2855
    %v3411 = vpop.f32.mrf.mxu0
    %v3412 = vadd.f32 %v3341, %v3411
    %v3413 = vpop.f32.mrf.mxu0
    %v3414 = vadd.f32 %v3343, %v3413
    %v3415 = vpop.f32.mrf.mxu0
    %v3416 = vadd.f32 %v3345, %v3415
    %v3417 = vpop.f32.mrf.mxu0
    %v3418 = vadd.f32 %v3347, %v3417
    %3419 = vmatprep.mubr.bf16.mxu0 0
    %3420 = vmatmul.mubr.bf16.gmra.mxu0 %v2858
    %v3421 = vpop.f32.mrf.mxu0
    %v3422 = vadd.f32 %v3351, %v3421
    %v3423 = vpop.f32.mrf.mxu0
    %v3424 = vadd.f32 %v3353, %v3423
    %v3425 = vpop.f32.mrf.mxu0
    %v3426 = vpop.f32.mrf.mxu0
    %3427 = vdwg.mxu0
    %3428 = vmatprep.subr.bf16.mxu0 %v1063
    %3429 = vmatpush1.bf16.msra.mxu0 %v1062
    %3430 = vmatprep.subr.bf16.mxu0 %v1053
    %3431 = vmatpush1.bf16.msra.mxu0 %v1052
    %3432 = vmatprep.subr.bf16.mxu0 %v1043
    %3433 = vmatpush1.bf16.msra.mxu0 %v1042
    %3434 = vmatprep.subr.bf16.mxu0 %v1033
    %3435 = vmatpush1.bf16.msra.mxu0 %v1032
    %3436 = vmatprep.subr.bf16.mxu0 %v1023
    %3437 = vmatpush1.bf16.msra.mxu0 %v1022
    %3438 = vmatprep.subr.bf16.mxu0 %v1013
    %3439 = vmatpush1.bf16.msra.mxu0 %v1012
    %3440 = vmatprep.subr.bf16.mxu0 %v1003
    %3441 = vmatpush1.bf16.msra.mxu0 %v1002
    %3442 = vmatprep.subr.bf16.mxu0 %v993
    %3443 = vmatpush1.bf16.msra.mxu0 %v992
    %3444 = vmatprep.subr.bf16.mxu0 %v1143
    %3445 = vmatpush2.bf16.msra.mxu0 %v1142
    %3446 = vmatprep.subr.bf16.mxu0 %v1133
    %3447 = vmatpush2.bf16.msra.mxu0 %v1132
    %3448 = vmatprep.subr.bf16.mxu0 %v1123
    %3449 = vmatpush2.bf16.msra.mxu0 %v1122
    %3450 = vmatprep.subr.bf16.mxu0 %v1113
    %3451 = vmatpush2.bf16.msra.mxu0 %v1112
    %3452 = vmatprep.subr.bf16.mxu0 %v1103
    %3453 = vmatpush2.bf16.msra.mxu0 %v1102
    %3454 = vmatprep.subr.bf16.mxu0 %v1093
    %3455 = vmatpush2.bf16.msra.mxu0 %v1092
    %3456 = vmatprep.subr.bf16.mxu0 %v1083
    %3457 = vmatpush2.bf16.msra.mxu0 %v1082
    %3458 = vmatprep.subr.bf16.mxu0 %v1073
    %3459 = vmatpush2.bf16.msra.mxu0 %v1072
    %3460 = vmatprep.mubr.bf16.mxu0 %v2824
    %3461 = vmatmul.mubr.bf16.gmra.mxu0 %v2808
    %v3462 = vpop.f32.mrf.mxu0
    %v3463 = vadd.f32 %v321, %v3462
    %v3464 = vpop.f32.mrf.mxu0
    %v3465 = vadd.f32 %v325, %v3464
    %v3466 = vpop.f32.mrf.mxu0
    %v3467 = vadd.f32 %v321, %v3466
    %v3468 = vpop.f32.mrf.mxu0
    %v3469 = vadd.f32 %v325, %v3468
    %3470 = vmatprep.mubr.bf16.mxu0 %v2825
    %3471 = vmatmul.mubr.bf16.gmra.mxu0 %v2809
    %v3472 = vpop.f32.mrf.mxu0
    %v3473 = vadd.f32 %v321, %v3472
    %v3474 = vpop.f32.mrf.mxu0
    %v3475 = vadd.f32 %v325, %v3474
    %v3476 = vpop.f32.mrf.mxu0
    %v3477 = vadd.f32 %v321, %v3476
    %v3478 = vpop.f32.mrf.mxu0
    %v3479 = vadd.f32 %v325, %v3478
    %3480 = vmatprep.mubr.bf16.mxu0 %v2826
    %3481 = vmatmul.mubr.bf16.gmra.mxu0 %v2810
    %v3482 = vpop.f32.mrf.mxu0
    %v3483 = vadd.f32 %v321, %v3482
    %v3484 = vpop.f32.mrf.mxu0
    %v3485 = vadd.f32 %v325, %v3484
    %v3486 = vpop.f32.mrf.mxu0
    %v3487 = vadd.f32 %v321, %v3486
    %v3488 = vpop.f32.mrf.mxu0
    %v3489 = vadd.f32 %v325, %v3488
    %3490 = vmatprep.mubr.bf16.mxu0 %v2827
    %3491 = vmatmul.mubr.bf16.gmra.mxu0 %v2811
    %v3492 = vpop.f32.mrf.mxu0
    %v3493 = vadd.f32 %v321, %v3492
    %v3494 = vpop.f32.mrf.mxu0
    %v3495 = vadd.f32 %v325, %v3494
    %v3496 = vpop.f32.mrf.mxu0
    %v3497 = vpop.f32.mrf.mxu0
    %3498 = vdwg.mxu0
    %3499 = vmatprep.subr.bf16.mxu0 0
    %3500 = vmatpush1.bf16.msra.mxu0 0
    %3501 = vmatprep.subr.bf16.mxu0 0
    %3502 = vmatpush1.bf16.msra.mxu0 0
    %3503 = vmatprep.subr.bf16.mxu0 0
    %3504 = vmatpush1.bf16.msra.mxu0 0
    %3505 = vmatprep.subr.bf16.mxu0 0
    %3506 = vmatpush1.bf16.msra.mxu0 0
    %3507 = vmatprep.subr.bf16.mxu0 %v1183
    %3508 = vmatpush1.bf16.msra.mxu0 %v1182
    %3509 = vmatprep.subr.bf16.mxu0 %v1173
    %3510 = vmatpush1.bf16.msra.mxu0 %v1172
    %3511 = vmatprep.subr.bf16.mxu0 %v1163
    %3512 = vmatpush1.bf16.msra.mxu0 %v1162
    %3513 = vmatprep.subr.bf16.mxu0 %v1153
    %3514 = vmatpush1.bf16.msra.mxu0 %v1152
    %3515 = vmatprep.subr.bf16.mxu0 0
    %3516 = vmatpush2.bf16.msra.mxu0 0
    %3517 = vmatprep.subr.bf16.mxu0 0
    %3518 = vmatpush2.bf16.msra.mxu0 0
    %3519 = vmatprep.subr.bf16.mxu0 0
    %3520 = vmatpush2.bf16.msra.mxu0 0
    %3521 = vmatprep.subr.bf16.mxu0 0
    %3522 = vmatpush2.bf16.msra.mxu0 0
    %3523 = vmatprep.subr.bf16.mxu0 0
    %3524 = vmatpush2.bf16.msra.mxu0 0
    %3525 = vmatprep.subr.bf16.mxu0 0
    %3526 = vmatpush2.bf16.msra.mxu0 0
    %3527 = vmatprep.subr.bf16.mxu0 0
    %3528 = vmatpush2.bf16.msra.mxu0 0
    %3529 = vmatprep.subr.bf16.mxu0 0
    %3530 = vmatpush2.bf16.msra.mxu0 0
    %3531 = vmatprep.mubr.bf16.mxu0 0
    %3532 = vmatmul.mubr.bf16.gmra.mxu0 %v2849
    %v3533 = vpop.f32.mrf.mxu0
    %v3534 = vadd.f32 %v3463, %v3533
    %v3535 = vpop.f32.mrf.mxu0
    %v3536 = vadd.f32 %v3465, %v3535
    %v3537 = vpop.f32.mrf.mxu0
    %v3538 = vadd.f32 %v3467, %v3537
    %v3539 = vpop.f32.mrf.mxu0
    %v3540 = vadd.f32 %v3469, %v3539
    %3541 = vmatprep.mubr.bf16.mxu0 0
    %3542 = vmatmul.mubr.bf16.gmra.mxu0 %v2852
    %v3543 = vpop.f32.mrf.mxu0
    %v3544 = vadd.f32 %v3473, %v3543
    %v3545 = vpop.f32.mrf.mxu0
    %v3546 = vadd.f32 %v3475, %v3545
    %v3547 = vpop.f32.mrf.mxu0
    %v3548 = vadd.f32 %v3477, %v3547
    %v3549 = vpop.f32.mrf.mxu0
    %v3550 = vadd.f32 %v3479, %v3549
    %3551 = vmatprep.mubr.bf16.mxu0 0
    %3552 = vmatmul.mubr.bf16.gmra.mxu0 %v2855
    %v3553 = vpop.f32.mrf.mxu0
    %v3554 = vadd.f32 %v3483, %v3553
    %v3555 = vpop.f32.mrf.mxu0
    %v3556 = vadd.f32 %v3485, %v3555
    %v3557 = vpop.f32.mrf.mxu0
    %v3558 = vadd.f32 %v3487, %v3557
    %v3559 = vpop.f32.mrf.mxu0
    %v3560 = vadd.f32 %v3489, %v3559
    %3561 = vmatprep.mubr.bf16.mxu0 0
    %3562 = vmatmul.mubr.bf16.gmra.mxu0 %v2858
    %v3563 = vpop.f32.mrf.mxu0
    %v3564 = vadd.f32 %v3493, %v3563
    %v3565 = vpop.f32.mrf.mxu0
    %v3566 = vadd.f32 %v3495, %v3565
    %v3567 = vpop.f32.mrf.mxu0
    %v3568 = vpop.f32.mrf.mxu0
    %3569 = vdwg.mxu0
    %v3570 = vxor.u32 %v2966, 2147483648
    %v3571 = vxor.u32 %v2968, 2147483648
    %v3572 = vxor.u32 %v3108, 2147483648
    %v3573 = vxor.u32 %v3110, 2147483648
    %v3574 = vxor.u32 %v3250, 2147483648
    %v3575 = vxor.u32 %v3252, 2147483648
    %v3576 = vxor.u32 %v3392, 2147483648
    %v3577 = vxor.u32 %v3394, 2147483648
    %v3578 = vxor.u32 %v3534, 2147483648
    %v3579 = vxor.u32 %v3536, 2147483648
    %v3580 = vxor.u32 %v2970, 2147483648
    %v3581 = vxor.u32 %v2972, 2147483648
    %v3582 = vxor.u32 %v3112, 2147483648
    %v3583 = vxor.u32 %v3114, 2147483648
    %v3584 = vxor.u32 %v3254, 2147483648
    %v3585 = vxor.u32 %v3256, 2147483648
    %v3586 = vxor.u32 %v3396, 2147483648
    %v3587 = vxor.u32 %v3398, 2147483648
    %v3588 = vxor.u32 %v3538, 2147483648
    %v3589 = vxor.u32 %v3540, 2147483648
    %v3590 = vxor.u32 %v2976, 2147483648
    %v3591 = vxor.u32 %v2978, 2147483648
    %v3592 = vxor.u32 %v3118, 2147483648
    %v3593 = vxor.u32 %v3120, 2147483648
    %v3594 = vxor.u32 %v3260, 2147483648
    %v3595 = vxor.u32 %v3262, 2147483648
    %v3596 = vxor.u32 %v3402, 2147483648
    %v3597 = vxor.u32 %v3404, 2147483648
    %v3598 = vxor.u32 %v3544, 2147483648
    %v3599 = vxor.u32 %v3546, 2147483648
    %v3600 = vxor.u32 %v2980, 2147483648
    %v3601 = vxor.u32 %v2982, 2147483648
    %v3602 = vxor.u32 %v3122, 2147483648
    %v3603 = vxor.u32 %v3124, 2147483648
    %v3604 = vxor.u32 %v3264, 2147483648
    %v3605 = vxor.u32 %v3266, 2147483648
    %v3606 = vxor.u32 %v3406, 2147483648
    %v3607 = vxor.u32 %v3408, 2147483648
    %v3608 = vxor.u32 %v3548, 2147483648
    %v3609 = vxor.u32 %v3550, 2147483648
    %v3610 = vxor.u32 %v2986, 2147483648
    %v3611 = vxor.u32 %v2988, 2147483648
    %v3612 = vxor.u32 %v3128, 2147483648
    %v3613 = vxor.u32 %v3130, 2147483648
    %v3614 = vxor.u32 %v3270, 2147483648
    %v3615 = vxor.u32 %v3272, 2147483648
    %v3616 = vxor.u32 %v3412, 2147483648
    %v3617 = vxor.u32 %v3414, 2147483648
    %v3618 = vxor.u32 %v3554, 2147483648
    %v3619 = vxor.u32 %v3556, 2147483648
    %v3620 = vxor.u32 %v2990, 2147483648
    %v3621 = vxor.u32 %v2992, 2147483648
    %v3622 = vxor.u32 %v3132, 2147483648
    %v3623 = vxor.u32 %v3134, 2147483648
    %v3624 = vxor.u32 %v3274, 2147483648
    %v3625 = vxor.u32 %v3276, 2147483648
    %v3626 = vxor.u32 %v3416, 2147483648
    %v3627 = vxor.u32 %v3418, 2147483648
    %v3628 = vxor.u32 %v3558, 2147483648
    %v3629 = vxor.u32 %v3560, 2147483648
    %v3630 = vxor.u32 %v2996, 2147483648
    %v3631 = vxor.u32 %v2998, 2147483648
    %v3632 = vxor.u32 %v3138, 2147483648
    %v3633 = vxor.u32 %v3140, 2147483648
    %v3634 = vxor.u32 %v3280, 2147483648
    %v3635 = vxor.u32 %v3282, 2147483648
    %v3636 = vxor.u32 %v3422, 2147483648
    %v3637 = vxor.u32 %v3424, 2147483648
    %v3638 = vxor.u32 %v3564, 2147483648
    %v3639 = vxor.u32 %v3566, 2147483648
    %v3640 = vmul.f32 %v3570, 1.442695
    %v3641 = vpow.pop %v3640
    %v3642 = vmul.f32 %v3571, 1.442695
    %v3643 = vpow.pop %v3642
    %v3644 = vmul.f32 %v3572, 1.442695
    %v3645 = vpow.pop %v3644
    %v3646 = vmul.f32 %v3573, 1.442695
    %v3647 = vpow.pop %v3646
    %v3648 = vmul.f32 %v3574, 1.442695
    %v3649 = vpow.pop %v3648
    %v3650 = vmul.f32 %v3575, 1.442695
    %v3651 = vpow.pop %v3650
    %v3652 = vmul.f32 %v3576, 1.442695
    %v3653 = vpow.pop %v3652
    %v3654 = vmul.f32 %v3577, 1.442695
    %v3655 = vpow.pop %v3654
    %v3656 = vmul.f32 %v3578, 1.442695
    %v3657 = vpow.pop %v3656
    %v3658 = vmul.f32 %v3579, 1.442695
    %v3659 = vpow.pop %v3658
    %v3660 = vmul.f32 %v3580, 1.442695
    %v3661 = vpow.pop %v3660
    %v3662 = vmul.f32 %v3581, 1.442695
    %v3663 = vpow.pop %v3662
    %v3664 = vmul.f32 %v3582, 1.442695
    %v3665 = vpow.pop %v3664
    %v3666 = vmul.f32 %v3583, 1.442695
    %v3667 = vpow.pop %v3666
    %v3668 = vmul.f32 %v3584, 1.442695
    %v3669 = vpow.pop %v3668
    %v3670 = vmul.f32 %v3585, 1.442695
    %v3671 = vpow.pop %v3670
    %v3672 = vmul.f32 %v3586, 1.442695
    %v3673 = vpow.pop %v3672
    %v3674 = vmul.f32 %v3587, 1.442695
    %v3675 = vpow.pop %v3674
    %v3676 = vmul.f32 %v3588, 1.442695
    %v3677 = vpow.pop %v3676
    %v3678 = vmul.f32 %v3589, 1.442695
    %v3679 = vpow.pop %v3678
    %v3680 = vmul.f32 %v3590, 1.442695
    %v3681 = vpow.pop %v3680
    %v3682 = vmul.f32 %v3591, 1.442695
    %v3683 = vpow.pop %v3682
    %v3684 = vmul.f32 %v3592, 1.442695
    %v3685 = vpow.pop %v3684
    %v3686 = vmul.f32 %v3593, 1.442695
    %v3687 = vpow.pop %v3686
    %v3688 = vmul.f32 %v3594, 1.442695
    %v3689 = vpow.pop %v3688
    %v3690 = vmul.f32 %v3595, 1.442695
    %v3691 = vpow.pop %v3690
    %v3692 = vmul.f32 %v3596, 1.442695
    %v3693 = vpow.pop %v3692
    %v3694 = vmul.f32 %v3597, 1.442695
    %v3695 = vpow.pop %v3694
    %v3696 = vmul.f32 %v3598, 1.442695
    %v3697 = vpow.pop %v3696
    %v3698 = vmul.f32 %v3599, 1.442695
    %v3699 = vpow.pop %v3698
    %v3700 = vmul.f32 %v3600, 1.442695
    %v3701 = vpow.pop %v3700
    %v3702 = vmul.f32 %v3601, 1.442695
    %v3703 = vpow.pop %v3702
    %v3704 = vmul.f32 %v3602, 1.442695
    %v3705 = vpow.pop %v3704
    %v3706 = vmul.f32 %v3603, 1.442695
    %v3707 = vpow.pop %v3706
    %v3708 = vmul.f32 %v3604, 1.442695
    %v3709 = vpow.pop %v3708
    %v3710 = vmul.f32 %v3605, 1.442695
    %v3711 = vpow.pop %v3710
    %v3712 = vmul.f32 %v3606, 1.442695
    %v3713 = vpow.pop %v3712
    %v3714 = vmul.f32 %v3607, 1.442695
    %v3715 = vpow.pop %v3714
    %v3716 = vmul.f32 %v3608, 1.442695
    %v3717 = vpow.pop %v3716
    %v3718 = vmul.f32 %v3609, 1.442695
    %v3719 = vpow.pop %v3718
    %v3720 = vmul.f32 %v3610, 1.442695
    %v3721 = vpow.pop %v3720
    %v3722 = vmul.f32 %v3611, 1.442695
    %v3723 = vpow.pop %v3722
    %v3724 = vmul.f32 %v3612, 1.442695
    %v3725 = vpow.pop %v3724
    %v3726 = vmul.f32 %v3613, 1.442695
    %v3727 = vpow.pop %v3726
    %v3728 = vmul.f32 %v3614, 1.442695
    %v3729 = vpow.pop %v3728
    %v3730 = vmul.f32 %v3615, 1.442695
    %v3731 = vpow.pop %v3730
    %v3732 = vmul.f32 %v3616, 1.442695
    %v3733 = vpow.pop %v3732
    %v3734 = vmul.f32 %v3617, 1.442695
    %v3735 = vpow.pop %v3734
    %v3736 = vmul.f32 %v3618, 1.442695
    %v3737 = vpow.pop %v3736
    %v3738 = vmul.f32 %v3619, 1.442695
    %v3739 = vpow.pop %v3738
    %v3740 = vmul.f32 %v3620, 1.442695
    %v3741 = vpow.pop %v3740
    %v3742 = vmul.f32 %v3621, 1.442695
    %v3743 = vpow.pop %v3742
    %v3744 = vmul.f32 %v3622, 1.442695
    %v3745 = vpow.pop %v3744
    %v3746 = vmul.f32 %v3623, 1.442695
    %v3747 = vpow.pop %v3746
    %v3748 = vmul.f32 %v3624, 1.442695
    %v3749 = vpow.pop %v3748
    %v3750 = vmul.f32 %v3625, 1.442695
    %v3751 = vpow.pop %v3750
    %v3752 = vmul.f32 %v3626, 1.442695
    %v3753 = vpow.pop %v3752
    %v3754 = vmul.f32 %v3627, 1.442695
    %v3755 = vpow.pop %v3754
    %v3756 = vmul.f32 %v3628, 1.442695
    %v3757 = vpow.pop %v3756
    %v3758 = vmul.f32 %v3629, 1.442695
    %v3759 = vpow.pop %v3758
    %v3760 = vmul.f32 %v3630, 1.442695
    %v3761 = vpow.pop %v3760
    %v3762 = vmul.f32 %v3631, 1.442695
    %v3763 = vpow.pop %v3762
    %v3764 = vmul.f32 %v3632, 1.442695
    %v3765 = vpow.pop %v3764
    %v3766 = vmul.f32 %v3633, 1.442695
    %v3767 = vpow.pop %v3766
    %v3768 = vmul.f32 %v3634, 1.442695
    %v3769 = vpow.pop %v3768
    %v3770 = vmul.f32 %v3635, 1.442695
    %v3771 = vpow.pop %v3770
    %v3772 = vmul.f32 %v3636, 1.442695
    %v3773 = vpow.pop %v3772
    %v3774 = vmul.f32 %v3637, 1.442695
    %v3775 = vpow.pop %v3774
    %v3776 = vmul.f32 %v3638, 1.442695
    %v3777 = vpow.pop %v3776
    %v3778 = vmul.f32 %v3639, 1.442695
    %v3779 = vpow.pop %v3778
    %v3780 = vadd.f32 %v3641, 1.0
    %v3781 = vadd.f32 %v3643, 1.0
    %v3782 = vadd.f32 %v3645, 1.0
    %v3783 = vadd.f32 %v3647, 1.0
    %v3784 = vadd.f32 %v3649, 1.0
    %v3785 = vadd.f32 %v3651, 1.0
    %v3786 = vadd.f32 %v3653, 1.0
    %v3787 = vadd.f32 %v3655, 1.0
    %v3788 = vadd.f32 %v3657, 1.0
    %v3789 = vadd.f32 %v3659, 1.0
    %v3790 = vadd.f32 %v3661, 1.0
    %v3791 = vadd.f32 %v3663, 1.0
    %v3792 = vadd.f32 %v3665, 1.0
    %v3793 = vadd.f32 %v3667, 1.0
    %v3794 = vadd.f32 %v3669, 1.0
    %v3795 = vadd.f32 %v3671, 1.0
    %v3796 = vadd.f32 %v3673, 1.0
    %v3797 = vadd.f32 %v3675, 1.0
    %v3798 = vadd.f32 %v3677, 1.0
    %v3799 = vadd.f32 %v3679, 1.0
    %v3800 = vadd.f32 %v3681, 1.0
    %v3801 = vadd.f32 %v3683, 1.0
    %v3802 = vadd.f32 %v3685, 1.0
    %v3803 = vadd.f32 %v3687, 1.0
    %v3804 = vadd.f32 %v3689, 1.0
    %v3805 = vadd.f32 %v3691, 1.0
    %v3806 = vadd.f32 %v3693, 1.0
    %v3807 = vadd.f32 %v3695, 1.0
    %v3808 = vadd.f32 %v3697, 1.0
    %v3809 = vadd.f32 %v3699, 1.0
    %v3810 = vadd.f32 %v3701, 1.0
    %v3811 = vadd.f32 %v3703, 1.0
    %v3812 = vadd.f32 %v3705, 1.0
    %v3813 = vadd.f32 %v3707, 1.0
    %v3814 = vadd.f32 %v3709, 1.0
    %v3815 = vadd.f32 %v3711, 1.0
    %v3816 = vadd.f32 %v3713, 1.0
    %v3817 = vadd.f32 %v3715, 1.0
    %v3818 = vadd.f32 %v3717, 1.0
    %v3819 = vadd.f32 %v3719, 1.0
    %v3820 = vadd.f32 %v3721, 1.0
    %v3821 = vadd.f32 %v3723, 1.0
    %v3822 = vadd.f32 %v3725, 1.0
    %v3823 = vadd.f32 %v3727, 1.0
    %v3824 = vadd.f32 %v3729, 1.0
    %v3825 = vadd.f32 %v3731, 1.0
    %v3826 = vadd.f32 %v3733, 1.0
    %v3827 = vadd.f32 %v3735, 1.0
    %v3828 = vadd.f32 %v3737, 1.0
    %v3829 = vadd.f32 %v3739, 1.0
    %v3830 = vadd.f32 %v3741, 1.0
    %v3831 = vadd.f32 %v3743, 1.0
    %v3832 = vadd.f32 %v3745, 1.0
    %v3833 = vadd.f32 %v3747, 1.0
    %v3834 = vadd.f32 %v3749, 1.0
    %v3835 = vadd.f32 %v3751, 1.0
    %v3836 = vadd.f32 %v3753, 1.0
    %v3837 = vadd.f32 %v3755, 1.0
    %v3838 = vadd.f32 %v3757, 1.0
    %v3839 = vadd.f32 %v3759, 1.0
    %v3840 = vadd.f32 %v3761, 1.0
    %v3841 = vadd.f32 %v3763, 1.0
    %v3842 = vadd.f32 %v3765, 1.0
    %v3843 = vadd.f32 %v3767, 1.0
    %v3844 = vadd.f32 %v3769, 1.0
    %v3845 = vadd.f32 %v3771, 1.0
    %v3846 = vadd.f32 %v3773, 1.0
    %v3847 = vadd.f32 %v3775, 1.0
    %v3848 = vadd.f32 %v3777, 1.0
    %v3849 = vadd.f32 %v3779, 1.0
    %v3850 = vrcp.pop %v3780
    %v3851 = vmul.f32 1.0, %v3850
    %v3852 = vrcp.pop %v3781
    %v3853 = vmul.f32 1.0, %v3852
    %v3854 = vrcp.pop %v3782
    %v3855 = vmul.f32 1.0, %v3854
    %v3856 = vrcp.pop %v3783
    %v3857 = vmul.f32 1.0, %v3856
    %v3858 = vrcp.pop %v3784
    %v3859 = vmul.f32 1.0, %v3858
    %v3860 = vrcp.pop %v3785
    %v3861 = vmul.f32 1.0, %v3860
    %v3862 = vrcp.pop %v3786
    %v3863 = vmul.f32 1.0, %v3862
    %v3864 = vrcp.pop %v3787
    %v3865 = vmul.f32 1.0, %v3864
    %v3866 = vrcp.pop %v3788
    %v3867 = vmul.f32 1.0, %v3866
    %v3868 = vrcp.pop %v3789
    %v3869 = vmul.f32 1.0, %v3868
    %v3870 = vrcp.pop %v3790
    %v3871 = vmul.f32 1.0, %v3870
    %v3872 = vrcp.pop %v3791
    %v3873 = vmul.f32 1.0, %v3872
    %v3874 = vrcp.pop %v3792
    %v3875 = vmul.f32 1.0, %v3874
    %v3876 = vrcp.pop %v3793
    %v3877 = vmul.f32 1.0, %v3876
    %v3878 = vrcp.pop %v3794
    %v3879 = vmul.f32 1.0, %v3878
    %v3880 = vrcp.pop %v3795
    %v3881 = vmul.f32 1.0, %v3880
    %v3882 = vrcp.pop %v3796
    %v3883 = vmul.f32 1.0, %v3882
    %v3884 = vrcp.pop %v3797
    %v3885 = vmul.f32 1.0, %v3884
    %v3886 = vrcp.pop %v3798
    %v3887 = vmul.f32 1.0, %v3886
    %v3888 = vrcp.pop %v3799
    %v3889 = vmul.f32 1.0, %v3888
    %v3890 = vrcp.pop %v3800
    %v3891 = vmul.f32 1.0, %v3890
    %v3892 = vrcp.pop %v3801
    %v3893 = vmul.f32 1.0, %v3892
    %v3894 = vrcp.pop %v3802
    %v3895 = vmul.f32 1.0, %v3894
    %v3896 = vrcp.pop %v3803
    %v3897 = vmul.f32 1.0, %v3896
    %v3898 = vrcp.pop %v3804
    %v3899 = vmul.f32 1.0, %v3898
    %v3900 = vrcp.pop %v3805
    %v3901 = vmul.f32 1.0, %v3900
    %v3902 = vrcp.pop %v3806
    %v3903 = vmul.f32 1.0, %v3902
    %v3904 = vrcp.pop %v3807
    %v3905 = vmul.f32 1.0, %v3904
    %v3906 = vrcp.pop %v3808
    %v3907 = vmul.f32 1.0, %v3906
    %v3908 = vrcp.pop %v3809
    %v3909 = vmul.f32 1.0, %v3908
    %v3910 = vrcp.pop %v3810
    %v3911 = vmul.f32 1.0, %v3910
    %v3912 = vrcp.pop %v3811
    %v3913 = vmul.f32 1.0, %v3912
    %v3914 = vrcp.pop %v3812
    %v3915 = vmul.f32 1.0, %v3914
    %v3916 = vrcp.pop %v3813
    %v3917 = vmul.f32 1.0, %v3916
    %v3918 = vrcp.pop %v3814
    %v3919 = vmul.f32 1.0, %v3918
    %v3920 = vrcp.pop %v3815
    %v3921 = vmul.f32 1.0, %v3920
    %v3922 = vrcp.pop %v3816
    %v3923 = vmul.f32 1.0, %v3922
    %v3924 = vrcp.pop %v3817
    %v3925 = vmul.f32 1.0, %v3924
    %v3926 = vrcp.pop %v3818
    %v3927 = vmul.f32 1.0, %v3926
    %v3928 = vrcp.pop %v3819
    %v3929 = vmul.f32 1.0, %v3928
    %v3930 = vrcp.pop %v3820
    %v3931 = vmul.f32 1.0, %v3930
    %v3932 = vrcp.pop %v3821
    %v3933 = vmul.f32 1.0, %v3932
    %v3934 = vrcp.pop %v3822
    %v3935 = vmul.f32 1.0, %v3934
    %v3936 = vrcp.pop %v3823
    %v3937 = vmul.f32 1.0, %v3936
    %v3938 = vrcp.pop %v3824
    %v3939 = vmul.f32 1.0, %v3938
    %v3940 = vrcp.pop %v3825
    %v3941 = vmul.f32 1.0, %v3940
    %v3942 = vrcp.pop %v3826
    %v3943 = vmul.f32 1.0, %v3942
    %v3944 = vrcp.pop %v3827
    %v3945 = vmul.f32 1.0, %v3944
    %v3946 = vrcp.pop %v3828
    %v3947 = vmul.f32 1.0, %v3946
    %v3948 = vrcp.pop %v3829
    %v3949 = vmul.f32 1.0, %v3948
    %v3950 = vrcp.pop %v3830
    %v3951 = vmul.f32 1.0, %v3950
    %v3952 = vrcp.pop %v3831
    %v3953 = vmul.f32 1.0, %v3952
    %v3954 = vrcp.pop %v3832
    %v3955 = vmul.f32 1.0, %v3954
    %v3956 = vrcp.pop %v3833
    %v3957 = vmul.f32 1.0, %v3956
    %v3958 = vrcp.pop %v3834
    %v3959 = vmul.f32 1.0, %v3958
    %v3960 = vrcp.pop %v3835
    %v3961 = vmul.f32 1.0, %v3960
    %v3962 = vrcp.pop %v3836
    %v3963 = vmul.f32 1.0, %v3962
    %v3964 = vrcp.pop %v3837
    %v3965 = vmul.f32 1.0, %v3964
    %v3966 = vrcp.pop %v3838
    %v3967 = vmul.f32 1.0, %v3966
    %v3968 = vrcp.pop %v3839
    %v3969 = vmul.f32 1.0, %v3968
    %v3970 = vrcp.pop %v3840
    %v3971 = vmul.f32 1.0, %v3970
    %v3972 = vrcp.pop %v3841
    %v3973 = vmul.f32 1.0, %v3972
    %v3974 = vrcp.pop %v3842
    %v3975 = vmul.f32 1.0, %v3974
    %v3976 = vrcp.pop %v3843
    %v3977 = vmul.f32 1.0, %v3976
    %v3978 = vrcp.pop %v3844
    %v3979 = vmul.f32 1.0, %v3978
    %v3980 = vrcp.pop %v3845
    %v3981 = vmul.f32 1.0, %v3980
    %v3982 = vrcp.pop %v3846
    %v3983 = vmul.f32 1.0, %v3982
    %v3984 = vrcp.pop %v3847
    %v3985 = vmul.f32 1.0, %v3984
    %v3986 = vrcp.pop %v3848
    %v3987 = vmul.f32 1.0, %v3986
    %v3988 = vrcp.pop %v3849
    %v3989 = vmul.f32 1.0, %v3988
    %v3990 = vmul.f32 %v2966, %v3851
    %v3991 = vmul.f32 %v2968, %v3853
    %v3992 = vmul.f32 %v3108, %v3855
    %v3993 = vmul.f32 %v3110, %v3857
    %v3994 = vmul.f32 %v3250, %v3859
    %v3995 = vmul.f32 %v3252, %v3861
    %v3996 = vmul.f32 %v3392, %v3863
    %v3997 = vmul.f32 %v3394, %v3865
    %v3998 = vmul.f32 %v3534, %v3867
    %v3999 = vmul.f32 %v3536, %v3869
    %v4000 = vmul.f32 %v2970, %v3871
    %v4001 = vmul.f32 %v2972, %v3873
    %v4002 = vmul.f32 %v3112, %v3875
    %v4003 = vmul.f32 %v3114, %v3877
    %v4004 = vmul.f32 %v3254, %v3879
    %v4005 = vmul.f32 %v3256, %v3881
    %v4006 = vmul.f32 %v3396, %v3883
    %v4007 = vmul.f32 %v3398, %v3885
    %v4008 = vmul.f32 %v3538, %v3887
    %v4009 = vmul.f32 %v3540, %v3889
    %v4010 = vmul.f32 %v2976, %v3891
    %v4011 = vmul.f32 %v2978, %v3893
    %v4012 = vmul.f32 %v3118, %v3895
    %v4013 = vmul.f32 %v3120, %v3897
    %v4014 = vmul.f32 %v3260, %v3899
    %v4015 = vmul.f32 %v3262, %v3901
    %v4016 = vmul.f32 %v3402, %v3903
    %v4017 = vmul.f32 %v3404, %v3905
    %v4018 = vmul.f32 %v3544, %v3907
    %v4019 = vmul.f32 %v3546, %v3909
    %v4020 = vmul.f32 %v2980, %v3911
    %v4021 = vmul.f32 %v2982, %v3913
    %v4022 = vmul.f32 %v3122, %v3915
    %v4023 = vmul.f32 %v3124, %v3917
    %v4024 = vmul.f32 %v3264, %v3919
    %v4025 = vmul.f32 %v3266, %v3921
    %v4026 = vmul.f32 %v3406, %v3923
    %v4027 = vmul.f32 %v3408, %v3925
    %v4028 = vmul.f32 %v3548, %v3927
    %v4029 = vmul.f32 %v3550, %v3929
    %v4030 = vmul.f32 %v2986, %v3931
    %v4031 = vmul.f32 %v2988, %v3933
    %v4032 = vmul.f32 %v3128, %v3935
    %v4033 = vmul.f32 %v3130, %v3937
    %v4034 = vmul.f32 %v3270, %v3939
    %v4035 = vmul.f32 %v3272, %v3941
    %v4036 = vmul.f32 %v3412, %v3943
    %v4037 = vmul.f32 %v3414, %v3945
    %v4038 = vmul.f32 %v3554, %v3947
    %v4039 = vmul.f32 %v3556, %v3949
    %v4040 = vmul.f32 %v2990, %v3951
    %v4041 = vmul.f32 %v2992, %v3953
    %v4042 = vmul.f32 %v3132, %v3955
    %v4043 = vmul.f32 %v3134, %v3957
    %v4044 = vmul.f32 %v3274, %v3959
    %v4045 = vmul.f32 %v3276, %v3961
    %v4046 = vmul.f32 %v3416, %v3963
    %v4047 = vmul.f32 %v3418, %v3965
    %v4048 = vmul.f32 %v3558, %v3967
    %v4049 = vmul.f32 %v3560, %v3969
    %v4050 = vmul.f32 %v2996, %v3971
    %v4051 = vmul.f32 %v2998, %v3973
    %v4052 = vmul.f32 %v3138, %v3975
    %v4053 = vmul.f32 %v3140, %v3977
    %v4054 = vmul.f32 %v3280, %v3979
    %v4055 = vmul.f32 %v3282, %v3981
    %v4056 = vmul.f32 %v3422, %v3983
    %v4057 = vmul.f32 %v3424, %v3985
    %v4058 = vmul.f32 %v3564, %v3987
    %v4059 = vmul.f32 %v3566, %v3989
    %v4060 = vadd.f32 %v3990, %v4000
    %v4061 = vadd.f32 %v4060, %v4010
    %v4062 = vadd.f32 %v4061, %v4020
    %v4063 = vadd.f32 %v4062, %v4030
    %v4064 = vadd.f32 %v4063, %v4040
    %v4065 = vsel %vm2602, %v4050, 0.0
    %v4066 = vadd.f32 %v4064, %v4065
    %v4067 = vrot.slane %v4066, 4
    %v4068 = vadd.f32 %v4066, %v4067
    %v4069 = vrot.slane %v4068, 2
    %v4070 = vadd.f32 %v4068, %v4069
    %v4071 = vrot.slane %v4070, 1
    %v4072 = vadd.f32 %v4070, %v4071
    %v4073 = vadd.f32 %v3991, %v4001
    %v4074 = vadd.f32 %v4073, %v4011
    %v4075 = vadd.f32 %v4074, %v4021
    %v4076 = vadd.f32 %v4075, %v4031
    %v4077 = vadd.f32 %v4076, %v4041
    %v4078 = vsel %vm2602, %v4051, 0.0
    %v4079 = vadd.f32 %v4077, %v4078
    %v4080 = vrot.slane %v4079, 4
    %v4081 = vadd.f32 %v4079, %v4080
    %v4082 = vrot.slane %v4081, 2
    %v4083 = vadd.f32 %v4081, %v4082
    %v4084 = vrot.slane %v4083, 1
    %v4085 = vadd.f32 %v4083, %v4084
    %v4086 = vadd.f32 %v3992, %v4002
    %v4087 = vadd.f32 %v4086, %v4012
    %v4088 = vadd.f32 %v4087, %v4022
    %v4089 = vadd.f32 %v4088, %v4032
    %v4090 = vadd.f32 %v4089, %v4042
    %v4091 = vsel %vm2602, %v4052, 0.0
    %v4092 = vadd.f32 %v4090, %v4091
    %v4093 = vrot.slane %v4092, 4
    %v4094 = vadd.f32 %v4092, %v4093
    %v4095 = vrot.slane %v4094, 2
    %v4096 = vadd.f32 %v4094, %v4095
    %v4097 = vrot.slane %v4096, 1
    %v4098 = vadd.f32 %v4096, %v4097
    %v4099 = vadd.f32 %v3993, %v4003
    %v4100 = vadd.f32 %v4099, %v4013
    %v4101 = vadd.f32 %v4100, %v4023
    %v4102 = vadd.f32 %v4101, %v4033
    %v4103 = vadd.f32 %v4102, %v4043
    %v4104 = vsel %vm2602, %v4053, 0.0
    %v4105 = vadd.f32 %v4103, %v4104
    %v4106 = vrot.slane %v4105, 4
    %v4107 = vadd.f32 %v4105, %v4106
    %v4108 = vrot.slane %v4107, 2
    %v4109 = vadd.f32 %v4107, %v4108
    %v4110 = vrot.slane %v4109, 1
    %v4111 = vadd.f32 %v4109, %v4110
    %v4112 = vadd.f32 %v3994, %v4004
    %v4113 = vadd.f32 %v4112, %v4014
    %v4114 = vadd.f32 %v4113, %v4024
    %v4115 = vadd.f32 %v4114, %v4034
    %v4116 = vadd.f32 %v4115, %v4044
    %v4117 = vsel %vm2602, %v4054, 0.0
    %v4118 = vadd.f32 %v4116, %v4117
    %v4119 = vrot.slane %v4118, 4
    %v4120 = vadd.f32 %v4118, %v4119
    %v4121 = vrot.slane %v4120, 2
    %v4122 = vadd.f32 %v4120, %v4121
    %v4123 = vrot.slane %v4122, 1
    %v4124 = vadd.f32 %v4122, %v4123
    %v4125 = vadd.f32 %v3995, %v4005
    %v4126 = vadd.f32 %v4125, %v4015
    %v4127 = vadd.f32 %v4126, %v4025
    %v4128 = vadd.f32 %v4127, %v4035
    %v4129 = vadd.f32 %v4128, %v4045
    %v4130 = vsel %vm2602, %v4055, 0.0
    %v4131 = vadd.f32 %v4129, %v4130
    %v4132 = vrot.slane %v4131, 4
    %v4133 = vadd.f32 %v4131, %v4132
    %v4134 = vrot.slane %v4133, 2
    %v4135 = vadd.f32 %v4133, %v4134
    %v4136 = vrot.slane %v4135, 1
    %v4137 = vadd.f32 %v4135, %v4136
    %v4138 = vadd.f32 %v3996, %v4006
    %v4139 = vadd.f32 %v4138, %v4016
    %v4140 = vadd.f32 %v4139, %v4026
    %v4141 = vadd.f32 %v4140, %v4036
    %v4142 = vadd.f32 %v4141, %v4046
    %v4143 = vsel %vm2602, %v4056, 0.0
    %v4144 = vadd.f32 %v4142, %v4143
    %v4145 = vrot.slane %v4144, 4
    %v4146 = vadd.f32 %v4144, %v4145
    %v4147 = vrot.slane %v4146, 2
    %v4148 = vadd.f32 %v4146, %v4147
    %v4149 = vrot.slane %v4148, 1
    %v4150 = vadd.f32 %v4148, %v4149
    %v4151 = vadd.f32 %v3997, %v4007
    %v4152 = vadd.f32 %v4151, %v4017
    %v4153 = vadd.f32 %v4152, %v4027
    %v4154 = vadd.f32 %v4153, %v4037
    %v4155 = vadd.f32 %v4154, %v4047
    %v4156 = vsel %vm2602, %v4057, 0.0
    %v4157 = vadd.f32 %v4155, %v4156
    %v4158 = vrot.slane %v4157, 4
    %v4159 = vadd.f32 %v4157, %v4158
    %v4160 = vrot.slane %v4159, 2
    %v4161 = vadd.f32 %v4159, %v4160
    %v4162 = vrot.slane %v4161, 1
    %v4163 = vadd.f32 %v4161, %v4162
    %v4164 = vadd.f32 %v3998, %v4008
    %v4165 = vadd.f32 %v4164, %v4018
    %v4166 = vadd.f32 %v4165, %v4028
    %v4167 = vadd.f32 %v4166, %v4038
    %v4168 = vadd.f32 %v4167, %v4048
    %v4169 = vsel %vm2602, %v4058, 0.0
    %v4170 = vadd.f32 %v4168, %v4169
    %v4171 = vrot.slane %v4170, 4
    %v4172 = vadd.f32 %v4170, %v4171
    %v4173 = vrot.slane %v4172, 2
    %v4174 = vadd.f32 %v4172, %v4173
    %v4175 = vrot.slane %v4174, 1
    %v4176 = vadd.f32 %v4174, %v4175
    %v4177 = vadd.f32 %v3999, %v4009
    %v4178 = vadd.f32 %v4177, %v4019
    %v4179 = vadd.f32 %v4178, %v4029
    %v4180 = vadd.f32 %v4179, %v4039
    %v4181 = vadd.f32 %v4180, %v4049
    %v4182 = vsel %vm2602, %v4059, 0.0
    %v4183 = vadd.f32 %v4181, %v4182
    %v4184 = vrot.slane %v4183, 4
    %v4185 = vadd.f32 %v4183, %v4184
    %v4186 = vrot.slane %v4185, 2
    %v4187 = vadd.f32 %v4185, %v4186
    %v4188 = vrot.slane %v4187, 1
    %v4189 = vadd.f32 %v4187, %v4188
    %v4190 = vmul.f32 %v4072, %v2728
    %v4191 = vmul.f32 %v4085, %v2728
    %v4192 = vmul.f32 %v4098, %v2728
    %v4193 = vmul.f32 %v4111, %v2728
    %v4194 = vmul.f32 %v4124, %v2728
    %v4195 = vmul.f32 %v4137, %v2728
    %v4196 = vmul.f32 %v4150, %v2728
    %v4197 = vmul.f32 %v4163, %v2728
    %v4198 = vmul.f32 %v4176, %v2728
    %v4199 = vmul.f32 %v4189, %v2728
    %v4200 = vsel %vm2602, %v2729, %v4190
    %v4201 = vsel %vm2602, %v2730, %v4191
    %v4202 = vsel %vm2602, %v2731, %v4192
    %v4203 = vsel %vm2602, %v2732, %v4193
    %v4204 = vsel %vm2602, %v2733, %v4194
    %v4205 = vsel %vm2602, %v2734, %v4195
    %v4206 = vsel %vm2602, %v2735, %v4196
    %v4207 = vsel %vm2602, %v2736, %v4197
    %v4208 = vsel %vm2602, %v2737, %v4198
    %v4209 = vsel %vm2602, %v2738, %v4199
    %v4210 = vpack.c.bf16 %v4200, %v4200
    %v4211 = vpack.c.bf16 %v4201, %v4201
    %v4212 = vpack.c.bf16 %v4202, %v4202
    %v4213 = vpack.c.bf16 %v4203, %v4203
    %v4214 = vpack.c.bf16 %v4204, %v4204
    %v4215 = vpack.c.bf16 %v4205, %v4205
    %v4216 = vpack.c.bf16 %v4206, %v4206
    %v4217 = vpack.c.bf16 %v4207, %v4207
    %v4218 = vpack.c.bf16 %v4208, %v4208
    %v4219 = vpack.c.bf16 %v4209, %v4209
    %v4220 = vld [vmem:[%s3] sm:$0xf]
    %v4221 = vld [vmem:[%s3 + $0x4] sm:$0xf]
    %v4222 = vld [vmem:[%s3 + $0x8] sm:$0xf]
    %v4223 = vld [vmem:[%s3 + $0xc] sm:$0xf]
    %v4224 = vld [vmem:[%s3 + $0x10] sm:$0xf]
    %v4225 = vld [vmem:[%s3 + $0x14] sm:$0xf]
    %v4226 = vld [vmem:[%s3 + $0x18] sm:$0xf]
    %v4227 = vld [vmem:[%s3 + $0x1c] sm:$0xf]
    %v4228 = vld [vmem:[%s3 + $0x20] sm:$0xf]
    %v4229 = vld [vmem:[%s3 + $0x24] sm:$0xf]
    %v4230 = vld [vmem:[%s3 + $0x28] sm:$0xf]
    %v4231 = vld [vmem:[%s3 + $0x2c] sm:$0xf]
    %v4232 = vld [vmem:[%s3 + $0x30] sm:$0xf]
    %v4233 = vld [vmem:[%s3 + $0x34] sm:$0xf]
    %v4234 = vld [vmem:[%s3 + $0x38] sm:$0xf]
    %v4235 = vld [vmem:[%s3 + $0x3c] sm:$0xf]
    %v4236 = vld [vmem:[%s3 + $0x40] sm:$0xf]
    %v4237 = vld [vmem:[%s3 + $0x44] sm:$0xf]
    %v4238 = vld [vmem:[%s3 + $0x48] sm:$0xf]
    %v4239 = vld [vmem:[%s3 + $0x4c] sm:$0xf]
    %v4240 = vld [vmem:[%s3 + $0x50] sm:$0xf]
    %v4241 = vld [vmem:[%s3 + $0x54] sm:$0xf]
    %v4242 = vld [vmem:[%s3 + $0x58] sm:$0xf]
    %v4243 = vld [vmem:[%s3 + $0x5c] sm:$0xf]
    %v4244 = vld [vmem:[%s3 + $0x60] sm:$0xf]
    %v4245 = vld [vmem:[%s3 + $0x64] sm:$0xf]
    %v4246 = vld [vmem:[%s3 + $0x68] sm:$0xf]
    %v4247 = vld [vmem:[%s3 + $0x6c] sm:$0xf]
    %v4248 = vld [vmem:[%s3 + $0x70] sm:$0xf]
    %v4249 = vld [vmem:[%s3 + $0x74] sm:$0xf]
    %v4250 = vld [vmem:[%s3 + $0x78] sm:$0xf]
    %v4251 = vld [vmem:[%s3 + $0x7c] sm:$0xf]
    %v4252 = vld [vmem:[%s3 + $0x80] sm:$0xf]
    %v4253 = vld [vmem:[%s3 + $0x84] sm:$0xf]
    %v4254 = vld [vmem:[%s3 + $0x88] sm:$0xf]
    %v4255 = vld [vmem:[%s3 + $0x8c] sm:$0xf]
    %v4256 = vld [vmem:[%s3 + $0x90] sm:$0xf]
    %v4257 = vld [vmem:[%s3 + $0x94] sm:$0xf]
    %v4258 = vld [vmem:[%s3 + $0x98] sm:$0xf]
    %v4259 = vld [vmem:[%s3 + $0x9c] sm:$0xf]
    %v4260 = vld [vmem:[%s3 + $0xa0] sm:$0xf]
    %v4261 = vld [vmem:[%s3 + $0xa4] sm:$0xf]
    %v4262 = vld [vmem:[%s3 + $0xa8] sm:$0xf]
    %v4263 = vld [vmem:[%s3 + $0xac] sm:$0xf]
    %v4264 = vld [vmem:[%s3 + $0xb0] sm:$0xf]
    %v4265 = vld [vmem:[%s3 + $0xb4] sm:$0xf]
    %v4266 = vld [vmem:[%s3 + $0xb8] sm:$0xf]
    %v4267 = vld [vmem:[%s3 + $0xbc] sm:$0xf]
    %v4268 = vld [vmem:[%s3 + $0xc0] sm:$0xf]
    %v4269 = vld [vmem:[%s3 + $0xc4] sm:$0xf]
    %v4270 = vld [vmem:[%s3 + $0xc8] sm:$0xf]
    %v4271 = vld [vmem:[%s3 + $0xcc] sm:$0xf]
    %v4272 = vld [vmem:[%s3 + $0xd0] sm:$0xf]
    %v4273 = vld [vmem:[%s3 + $0xd4] sm:$0xf]
    %v4274 = vld [vmem:[%s3 + $0xd8] sm:$0xf]
    %v4275 = vld [vmem:[%s3 + $0xdc] sm:$0xf]
    %v4276 = vld [vmem:[%s3 + $0xe0] sm:$0xf]
    %v4277 = vld [vmem:[%s3 + $0xe4] sm:$0xf]
    %v4278 = vld [vmem:[%s3 + $0xe8] sm:$0xf]
    %v4279 = vld [vmem:[%s3 + $0xec] sm:$0xf]
    %v4280 = vld [vmem:[%s3 + $0xf0] sm:$0xf]
    %v4281 = vld [vmem:[%s3 + $0xf4] sm:$0xf]
    %v4282 = vld [vmem:[%s3 + $0xf8] sm:$0xf]
    %v4283 = vld [vmem:[%s3 + $0xfc] sm:$0xf]
    %v4284 = vld [vmem:[%s3 + $0x100] sm:$0xf]
    %v4285 = vld [vmem:[%s3 + $0x104] sm:$0xf]
    %v4286 = vld [vmem:[%s3 + $0x108] sm:$0xf]
    %v4287 = vld [vmem:[%s3 + $0x10c] sm:$0xf]
    %v4288 = vld [vmem:[%s3 + $0x110] sm:$0xf]
    %v4289 = vld [vmem:[%s3 + $0x114] sm:$0xf]
    %v4290 = vld [vmem:[%s3 + $0x118] sm:$0xf]
    %v4291 = vld [vmem:[%s3 + $0x11c] sm:$0xf]
    %v4292 = vld [vmem:[%s3 + $0x120] sm:$0xf]
    %v4293 = vld [vmem:[%s3 + $0x124] sm:$0xf]
    %v4294 = vld [vmem:[%s3 + $0x128] sm:$0xf]
    %v4295 = vld [vmem:[%s3 + $0x12c] sm:$0xf]
    %v4296 = vld [vmem:[%s3 + $0x130] sm:$0xf]
    %v4297 = vld [vmem:[%s3 + $0x134] sm:$0xf]
    %v4298 = vld [vmem:[%s3 + $0x138] sm:$0xf]
    %v4299 = vld [vmem:[%s3 + $0x13c] sm:$0xf]
    %v4300 = vld [vmem:[%s3 + $0x140] sm:$0xf]
    %v4301 = vld [vmem:[%s3 + $0x144] sm:$0xf]
    %v4302 = vld [vmem:[%s3 + $0x148] sm:$0xf]
    %v4303 = vld [vmem:[%s3 + $0x14c] sm:$0xf]
    %v4304 = vld [vmem:[%s3 + $0x150] sm:$0xf]
    %v4305 = vld [vmem:[%s3 + $0x154] sm:$0xf]
    %v4306 = vld [vmem:[%s3 + $0x158] sm:$0xf]
    %v4307 = vld [vmem:[%s3 + $0x15c] sm:$0xf]
    %v4308 = vld [vmem:[%s3 + $0x160] sm:$0xf]
    %v4309 = vld [vmem:[%s3 + $0x164] sm:$0xf]
    %v4310 = vld [vmem:[%s3 + $0x168] sm:$0xf]
    %v4311 = vld [vmem:[%s3 + $0x16c] sm:$0xf]
    %v4312 = vld [vmem:[%s3 + $0x170] sm:$0xf]
    %v4313 = vld [vmem:[%s3 + $0x174] sm:$0xf]
    %v4314 = vld [vmem:[%s3 + $0x178] sm:$0xf]
    %v4315 = vld [vmem:[%s3 + $0x17c] sm:$0xf]
    %v4316 = vld [vmem:[%s3 + $0x180] sm:$0xf]
    %v4317 = vld [vmem:[%s3 + $0x184] sm:$0xf]
    %v4318 = vld [vmem:[%s3 + $0x188] sm:$0xf]
    %v4319 = vld [vmem:[%s3 + $0x18c] sm:$0xf]
    %v4320 = vld [vmem:[%s3 + $0x190] sm:$0xf]
    %v4321 = vld [vmem:[%s3 + $0x194] sm:$0xf]
    %v4322 = vld [vmem:[%s3 + $0x198] sm:$0xf]
    %v4323 = vld [vmem:[%s3 + $0x19c] sm:$0xf]
    %v4324 = vld [vmem:[%s3 + $0x1a0] sm:$0xf]
    %v4325 = vld [vmem:[%s3 + $0x1a4] sm:$0xf]
    %v4326 = vld [vmem:[%s3 + $0x1a8] sm:$0xf]
    %v4327 = vld [vmem:[%s3 + $0x1ac] sm:$0xf]
    %v4328 = vld [vmem:[%s3 + $0x1b0] sm:$0xf]
    %v4329 = vld [vmem:[%s3 + $0x1b4] sm:$0xf]
    %v4330 = vld [vmem:[%s3 + $0x1b8] sm:$0xf]
    %v4331 = vld [vmem:[%s3 + $0x1bc] sm:$0xf]
    %v4332 = vld [vmem:[%s3 + $0x1c0] sm:$0xf]
    %v4333 = vld [vmem:[%s3 + $0x1c4] sm:$0xf]
    %v4334 = vld [vmem:[%s3 + $0x1c8] sm:$0xf]
    %v4335 = vld [vmem:[%s3 + $0x1cc] sm:$0xf]
    %v4336 = vld [vmem:[%s3 + $0x1d0] sm:$0xf]
    %v4337 = vld [vmem:[%s3 + $0x1d4] sm:$0xf]
    %v4338 = vld [vmem:[%s3 + $0x1d8] sm:$0xf]
    %v4339 = vld [vmem:[%s3 + $0x1dc] sm:$0xf]
    %v4340 = vld [vmem:[%s3 + $0x1e0] sm:$0xf]
    %v4341 = vld [vmem:[%s3 + $0x1e4] sm:$0xf]
    %v4342 = vld [vmem:[%s3 + $0x1e8] sm:$0xf]
    %v4343 = vld [vmem:[%s3 + $0x1ec] sm:$0xf]
    %v4344 = vld [vmem:[%s3 + $0x1f0] sm:$0xf]
    %v4345 = vld [vmem:[%s3 + $0x1f4] sm:$0xf]
    %v4346 = vld [vmem:[%s3 + $0x1f8] sm:$0xf]
    %v4347 = vld [vmem:[%s3 + $0x1fc] sm:$0xf]
    %v4348 = vld [vmem:[%s3 + $0x200] sm:$0xf]
    %v4349 = vld [vmem:[%s3 + $0x204] sm:$0xf]
    %v4350 = vld [vmem:[%s3 + $0x208] sm:$0xf]
    %v4351 = vld [vmem:[%s3 + $0x20c] sm:$0xf]
    %v4352 = vld [vmem:[%s3 + $0x210] sm:$0xf]
    %v4353 = vld [vmem:[%s3 + $0x214] sm:$0xf]
    %v4354 = vld [vmem:[%s3 + $0x218] sm:$0xf]
    %v4355 = vld [vmem:[%s3 + $0x21c] sm:$0xf]
    %v4356 = vld [vmem:[%s3 + $0x220] sm:$0xf]
    %v4357 = vld [vmem:[%s3 + $0x224] sm:$0xf]
    %v4358 = vld [vmem:[%s3 + $0x228] sm:$0xf]
    %v4359 = vld [vmem:[%s3 + $0x22c] sm:$0xf]
    %v4360 = vld [vmem:[%s3 + $0x230] sm:$0xf]
    %v4361 = vld [vmem:[%s3 + $0x234] sm:$0xf]
    %v4362 = vld [vmem:[%s3 + $0x238] sm:$0xf]
    %v4363 = vld [vmem:[%s3 + $0x23c] sm:$0xf]
    %v4364 = vld [vmem:[%s3 + $0x240] sm:$0xf]
    %v4365 = vld [vmem:[%s3 + $0x244] sm:$0xf]
    %v4366 = vld [vmem:[%s3 + $0x248] sm:$0xf]
    %v4367 = vld [vmem:[%s3 + $0x24c] sm:$0xf]
    %v4368 = vld [vmem:[%s3 + $0x250] sm:$0xf]
    %v4369 = vld [vmem:[%s3 + $0x254] sm:$0xf]
    %v4370 = vld [vmem:[%s3 + $0x258] sm:$0xf]
    %v4371 = vld [vmem:[%s3 + $0x25c] sm:$0xf]
    %v4372 = vld [vmem:[%s3 + $0x260] sm:$0xf]
    %v4373 = vld [vmem:[%s3 + $0x264] sm:$0xf]
    %v4374 = vld [vmem:[%s3 + $0x268] sm:$0xf]
    %v4375 = vld [vmem:[%s3 + $0x26c] sm:$0xf]
    %v4376 = vld [vmem:[%s3 + $0x270] sm:$0xf]
    %v4377 = vld [vmem:[%s3 + $0x274] sm:$0xf]
    %v4378 = vld [vmem:[%s3 + $0x278] sm:$0xf]
    %v4379 = vld [vmem:[%s3 + $0x27c] sm:$0xf]
    %v4380 = vld [vmem:[%s4] sm:$0x1]
    %v4382 = vlaneseq
    %v4383 = vshrl.u32 %v4382, 7
    %v4384 = vsub.s32 0, %v4383
    %v4385 = vrot.slane %v4380, %v4384
    %v4547 = vunpack.c.l.b16 %v4220
    %v4548 = vunpack.c.l.b16 %v4221
    %v4549 = vunpack.c.l.b16 %v4222
    %v4550 = vunpack.c.l.b16 %v4223
    %v4551 = vunpack.c.l.b16 %v4224
    %v4552 = vunpack.c.l.b16 %v4225
    %v4553 = vunpack.c.l.b16 %v4226
    %v4554 = vunpack.c.l.b16 %v4227
    %v4555 = vunpack.c.l.b16 %v4228
    %v4556 = vunpack.c.l.b16 %v4229
    %v4557 = vunpack.c.l.b16 %v4230
    %v4558 = vunpack.c.l.b16 %v4231
    %v4559 = vunpack.c.l.b16 %v4232
    %v4560 = vunpack.c.l.b16 %v4233
    %v4561 = vunpack.c.l.b16 %v4234
    %v4562 = vunpack.c.l.b16 %v4235
    %v4563 = vunpack.c.l.b16 %v4236
    %v4564 = vunpack.c.l.b16 %v4237
    %v4565 = vunpack.c.l.b16 %v4238
    %v4566 = vunpack.c.l.b16 %v4239
    %v4567 = vunpack.c.l.b16 %v4240
    %v4568 = vunpack.c.l.b16 %v4241
    %v4569 = vunpack.c.l.b16 %v4242
    %v4570 = vunpack.c.l.b16 %v4243
    %v4571 = vunpack.c.l.b16 %v4244
    %v4572 = vunpack.c.l.b16 %v4245
    %v4573 = vunpack.c.l.b16 %v4246
    %v4574 = vunpack.c.l.b16 %v4247
    %v4575 = vunpack.c.l.b16 %v4248
    %v4576 = vunpack.c.l.b16 %v4249
    %v4577 = vunpack.c.l.b16 %v4250
    %v4578 = vunpack.c.l.b16 %v4251
    %v4579 = vunpack.c.l.b16 %v4252
    %v4580 = vunpack.c.l.b16 %v4253
    %v4581 = vunpack.c.l.b16 %v4254
    %v4582 = vunpack.c.l.b16 %v4255
    %v4583 = vunpack.c.l.b16 %v4256
    %v4584 = vunpack.c.l.b16 %v4257
    %v4585 = vunpack.c.l.b16 %v4258
    %v4586 = vunpack.c.l.b16 %v4259
    %v4587 = vunpack.c.l.b16 %v4260
    %v4588 = vunpack.c.l.b16 %v4261
    %v4589 = vunpack.c.l.b16 %v4262
    %v4590 = vunpack.c.l.b16 %v4263
    %v4591 = vunpack.c.l.b16 %v4264
    %v4592 = vunpack.c.l.b16 %v4265
    %v4593 = vunpack.c.l.b16 %v4266
    %v4594 = vunpack.c.l.b16 %v4267
    %v4595 = vunpack.c.l.b16 %v4268
    %v4596 = vunpack.c.l.b16 %v4269
    %v4597 = vunpack.c.l.b16 %v4270
    %v4598 = vunpack.c.l.b16 %v4271
    %v4599 = vunpack.c.l.b16 %v4272
    %v4600 = vunpack.c.l.b16 %v4273
    %v4601 = vunpack.c.l.b16 %v4274
    %v4602 = vunpack.c.l.b16 %v4275
    %v4603 = vunpack.c.l.b16 %v4276
    %v4604 = vunpack.c.l.b16 %v4277
    %v4605 = vunpack.c.l.b16 %v4278
    %v4606 = vunpack.c.l.b16 %v4279
    %v4607 = vunpack.c.l.b16 %v4280
    %v4608 = vunpack.c.l.b16 %v4281
    %v4609 = vunpack.c.l.b16 %v4282
    %v4610 = vunpack.c.l.b16 %v4283
    %v4611 = vunpack.c.l.b16 %v4284
    %v4612 = vunpack.c.l.b16 %v4285
    %v4613 = vunpack.c.l.b16 %v4286
    %v4614 = vunpack.c.l.b16 %v4287
    %v4615 = vunpack.c.l.b16 %v4288
    %v4616 = vunpack.c.l.b16 %v4289
    %v4617 = vunpack.c.l.b16 %v4290
    %v4618 = vunpack.c.l.b16 %v4291
    %v4619 = vunpack.c.l.b16 %v4292
    %v4620 = vunpack.c.l.b16 %v4293
    %v4621 = vunpack.c.l.b16 %v4294
    %v4622 = vunpack.c.l.b16 %v4295
    %v4623 = vunpack.c.l.b16 %v4296
    %v4624 = vunpack.c.l.b16 %v4297
    %v4625 = vunpack.c.l.b16 %v4298
    %v4626 = vunpack.c.l.b16 %v4299
    %v4627 = vunpack.c.l.b16 %v4300
    %v4628 = vunpack.c.l.b16 %v4301
    %v4629 = vunpack.c.l.b16 %v4302
    %v4630 = vunpack.c.l.b16 %v4303
    %v4631 = vunpack.c.l.b16 %v4304
    %v4632 = vunpack.c.l.b16 %v4305
    %v4633 = vunpack.c.l.b16 %v4306
    %v4634 = vunpack.c.l.b16 %v4307
    %v4635 = vunpack.c.l.b16 %v4308
    %v4636 = vunpack.c.l.b16 %v4309
    %v4637 = vunpack.c.l.b16 %v4310
    %v4638 = vunpack.c.l.b16 %v4311
    %v4639 = vunpack.c.l.b16 %v4312
    %v4640 = vunpack.c.l.b16 %v4313
    %v4641 = vunpack.c.l.b16 %v4314
    %v4642 = vunpack.c.l.b16 %v4315
    %v4643 = vunpack.c.l.b16 %v4316
    %v4644 = vunpack.c.l.b16 %v4317
    %v4645 = vunpack.c.l.b16 %v4318
    %v4646 = vunpack.c.l.b16 %v4319
    %v4647 = vunpack.c.l.b16 %v4320
    %v4648 = vunpack.c.l.b16 %v4321
    %v4649 = vunpack.c.l.b16 %v4322
    %v4650 = vunpack.c.l.b16 %v4323
    %v4651 = vunpack.c.l.b16 %v4324
    %v4652 = vunpack.c.l.b16 %v4325
    %v4653 = vunpack.c.l.b16 %v4326
    %v4654 = vunpack.c.l.b16 %v4327
    %v4655 = vunpack.c.l.b16 %v4328
    %v4656 = vunpack.c.l.b16 %v4329
    %v4657 = vunpack.c.l.b16 %v4330
    %v4658 = vunpack.c.l.b16 %v4331
    %v4659 = vunpack.c.l.b16 %v4332
    %v4660 = vunpack.c.l.b16 %v4333
    %v4661 = vunpack.c.l.b16 %v4334
    %v4662 = vunpack.c.l.b16 %v4335
    %v4663 = vunpack.c.l.b16 %v4336
    %v4664 = vunpack.c.l.b16 %v4337
    %v4665 = vunpack.c.l.b16 %v4338
    %v4666 = vunpack.c.l.b16 %v4339
    %v4667 = vunpack.c.l.b16 %v4340
    %v4668 = vunpack.c.l.b16 %v4341
    %v4669 = vunpack.c.l.b16 %v4342
    %v4670 = vunpack.c.l.b16 %v4343
    %v4671 = vunpack.c.l.b16 %v4344
    %v4672 = vunpack.c.l.b16 %v4345
    %v4673 = vunpack.c.l.b16 %v4346
    %v4674 = vunpack.c.l.b16 %v4347
    %v4675 = vunpack.c.l.b16 %v4348
    %v4676 = vunpack.c.l.b16 %v4349
    %v4677 = vunpack.c.l.b16 %v4350
    %v4678 = vunpack.c.l.b16 %v4351
    %v4679 = vunpack.c.l.b16 %v4352
    %v4680 = vunpack.c.l.b16 %v4353
    %v4681 = vunpack.c.l.b16 %v4354
    %v4682 = vunpack.c.l.b16 %v4355
    %v4683 = vunpack.c.l.b16 %v4356
    %v4684 = vunpack.c.l.b16 %v4357
    %v4685 = vunpack.c.l.b16 %v4358
    %v4686 = vunpack.c.l.b16 %v4359
    %v4687 = vunpack.c.l.b16 %v4360
    %v4688 = vunpack.c.l.b16 %v4361
    %v4689 = vunpack.c.l.b16 %v4362
    %v4690 = vunpack.c.l.b16 %v4363
    %v4691 = vunpack.c.l.b16 %v4364
    %v4692 = vunpack.c.l.b16 %v4365
    %v4693 = vunpack.c.l.b16 %v4366
    %v4694 = vunpack.c.l.b16 %v4367
    %v4695 = vunpack.c.l.b16 %v4368
    %v4696 = vunpack.c.l.b16 %v4369
    %v4697 = vunpack.c.l.b16 %v4370
    %v4698 = vunpack.c.l.b16 %v4371
    %v4699 = vunpack.c.l.b16 %v4372
    %v4700 = vunpack.c.l.b16 %v4373
    %v4701 = vunpack.c.l.b16 %v4374
    %v4702 = vunpack.c.l.b16 %v4375
    %v4703 = vunpack.c.l.b16 %v4376
    %v4704 = vunpack.c.l.b16 %v4377
    %v4705 = vunpack.c.l.b16 %v4378
    %v4706 = vunpack.c.l.b16 %v4379
    %v4707 = vpack.c.b16 %v4548, %v4547
    %v4708 = vpack.c.b16 %v4550, %v4549
    %v4709 = vpack.c.b16 %v4552, %v4551
    %v4710 = vpack.c.b16 %v4554, %v4553
    %v4711 = vpack.c.b16 %v4556, %v4555
    %v4712 = vpack.c.b16 %v4558, %v4557
    %v4713 = vpack.c.b16 %v4560, %v4559
    %v4714 = vpack.c.b16 %v4562, %v4561
    %v4715 = vpack.c.b16 %v4564, %v4563
    %v4716 = vpack.c.b16 %v4566, %v4565
    %v4717 = vpack.c.b16 %v4568, %v4567
    %v4718 = vpack.c.b16 %v4570, %v4569
    %v4719 = vpack.c.b16 %v4572, %v4571
    %v4720 = vpack.c.b16 %v4574, %v4573
    %v4721 = vpack.c.b16 %v4576, %v4575
    %v4722 = vpack.c.b16 %v4578, %v4577
    %v4723 = vpack.c.b16 %v4580, %v4579
    %v4724 = vpack.c.b16 %v4582, %v4581
    %v4725 = vpack.c.b16 %v4584, %v4583
    %v4726 = vpack.c.b16 %v4586, %v4585
    %v4727 = vpack.c.b16 %v4588, %v4587
    %v4728 = vpack.c.b16 %v4590, %v4589
    %v4729 = vpack.c.b16 %v4592, %v4591
    %v4730 = vpack.c.b16 %v4594, %v4593
    %v4731 = vpack.c.b16 %v4596, %v4595
    %v4732 = vpack.c.b16 %v4598, %v4597
    %v4733 = vpack.c.b16 %v4600, %v4599
    %v4734 = vpack.c.b16 %v4602, %v4601
    %v4735 = vpack.c.b16 %v4604, %v4603
    %v4736 = vpack.c.b16 %v4606, %v4605
    %v4737 = vpack.c.b16 %v4608, %v4607
    %v4738 = vpack.c.b16 %v4610, %v4609
    %v4739 = vpack.c.b16 %v4612, %v4611
    %v4740 = vpack.c.b16 %v4614, %v4613
    %v4741 = vpack.c.b16 %v4616, %v4615
    %v4742 = vpack.c.b16 %v4618, %v4617
    %v4743 = vpack.c.b16 %v4620, %v4619
    %v4744 = vpack.c.b16 %v4622, %v4621
    %v4745 = vpack.c.b16 %v4624, %v4623
    %v4746 = vpack.c.b16 %v4626, %v4625
    %v4747 = vpack.c.b16 %v4628, %v4627
    %v4748 = vpack.c.b16 %v4630, %v4629
    %v4749 = vpack.c.b16 %v4632, %v4631
    %v4750 = vpack.c.b16 %v4634, %v4633
    %v4751 = vpack.c.b16 %v4636, %v4635
    %v4752 = vpack.c.b16 %v4638, %v4637
    %v4753 = vpack.c.b16 %v4640, %v4639
    %v4754 = vpack.c.b16 %v4642, %v4641
    %v4755 = vpack.c.b16 %v4644, %v4643
    %v4756 = vpack.c.b16 %v4646, %v4645
    %v4757 = vpack.c.b16 %v4648, %v4647
    %v4758 = vpack.c.b16 %v4650, %v4649
    %v4759 = vpack.c.b16 %v4652, %v4651
    %v4760 = vpack.c.b16 %v4654, %v4653
    %v4761 = vpack.c.b16 %v4656, %v4655
    %v4762 = vpack.c.b16 %v4658, %v4657
    %v4763 = vpack.c.b16 %v4660, %v4659
    %v4764 = vpack.c.b16 %v4662, %v4661
    %v4765 = vpack.c.b16 %v4664, %v4663
    %v4766 = vpack.c.b16 %v4666, %v4665
    %v4767 = vpack.c.b16 %v4668, %v4667
    %v4768 = vpack.c.b16 %v4670, %v4669
    %v4769 = vpack.c.b16 %v4672, %v4671
    %v4770 = vpack.c.b16 %v4674, %v4673
    %v4771 = vpack.c.b16 %v4676, %v4675
    %v4772 = vpack.c.b16 %v4678, %v4677
    %v4773 = vpack.c.b16 %v4680, %v4679
    %v4774 = vpack.c.b16 %v4682, %v4681
    %v4775 = vpack.c.b16 %v4684, %v4683
    %v4776 = vpack.c.b16 %v4686, %v4685
    %v4777 = vpack.c.b16 %v4688, %v4687
    %v4778 = vpack.c.b16 %v4690, %v4689
    %v4779 = vpack.c.b16 %v4692, %v4691
    %v4780 = vpack.c.b16 %v4694, %v4693
    %v4781 = vpack.c.b16 %v4696, %v4695
    %v4782 = vpack.c.b16 %v4698, %v4697
    %v4783 = vpack.c.b16 %v4700, %v4699
    %v4784 = vpack.c.b16 %v4702, %v4701
    %v4785 = vpack.c.b16 %v4704, %v4703
    %v4786 = vpack.c.b16 %v4706, %v4705
    %4867 = vmatprep.subr.bf16.mxu0 0
    %4868 = vmatpush1.bf16.msra.mxu0 %v4714
    %4869 = vmatprep.subr.bf16.mxu0 0
    %4870 = vmatpush1.bf16.msra.mxu0 %v4713
    %4871 = vmatprep.subr.bf16.mxu0 0
    %4872 = vmatpush1.bf16.msra.mxu0 %v4712
    %4873 = vmatprep.subr.bf16.mxu0 0
    %4874 = vmatpush1.bf16.msra.mxu0 %v4711
    %4875 = vmatprep.subr.bf16.mxu0 0
    %4876 = vmatpush1.bf16.msra.mxu0 %v4710
    %4877 = vmatprep.subr.bf16.mxu0 0
    %4878 = vmatpush1.bf16.msra.mxu0 %v4709
    %4879 = vmatprep.subr.bf16.mxu0 0
    %4880 = vmatpush1.bf16.msra.mxu0 %v4708
    %4881 = vmatprep.subr.bf16.mxu0 0
    %4882 = vmatpush1.bf16.msra.mxu0 %v4707
    %4883 = vmatprep.subr.bf16.mxu0 0
    %4884 = vmatpush2.bf16.msra.mxu0 %v4722
    %4885 = vmatprep.subr.bf16.mxu0 0
    %4886 = vmatpush2.bf16.msra.mxu0 %v4721
    %4887 = vmatprep.subr.bf16.mxu0 0
    %4888 = vmatpush2.bf16.msra.mxu0 %v4720
    %4889 = vmatprep.subr.bf16.mxu0 0
    %4890 = vmatpush2.bf16.msra.mxu0 %v4719
    %4891 = vmatprep.subr.bf16.mxu0 0
    %4892 = vmatpush2.bf16.msra.mxu0 %v4718
    %4893 = vmatprep.subr.bf16.mxu0 0
    %4894 = vmatpush2.bf16.msra.mxu0 %v4717
    %4895 = vmatprep.subr.bf16.mxu0 0
    %4896 = vmatpush2.bf16.msra.mxu0 %v4716
    %4897 = vmatprep.subr.bf16.mxu0 0
    %4898 = vmatpush2.bf16.msra.mxu0 %v4715
    %4899 = vmatprep.mubr.bf16.mxu0 %v4211
    %4900 = vmatmul.mubr.bf16.gmra.mxu0 %v4210
    %v4901 = vpop.f32.mrf.mxu0
    %v4902 = vadd.f32 %v4385, %v4901
    %v4903 = vpop.f32.mrf.mxu0
    %v4904 = vpop.f32.mrf.mxu0
    %v4905 = vpop.f32.mrf.mxu0
    %4906 = vdwg.mxu0
    %4907 = vmatprep.subr.bf16.mxu0 0
    %4908 = vmatpush1.bf16.msra.mxu0 %v4730
    %4909 = vmatprep.subr.bf16.mxu0 0
    %4910 = vmatpush1.bf16.msra.mxu0 %v4729
    %4911 = vmatprep.subr.bf16.mxu0 0
    %4912 = vmatpush1.bf16.msra.mxu0 %v4728
    %4913 = vmatprep.subr.bf16.mxu0 0
    %4914 = vmatpush1.bf16.msra.mxu0 %v4727
    %4915 = vmatprep.subr.bf16.mxu0 0
    %4916 = vmatpush1.bf16.msra.mxu0 %v4726
    %4917 = vmatprep.subr.bf16.mxu0 0
    %4918 = vmatpush1.bf16.msra.mxu0 %v4725
    %4919 = vmatprep.subr.bf16.mxu0 0
    %4920 = vmatpush1.bf16.msra.mxu0 %v4724
    %4921 = vmatprep.subr.bf16.mxu0 0
    %4922 = vmatpush1.bf16.msra.mxu0 %v4723
    %4923 = vmatprep.subr.bf16.mxu0 0
    %4924 = vmatpush2.bf16.msra.mxu0 %v4738
    %4925 = vmatprep.subr.bf16.mxu0 0
    %4926 = vmatpush2.bf16.msra.mxu0 %v4737
    %4927 = vmatprep.subr.bf16.mxu0 0
    %4928 = vmatpush2.bf16.msra.mxu0 %v4736
    %4929 = vmatprep.subr.bf16.mxu0 0
    %4930 = vmatpush2.bf16.msra.mxu0 %v4735
    %4931 = vmatprep.subr.bf16.mxu0 0
    %4932 = vmatpush2.bf16.msra.mxu0 %v4734
    %4933 = vmatprep.subr.bf16.mxu0 0
    %4934 = vmatpush2.bf16.msra.mxu0 %v4733
    %4935 = vmatprep.subr.bf16.mxu0 0
    %4936 = vmatpush2.bf16.msra.mxu0 %v4732
    %4937 = vmatprep.subr.bf16.mxu0 0
    %4938 = vmatpush2.bf16.msra.mxu0 %v4731
    %4939 = vmatprep.mubr.bf16.mxu0 %v4213
    %4940 = vmatmul.mubr.bf16.gmra.mxu0 %v4212
    %v4941 = vpop.f32.mrf.mxu0
    %v4942 = vadd.f32 %v4902, %v4941
    %v4943 = vpop.f32.mrf.mxu0
    %v4944 = vpop.f32.mrf.mxu0
    %v4945 = vpop.f32.mrf.mxu0
    %4946 = vdwg.mxu0
    %4947 = vmatprep.subr.bf16.mxu0 0
    %4948 = vmatpush1.bf16.msra.mxu0 %v4746
    %4949 = vmatprep.subr.bf16.mxu0 0
    %4950 = vmatpush1.bf16.msra.mxu0 %v4745
    %4951 = vmatprep.subr.bf16.mxu0 0
    %4952 = vmatpush1.bf16.msra.mxu0 %v4744
    %4953 = vmatprep.subr.bf16.mxu0 0
    %4954 = vmatpush1.bf16.msra.mxu0 %v4743
    %4955 = vmatprep.subr.bf16.mxu0 0
    %4956 = vmatpush1.bf16.msra.mxu0 %v4742
    %4957 = vmatprep.subr.bf16.mxu0 0
    %4958 = vmatpush1.bf16.msra.mxu0 %v4741
    %4959 = vmatprep.subr.bf16.mxu0 0
    %4960 = vmatpush1.bf16.msra.mxu0 %v4740
    %4961 = vmatprep.subr.bf16.mxu0 0
    %4962 = vmatpush1.bf16.msra.mxu0 %v4739
    %4963 = vmatprep.subr.bf16.mxu0 0
    %4964 = vmatpush2.bf16.msra.mxu0 %v4754
    %4965 = vmatprep.subr.bf16.mxu0 0
    %4966 = vmatpush2.bf16.msra.mxu0 %v4753
    %4967 = vmatprep.subr.bf16.mxu0 0
    %4968 = vmatpush2.bf16.msra.mxu0 %v4752
    %4969 = vmatprep.subr.bf16.mxu0 0
    %4970 = vmatpush2.bf16.msra.mxu0 %v4751
    %4971 = vmatprep.subr.bf16.mxu0 0
    %4972 = vmatpush2.bf16.msra.mxu0 %v4750
    %4973 = vmatprep.subr.bf16.mxu0 0
    %4974 = vmatpush2.bf16.msra.mxu0 %v4749
    %4975 = vmatprep.subr.bf16.mxu0 0
    %4976 = vmatpush2.bf16.msra.mxu0 %v4748
    %4977 = vmatprep.subr.bf16.mxu0 0
    %4978 = vmatpush2.bf16.msra.mxu0 %v4747
    %4979 = vmatprep.mubr.bf16.mxu0 %v4215
    %4980 = vmatmul.mubr.bf16.gmra.mxu0 %v4214
    %v4981 = vpop.f32.mrf.mxu0
    %v4982 = vadd.f32 %v4942, %v4981
    %v4983 = vpop.f32.mrf.mxu0
    %v4984 = vpop.f32.mrf.mxu0
    %v4985 = vpop.f32.mrf.mxu0
    %4986 = vdwg.mxu0
    %4987 = vmatprep.subr.bf16.mxu0 0
    %4988 = vmatpush1.bf16.msra.mxu0 %v4762
    %4989 = vmatprep.subr.bf16.mxu0 0
    %4990 = vmatpush1.bf16.msra.mxu0 %v4761
    %4991 = vmatprep.subr.bf16.mxu0 0
    %4992 = vmatpush1.bf16.msra.mxu0 %v4760
    %4993 = vmatprep.subr.bf16.mxu0 0
    %4994 = vmatpush1.bf16.msra.mxu0 %v4759
    %4995 = vmatprep.subr.bf16.mxu0 0
    %4996 = vmatpush1.bf16.msra.mxu0 %v4758
    %4997 = vmatprep.subr.bf16.mxu0 0
    %4998 = vmatpush1.bf16.msra.mxu0 %v4757
    %4999 = vmatprep.subr.bf16.mxu0 0
    %5000 = vmatpush1.bf16.msra.mxu0 %v4756
    %5001 = vmatprep.subr.bf16.mxu0 0
    %5002 = vmatpush1.bf16.msra.mxu0 %v4755
    %5003 = vmatprep.subr.bf16.mxu0 0
    %5004 = vmatpush2.bf16.msra.mxu0 %v4770
    %5005 = vmatprep.subr.bf16.mxu0 0
    %5006 = vmatpush2.bf16.msra.mxu0 %v4769
    %5007 = vmatprep.subr.bf16.mxu0 0
    %5008 = vmatpush2.bf16.msra.mxu0 %v4768
    %5009 = vmatprep.subr.bf16.mxu0 0
    %5010 = vmatpush2.bf16.msra.mxu0 %v4767
    %5011 = vmatprep.subr.bf16.mxu0 0
    %5012 = vmatpush2.bf16.msra.mxu0 %v4766
    %5013 = vmatprep.subr.bf16.mxu0 0
    %5014 = vmatpush2.bf16.msra.mxu0 %v4765
    %5015 = vmatprep.subr.bf16.mxu0 0
    %5016 = vmatpush2.bf16.msra.mxu0 %v4764
    %5017 = vmatprep.subr.bf16.mxu0 0
    %5018 = vmatpush2.bf16.msra.mxu0 %v4763
    %5019 = vmatprep.mubr.bf16.mxu0 %v4217
    %5020 = vmatmul.mubr.bf16.gmra.mxu0 %v4216
    %v5021 = vpop.f32.mrf.mxu0
    %v5022 = vadd.f32 %v4982, %v5021
    %v5023 = vpop.f32.mrf.mxu0
    %v5024 = vpop.f32.mrf.mxu0
    %v5025 = vpop.f32.mrf.mxu0
    %5026 = vdwg.mxu0
    %5027 = vmatprep.subr.bf16.mxu0 0
    %5028 = vmatpush1.bf16.msra.mxu0 %v4778
    %5029 = vmatprep.subr.bf16.mxu0 0
    %5030 = vmatpush1.bf16.msra.mxu0 %v4777
    %5031 = vmatprep.subr.bf16.mxu0 0
    %5032 = vmatpush1.bf16.msra.mxu0 %v4776
    %5033 = vmatprep.subr.bf16.mxu0 0
    %5034 = vmatpush1.bf16.msra.mxu0 %v4775
    %5035 = vmatprep.subr.bf16.mxu0 0
    %5036 = vmatpush1.bf16.msra.mxu0 %v4774
    %5037 = vmatprep.subr.bf16.mxu0 0
    %5038 = vmatpush1.bf16.msra.mxu0 %v4773
    %5039 = vmatprep.subr.bf16.mxu0 0
    %5040 = vmatpush1.bf16.msra.mxu0 %v4772
    %5041 = vmatprep.subr.bf16.mxu0 0
    %5042 = vmatpush1.bf16.msra.mxu0 %v4771
    %5043 = vmatprep.subr.bf16.mxu0 0
    %5044 = vmatpush2.bf16.msra.mxu0 %v4786
    %5045 = vmatprep.subr.bf16.mxu0 0
    %5046 = vmatpush2.bf16.msra.mxu0 %v4785
    %5047 = vmatprep.subr.bf16.mxu0 0
    %5048 = vmatpush2.bf16.msra.mxu0 %v4784
    %5049 = vmatprep.subr.bf16.mxu0 0
    %5050 = vmatpush2.bf16.msra.mxu0 %v4783
    %5051 = vmatprep.subr.bf16.mxu0 0
    %5052 = vmatpush2.bf16.msra.mxu0 %v4782
    %5053 = vmatprep.subr.bf16.mxu0 0
    %5054 = vmatpush2.bf16.msra.mxu0 %v4781
    %5055 = vmatprep.subr.bf16.mxu0 0
    %5056 = vmatpush2.bf16.msra.mxu0 %v4780
    %5057 = vmatprep.subr.bf16.mxu0 0
    %5058 = vmatpush2.bf16.msra.mxu0 %v4779
    %5059 = vmatprep.mubr.bf16.mxu0 %v4219
    %5060 = vmatmul.mubr.bf16.gmra.mxu0 %v4218
    %v5061 = vpop.f32.mrf.mxu0
    %v5062 = vadd.f32 %v5022, %v5061
    %v5063 = vpop.f32.mrf.mxu0
    %v5064 = vpop.f32.mrf.mxu0
    %v5065 = vpop.f32.mrf.mxu0
    %5066 = vdwg.mxu0
    %vm5067 = vcmask 41984
    %5068 = vst.msk [vmem:[#allocation2] sm:$0x3] %vm5067, %v5062
    // Predicated region
    $region22: #{image_classifier_head.1} parent=1 // pred_check
      _
    $region23: #{image_classifier_head.1} parent=1 // pred_check_branch
      %5070 = sbr.rel (0) target = $region25
    $region24: #{image_classifier_head.1} parent=1 // pred_region
      %s5072 = ssub.s32 32, 32
      %5073 = vsyncadd [#allocation3], %s5072
      %s5075 = sshll.u32 [#allocation2], 4
      %s5076 = int_to_ptr.vmem [resolvable:$true] %s5075
      %5078 = dma.vmem_to_hbm [thread:$0]  %s5076, 32, %s5, [#allocation3]
    $region25: #{image_classifier_head.1} parent=1 // pred_fallthru
      _
    // Predicated region
    $region26: #{image_classifier_head.1} parent=1 // pred_check
      _
    $region27: #{image_classifier_head.1} parent=1 // pred_check_branch
      %5080 = sbr.rel (0) target = $region29
    $region28: #{image_classifier_head.1} parent=1 // pred_region
      %5081 = dma.done [#allocation3], 32
    $region29: #{image_classifier_head.1} parent=1 // pred_fallthru
      _
    %5082 = vsyncpa [#allocation3], 1

</llo_original>
